<compile_context>
chip_gen: v7x
topology: tpu7x:2x2x1
jax: 0.10.0
libtpu: 0.0.40
codegen_flags: <defaults>
</compile_context>

<pallas_src>
import jax
import jax.numpy as jnp
from jax.experimental import pallas as pl
from jax.experimental.pallas import tpu as pltpu


def _round_up(x, m):
    return ((x + m - 1) // m) * m


# ---------------------------------------------------------------------------
# Fused kernel
#   grid = (layer in {0: conv1, 1: conv2+pool(+MLP on last tile)},
#           row tiles of A_hat)
# ---------------------------------------------------------------------------
def fused_gcn_kernel(a_ref, x_ref, ids_ref, invc_ref, w1_ref, w2_ref,
                     bconv_ref, wf1_ref, wf2_ref, wo_ref, bmlp_ref,
                     out_ref, h1_ref, pooled_ref):
    layer = pl.program_id(0)
    i = pl.program_id(1)
    n_row_tiles = pl.num_programs(1)
    tm = a_ref.shape[0]
    h_pad = w1_ref.shape[1]

    # ---- conv1: h1[row strip] = relu((A_strip @ X) @ W1 + b1) ---------------
    @pl.when(layer == 0)
    def _conv1():
        b1 = bconv_ref[:, 0:h_pad]
        ax = jnp.dot(a_ref[...], x_ref[...],
                     preferred_element_type=jnp.float32)
        hw = jnp.dot(ax.astype(jnp.bfloat16), w1_ref[...],
                     preferred_element_type=jnp.float32)
        row0 = pl.multiple_of(i * tm, tm)
        h1_ref[pl.ds(row0, tm), :] = jnp.maximum(hw + b1, 0.0).astype(
            h1_ref.dtype)

    # ---- pooled accumulator init (first conv2 step) -------------------------
    @pl.when(jnp.logical_and(layer == 1, i == 0))
    def _init_pool():
        pooled_ref[...] = jnp.zeros_like(pooled_ref)

    # ---- conv2 + segment-sum pooling for this row strip ---------------------
    @pl.when(layer == 1)
    def _conv2_pool():
        b2 = bconv_ref[:, h_pad:2 * h_pad]
        ah = jnp.dot(a_ref[...], h1_ref[...],
                     preferred_element_type=jnp.float32)
        hw = jnp.dot(ah.astype(jnp.bfloat16), w2_ref[...],
                     preferred_element_type=jnp.float32)
        h2 = jnp.maximum(hw + b2, 0.0).astype(jnp.bfloat16)

        g_pad = pooled_ref.shape[0]
        gid = jax.lax.broadcasted_iota(jnp.int32, (g_pad, tm), 0)
        # 0/1 mask is exactly representable in bf16; padded nodes carry the
        # sentinel id g_pad and never match.  Scaling by 1/|graph| happens
        # once in the epilogue, after f32 accumulation.
        mask = (gid == ids_ref[...]).astype(jnp.bfloat16)
        pooled_ref[...] += jnp.dot(mask, h2,
                                   preferred_element_type=jnp.float32)

    # ---- epilogue: mean scaling + MLP + output head (last grid step) --------
    @pl.when(jnp.logical_and(layer == 1, i == n_row_tiles - 1))
    def _mlp_head():
        m_pad = wf1_ref.shape[1]
        b_f1 = bmlp_ref[:, 0:m_pad]
        b_f2 = bmlp_ref[:, m_pad:2 * m_pad]
        b_o = bmlp_ref[:, 2 * m_pad:]
        # TODO(synk): F.dropout is identity in eval mode; training-mode dropout
        # (pltpu.prng_*) is not implemented.
        g = (pooled_ref[...] * invc_ref[...]).astype(jnp.bfloat16)
        g = jnp.maximum(
            jnp.dot(g, wf1_ref[...], preferred_element_type=jnp.float32) + b_f1,
            0.0)
        g = jnp.maximum(
            jnp.dot(g.astype(jnp.bfloat16), wf2_ref[...],
                    preferred_element_type=jnp.float32) + b_f2,
            0.0)
        out_ref[...] = (
            jnp.dot(g.astype(jnp.bfloat16), wo_ref[...],
                    preferred_element_type=jnp.float32) + b_o
        ).astype(out_ref.dtype)


# ---------------------------------------------------------------------------
# Wrapper: padded bf16 operands, pooling metadata, single pallas_call
# ---------------------------------------------------------------------------
def gcn_classifier_forward(x, edge_index, batch, num_graphs,
                           w1, b1, w2, b2, wf1, bf1, wf2, bf2, wo, bo,
                           *, block_n=512):
    N, F = x.shape
    H = w1.shape[1]
    M = wf1.shape[1]
    OUT = wo.shape[1]

    f_pad = _round_up(F, 128)
    h_pad = _round_up(H, 128)
    m_pad = _round_up(M, 128)
    out_pad = _round_up(OUT, 128)
    g_pad = _round_up(num_graphs, 8)

    # Row-tile height: multiples of 256 map directly onto the 2x256x256 MXU
    # (v6e / v7x); clamp to the padded node count for small graphs.
    n_pad = _round_up(N, 256)
    tm = min(_round_up(block_n, 256), n_pad)
    n_pad = _round_up(n_pad, tm)

    bf16 = jnp.bfloat16

    def pad2(m, rows, cols, dtype):
        out = jnp.zeros((rows, cols), dtype)
        return out.at[:m.shape[0], :m.shape[1]].set(m.astype(dtype))

    # Dense GCN-normalised adjacency A_hat = D^{-1/2}(A+I)D^{-1/2}, built
    # directly at padded size and cast to bf16 in one shot.
    eidx = edge_index.astype(jnp.int32)
    adj = jnp.zeros((n_pad, n_pad), jnp.float32)
    adj = adj.at[eidx[1], eidx[0]].add(1.0)
    node_ids = jnp.arange(N, dtype=jnp.int32)
    adj = adj.at[node_ids, node_ids].add(1.0)          # self loops (real nodes)
    deg = adj.sum(axis=1)
    dinv = jnp.where(deg > 0, jax.lax.rsqrt(deg), 0.0)
    a_p = (adj * dinv[:, None] * dinv[None, :]).astype(bf16)

    x_p = pad2(x, n_pad, f_pad, bf16)
    w1_p = pad2(w1, f_pad, h_pad, bf16)
    w2_p = pad2(w2, h_pad, h_pad, bf16)
    wf1_p = pad2(wf1, h_pad, m_pad, bf16)
    wf2_p = pad2(wf2, m_pad, m_pad, bf16)
    wo_p = pad2(wo, m_pad, out_pad, bf16)

    # Merged bias rows (one DMA each instead of several tiny ones).
    bconv = jnp.concatenate([pad2(b1, 1, h_pad, jnp.float32),
                             pad2(b2, 1, h_pad, jnp.float32)], axis=1)
    bmlp = jnp.concatenate([pad2(bf1, 1, m_pad, jnp.float32),
                            pad2(bf2, 1, m_pad, jnp.float32),
                            pad2(bo, 1, out_pad, jnp.float32)], axis=1)

    # global_mean_pool metadata: per-node graph id (sentinel g_pad for padded
    # nodes so they never match a pooling row) and per-graph 1/|graph|.
    batch_i = batch.astype(jnp.int32)
    ids = jnp.full((1, n_pad), g_pad, jnp.int32).at[0, :N].set(batch_i)
    counts = jnp.zeros((g_pad,), jnp.float32).at[batch_i].add(1.0)
    inv_cnt = jnp.where(counts > 0, 1.0 / counts, 0.0).reshape(g_pad, 1)

    grid = (2, n_pad // tm)

    # Explicit VMEM limit with headroom (v7x: 64 MiB physical, v5e default
    # scoped limit is only 16 MiB).
    est = (2 * tm * n_pad * 2                      # A row strips (dbl-buffered)
           + 2 * n_pad * f_pad * 2                 # X resident
           + n_pad * h_pad * 2                     # h1 scratch
           + g_pad * h_pad * 4                     # pooled scratch
           + 2 * 2 * (f_pad * h_pad + h_pad * h_pad + h_pad * m_pad
                      + m_pad * m_pad + m_pad * out_pad)
           + 3 * 4 * tm * max(f_pad, h_pad))       # f32 matmul intermediates
    vmem_limit = int(min(max(2 * est, 32 * 1024 * 1024), 64 * 1024 * 1024))

    logits = pl.pallas_call(
        fused_gcn_kernel,
        grid=grid,
        in_specs=[
            pl.BlockSpec((tm, n_pad), lambda l, i: (i, 0)),       # A row strip
            pl.BlockSpec((n_pad, f_pad), lambda l, i: (0, 0)),    # X (resident)
            pl.BlockSpec((1, tm), lambda l, i: (0, i)),           # batch ids
            pl.BlockSpec((g_pad, 1), lambda l, i: (0, 0)),        # 1/|graph|
            pl.BlockSpec((f_pad, h_pad), lambda l, i: (0, 0)),    # W1
            pl.BlockSpec((h_pad, h_pad), lambda l, i: (0, 0)),    # W2
            pl.BlockSpec((1, 2 * h_pad), lambda l, i: (0, 0)),    # [b1|b2]
            pl.BlockSpec((h_pad, m_pad), lambda l, i: (0, 0)),    # Wf1
            pl.BlockSpec((m_pad, m_pad), lambda l, i: (0, 0)),    # Wf2
            pl.BlockSpec((m_pad, out_pad), lambda l, i: (0, 0)),  # Wo
            pl.BlockSpec((1, 2 * m_pad + out_pad), lambda l, i: (0, 0)),
        ],
        out_specs=pl.BlockSpec((g_pad, out_pad), lambda l, i: (0, 0)),
        out_shape=jax.ShapeDtypeStruct((g_pad, out_pad), jnp.float32),
        scratch_shapes=[pltpu.VMEM((n_pad, h_pad), bf16),          # h1
                        pltpu.VMEM((g_pad, h_pad), jnp.float32)],  # pooled sums
        compiler_params=pltpu.CompilerParams(
            dimension_semantics=("arbitrary", "arbitrary"),
            vmem_limit_bytes=vmem_limit),
    )(a_p, x_p, ids, inv_cnt, w1_p, w2_p, bconv, wf1_p, wf2_p, wo_p, bmlp)

    return logits[:num_graphs, :OUT]


if __name__ == "__main__":
    # Four chain "molecules" of 80 atoms each; num_node_features = 9
    # (len(atom_properties_dict['C']) + 1), hidden_channels = MLP_neurons = 32.
    NODES_PER_GRAPH, G = 80, 4
    N = NODES_PER_GRAPH * G
    F, H, M = 9, 32, 32

    key = jax.random.PRNGKey(0)
    kx, k1, k2, k3, k4, k5 = jax.random.split(key, 6)

    batch = jnp.repeat(jnp.arange(G, dtype=jnp.int32), NODES_PER_GRAPH)
    src, dst = [], []
    for g in range(G):
        base = g * NODES_PER_GRAPH
        for i in range(NODES_PER_GRAPH - 1):
            src += [base + i, base + i + 1]
            dst += [base + i + 1, base + i]
    edge_index = jnp.array([src, dst], dtype=jnp.int32)

    x = jax.random.normal(kx, (N, F), dtype=jnp.float32)

    def lin_init(k, fan_in, fan_out):
        kw, kb = jax.random.split(k)
        bound = 1.0 / jnp.sqrt(jnp.float32(fan_in))
        w = jax.random.uniform(kw, (fan_in, fan_out), jnp.float32, -bound, bound)
        b = jax.random.uniform(kb, (1, fan_out), jnp.float32, -bound, bound)
        return w, b

    w1, b1 = lin_init(k1, F, H)      # GCNConv 1
    w2, b2 = lin_init(k2, H, H)      # GCNConv 2
    wf1, bf1 = lin_init(k3, H, M)    # MLP fc 1
    wf2, bf2 = lin_init(k4, M, M)    # MLP fc 2
    wo, bo = lin_init(k5, M, 2)      # output head

    # block_n=256 keeps a (2, 2) grid at this tiny size so the multi-row-tile
    # paths (dynamic h1 store, pooled accumulation) are exercised.
    out = gcn_classifier_forward(x, edge_index, batch, G,
                                 w1, b1, w2, b2, wf1, bf1, wf2, bf2, wo, bo,
                                 block_n=256)
    out = jax.block_until_ready(out)
    assert out.shape == (G, 2) and out.dtype == jnp.float32

    # Pure-JAX f32 reference (loose tolerance: kernel computes in bf16/f32).
    adj = jnp.zeros((N, N), jnp.float32).at[edge_index[1], edge_index[0]].add(1.0)
    adj = adj + jnp.eye(N, dtype=jnp.float32)
    deg = adj.sum(axis=1)
    dinv = jnp.where(deg > 0, 1.0 / jnp.sqrt(deg), 0.0)
    a_hat = dinv[:, None] * adj * dinv[None, :]

    h = x
    for w_, b_ in ((w1, b1), (w2, b2)):
        h = jax.nn.relu(a_hat @ (h @ w_) + b_)
    onehot = (batch[None, :] == jnp.arange(G)[:, None]).astype(jnp.float32)
    pool = onehot / jnp.maximum(onehot.sum(axis=1, keepdims=True), 1.0)
    gref = pool @ h
    for w_, b_ in ((wf1, bf1), (wf2, bf2)):
        gref = jax.nn.relu(gref @ w_ + b_)
    ref = gref @ wo + bo

    max_err = float(jnp.max(jnp.abs(out - ref)))
    assert max_err < 5e-2, f"max abs error too large: {max_err}"
    print("KERNEL_OK")
</pallas_src>

<mosaic_0001>
module attributes {stable_mosaic.version = 11 : i64} {
  func.func @fused_gcn_kernel(%arg0: i32, %arg1: i32, %arg2: memref<256x512xbf16, #tpu.memory_space<vmem>>, %arg3: memref<512x128xbf16, #tpu.memory_space<vmem>>, %arg4: memref<1x256xi32, #tpu.memory_space<vmem>>, %arg5: memref<8x1xf32, #tpu.memory_space<vmem>>, %arg6: memref<128x128xbf16, #tpu.memory_space<vmem>>, %arg7: memref<128x128xbf16, #tpu.memory_space<vmem>>, %arg8: memref<1x256xf32, #tpu.memory_space<vmem>>, %arg9: memref<128x128xbf16, #tpu.memory_space<vmem>>, %arg10: memref<128x128xbf16, #tpu.memory_space<vmem>>, %arg11: memref<128x128xbf16, #tpu.memory_space<vmem>>, %arg12: memref<1x384xf32, #tpu.memory_space<vmem>>, %arg13: memref<8x128xf32, #tpu.memory_space<vmem>>, %arg14: memref<512x128xbf16, #tpu.memory_space<vmem>>, %arg15: memref<8x128xf32, #tpu.memory_space<vmem>>) attributes {dimension_semantics = [#tpu.dimension_semantics<arbitrary>, #tpu.dimension_semantics<arbitrary>], iteration_bounds = array<i64: 2, 2>, scalar_prefetch = 0 : i64, scratch_operands = 2 : i64, tpu.core_type = #tpu.core_type<tc>, window_params = [{transform_indices = @transform_0, window_bounds = array<i64: 256, 512>}, {pipeline_mode = #tpu.pipeline_mode<synchronous>, transform_indices = @transform_1, window_bounds = array<i64: 512, 128>}, {transform_indices = @transform_2, window_bounds = array<i64: 1, 256>}, {pipeline_mode = #tpu.pipeline_mode<synchronous>, transform_indices = @transform_3, window_bounds = array<i64: 8, 1>}, {pipeline_mode = #tpu.pipeline_mode<synchronous>, transform_indices = @transform_4, window_bounds = array<i64: 128, 128>}, {pipeline_mode = #tpu.pipeline_mode<synchronous>, transform_indices = @transform_5, window_bounds = array<i64: 128, 128>}, {pipeline_mode = #tpu.pipeline_mode<synchronous>, transform_indices = @transform_6, window_bounds = array<i64: 1, 256>}, {pipeline_mode = #tpu.pipeline_mode<synchronous>, transform_indices = @transform_7, window_bounds = array<i64: 128, 128>}, {pipeline_mode = #tpu.pipeline_mode<synchronous>, transform_indices = @transform_8, window_bounds = array<i64: 128, 128>}, {pipeline_mode = #tpu.pipeline_mode<synchronous>, transform_indices = @transform_9, window_bounds = array<i64: 128, 128>}, {pipeline_mode = #tpu.pipeline_mode<synchronous>, transform_indices = @transform_10, window_bounds = array<i64: 1, 384>}, {pipeline_mode = #tpu.pipeline_mode<synchronous>, transform_indices = @transform_11, window_bounds = array<i64: 8, 128>}]} {
    %c0_i32 = arith.constant 0 : i32
    %0 = arith.cmpi eq, %arg0, %c0_i32 : i32
    %1 = arith.extui %0 : i1 to i32
    %c0_i32_0 = arith.constant 0 : i32
    %2 = arith.cmpi ne, %1, %c0_i32_0 : i32
    scf.if %2 {
      %c0 = arith.constant 0 : index
      %c0_8 = arith.constant 0 : index
      %16 = vector.load %arg8[%c0, %c0_8] : memref<1x256xf32, #tpu.memory_space<vmem>>, vector<1x128xf32>
      %c0_9 = arith.constant 0 : index
      %c0_10 = arith.constant 0 : index
      %17 = vector.load %arg2[%c0_9, %c0_10] : memref<256x512xbf16, #tpu.memory_space<vmem>>, vector<256x512xbf16>
      %c0_11 = arith.constant 0 : index
      %c0_12 = arith.constant 0 : index
      %18 = vector.load %arg3[%c0_11, %c0_12] : memref<512x128xbf16, #tpu.memory_space<vmem>>, vector<512x128xbf16>
      %cst = arith.constant dense<0.000000e+00> : vector<256x128xf32>
      %19 = tpu.matmul %17, %18, %cst {dimension_numbers = #tpu.dot_dimension_numbers<[1], [0], [0], [1], [0, 0, 1, 1], [], []>} : vector<256x512xbf16>, vector<512x128xbf16>, vector<256x128xf32> -> vector<256x128xf32>
      %20 = arith.truncf %19 : vector<256x128xf32> to vector<256x128xbf16>
      %c0_13 = arith.constant 0 : index
      %c0_14 = arith.constant 0 : index
      %21 = vector.load %arg6[%c0_13, %c0_14] : memref<128x128xbf16, #tpu.memory_space<vmem>>, vector<128x128xbf16>
      %cst_15 = arith.constant dense<0.000000e+00> : vector<256x128xf32>
      %22 = tpu.matmul %20, %21, %cst_15 {dimension_numbers = #tpu.dot_dimension_numbers<[1], [0], [0], [1], [0, 0, 1, 1], [], []>} : vector<256x128xbf16>, vector<128x128xbf16>, vector<256x128xf32> -> vector<256x128xf32>
      %c256_i32 = arith.constant 256 : i32
      %23 = arith.muli %arg1, %c256_i32 : i32
      %24 = tpu.assume_multiple %23, 256 : i32
      %25 = vector.broadcast %16 : vector<1x128xf32> to vector<256x128xf32>
      %26 = arith.addf %22, %25 : vector<256x128xf32>
      %cst_16 = arith.constant 0.000000e+00 : f32
      %27 = vector.broadcast %cst_16 : f32 to vector<256x128xf32>
      %28 = arith.maximumf %26, %27 : vector<256x128xf32>
      %29 = arith.truncf %28 : vector<256x128xf32> to vector<256x128xbf16>
      %30 = arith.index_cast %24 : i32 to index
      %c0_17 = arith.constant 0 : index
      %31 = vector.load %arg14[%30, %c0_17] : memref<512x128xbf16, #tpu.memory_space<vmem>>, vector<256x128xbf16>
      tpu.vector_store %arg14[%30, %c0_17], %29 {strides = array<i32>} : memref<512x128xbf16, #tpu.memory_space<vmem>>, vector<256x128xbf16>,
    } else {
    }
    %c1_i32 = arith.constant 1 : i32
    %3 = arith.cmpi eq, %arg0, %c1_i32 : i32
    %c0_i32_1 = arith.constant 0 : i32
    %4 = arith.cmpi eq, %arg1, %c0_i32_1 : i32
    %5 = arith.andi %3, %4 : i1
    %6 = arith.extui %5 : i1 to i32
    %c0_i32_2 = arith.constant 0 : i32
    %7 = arith.cmpi ne, %6, %c0_i32_2 : i32
    scf.if %7 {
      %cst = arith.constant 0.000000e+00 : f32
      %16 = vector.broadcast %cst : f32 to vector<8x128xf32>
      %c0 = arith.constant 0 : index
      %c0_8 = arith.constant 0 : index
      %17 = vector.load %arg15[%c0, %c0_8] : memref<8x128xf32, #tpu.memory_space<vmem>>, vector<8x128xf32>
      tpu.vector_store %arg15[%c0, %c0_8], %16 {strides = array<i32>} : memref<8x128xf32, #tpu.memory_space<vmem>>, vector<8x128xf32>,
    } else {
    }
    %c1_i32_3 = arith.constant 1 : i32
    %8 = arith.cmpi eq, %arg0, %c1_i32_3 : i32
    %9 = arith.extui %8 : i1 to i32
    %c0_i32_4 = arith.constant 0 : i32
    %10 = arith.cmpi ne, %9, %c0_i32_4 : i32
    scf.if %10 {
      %c0 = arith.constant 0 : index
      %c128 = arith.constant 128 : index
      %16 = vector.load %arg8[%c0, %c128] : memref<1x256xf32, #tpu.memory_space<vmem>>, vector<1x128xf32>
      %c0_8 = arith.constant 0 : index
      %c0_9 = arith.constant 0 : index
      %17 = vector.load %arg2[%c0_8, %c0_9] : memref<256x512xbf16, #tpu.memory_space<vmem>>, vector<256x512xbf16>
      %c0_10 = arith.constant 0 : index
      %c0_11 = arith.constant 0 : index
      %18 = vector.load %arg14[%c0_10, %c0_11] : memref<512x128xbf16, #tpu.memory_space<vmem>>, vector<512x128xbf16>
      %cst = arith.constant dense<0.000000e+00> : vector<256x128xf32>
      %19 = tpu.matmul %17, %18, %cst {dimension_numbers = #tpu.dot_dimension_numbers<[1], [0], [0], [1], [0, 0, 1, 1], [], []>} : vector<256x512xbf16>, vector<512x128xbf16>, vector<256x128xf32> -> vector<256x128xf32>
      %20 = arith.truncf %19 : vector<256x128xf32> to vector<256x128xbf16>
      %c0_12 = arith.constant 0 : index
      %c0_13 = arith.constant 0 : index
      %21 = vector.load %arg7[%c0_12, %c0_13] : memref<128x128xbf16, #tpu.memory_space<vmem>>, vector<128x128xbf16>
      %cst_14 = arith.constant dense<0.000000e+00> : vector<256x128xf32>
      %22 = tpu.matmul %20, %21, %cst_14 {dimension_numbers = #tpu.dot_dimension_numbers<[1], [0], [0], [1], [0, 0, 1, 1], [], []>} : vector<256x128xbf16>, vector<128x128xbf16>, vector<256x128xf32> -> vector<256x128xf32>
      %23 = vector.broadcast %16 : vector<1x128xf32> to vector<256x128xf32>
      %24 = arith.addf %22, %23 : vector<256x128xf32>
      %cst_15 = arith.constant 0.000000e+00 : f32
      %25 = vector.broadcast %cst_15 : f32 to vector<256x128xf32>
      %26 = arith.maximumf %24, %25 : vector<256x128xf32>
      %27 = arith.truncf %26 : vector<256x128xf32> to vector<256x128xbf16>
      %28 = tpu.iota {dimensions = array<i32: 0>} : vector<8x256xi32>
      %c0_16 = arith.constant 0 : index
      %c0_17 = arith.constant 0 : index
      %29 = vector.load %arg4[%c0_16, %c0_17] : memref<1x256xi32, #tpu.memory_space<vmem>>, vector<1x256xi32>
      %30 = vector.broadcast %29 : vector<1x256xi32> to vector<8x256xi32>
      %31 = arith.cmpi eq, %28, %30 : vector<8x256xi32>
      %32 = arith.extui %31 : vector<8x256xi1> to vector<8x256xi32>
      %33 = arith.sitofp %32 : vector<8x256xi32> to vector<8x256xf32>
      %34 = arith.truncf %33 : vector<8x256xf32> to vector<8x256xbf16>
      %c0_18 = arith.constant 0 : index
      %c0_19 = arith.constant 0 : index
      %35 = vector.load %arg15[%c0_18, %c0_19] : memref<8x128xf32, #tpu.memory_space<vmem>>, vector<8x128xf32>
      %cst_20 = arith.constant dense<0.000000e+00> : vector<8x128xf32>
      %36 = tpu.matmul %34, %27, %cst_20 {dimension_numbers = #tpu.dot_dimension_numbers<[1], [0], [0], [1], [0, 0, 1, 1], [], []>} : vector<8x256xbf16>, vector<256x128xbf16>, vector<8x128xf32> -> vector<8x128xf32>
      %37 = arith.addf %35, %36 : vector<8x128xf32>
      %c0_21 = arith.constant 0 : index
      %c0_22 = arith.constant 0 : index
      %38 = vector.load %arg15[%c0_21, %c0_22] : memref<8x128xf32, #tpu.memory_space<vmem>>, vector<8x128xf32>
      tpu.vector_store %arg15[%c0_21, %c0_22], %37 {strides = array<i32>} : memref<8x128xf32, #tpu.memory_space<vmem>>, vector<8x128xf32>,
    } else {
    }
    %c1_i32_5 = arith.constant 1 : i32
    %11 = arith.cmpi eq, %arg0, %c1_i32_5 : i32
    %c1_i32_6 = arith.constant 1 : i32
    %12 = arith.cmpi eq, %arg1, %c1_i32_6 : i32
    %13 = arith.andi %11, %12 : i1
    %14 = arith.extui %13 : i1 to i32
    %c0_i32_7 = arith.constant 0 : i32
    %15 = arith.cmpi ne, %14, %c0_i32_7 : i32
    scf.if %15 {
      %c0 = arith.constant 0 : index
      %c0_8 = arith.constant 0 : index
      %16 = vector.load %arg12[%c0, %c0_8] : memref<1x384xf32, #tpu.memory_space<vmem>>, vector<1x128xf32>
      %c0_9 = arith.constant 0 : index
      %c128 = arith.constant 128 : index
      %17 = vector.load %arg12[%c0_9, %c128] : memref<1x384xf32, #tpu.memory_space<vmem>>, vector<1x128xf32>
      %c0_10 = arith.constant 0 : index
      %c256 = arith.constant 256 : index
      %18 = vector.load %arg12[%c0_10, %c256] : memref<1x384xf32, #tpu.memory_space<vmem>>, vector<1x128xf32>
      %c0_11 = arith.constant 0 : index
      %c0_12 = arith.constant 0 : index
      %19 = vector.load %arg15[%c0_11, %c0_12] : memref<8x128xf32, #tpu.memory_space<vmem>>, vector<8x128xf32>
      %c0_13 = arith.constant 0 : index
      %c0_14 = arith.constant 0 : index
      %20 = vector.load %arg5[%c0_13, %c0_14] : memref<8x1xf32, #tpu.memory_space<vmem>>, vector<8x1xf32>
      %21 = vector.broadcast %20 : vector<8x1xf32> to vector<8x128xf32>
      %22 = arith.mulf %19, %21 : vector<8x128xf32>
      %23 = arith.truncf %22 : vector<8x128xf32> to vector<8x128xbf16>
      %c0_15 = arith.constant 0 : index
      %c0_16 = arith.constant 0 : index
      %24 = vector.load %arg9[%c0_15, %c0_16] : memref<128x128xbf16, #tpu.memory_space<vmem>>, vector<128x128xbf16>
      %cst = arith.constant dense<0.000000e+00> : vector<8x128xf32>
      %25 = tpu.matmul %23, %24, %cst {dimension_numbers = #tpu.dot_dimension_numbers<[1], [0], [0], [1], [0, 0, 1, 1], [], []>} : vector<8x128xbf16>, vector<128x128xbf16>, vector<8x128xf32> -> vector<8x128xf32>
      %26 = vector.broadcast %16 : vector<1x128xf32> to vector<8x128xf32>
      %27 = arith.addf %25, %26 : vector<8x128xf32>
      %cst_17 = arith.constant 0.000000e+00 : f32
      %28 = vector.broadcast %cst_17 : f32 to vector<8x128xf32>
      %29 = arith.maximumf %27, %28 : vector<8x128xf32>
      %30 = arith.truncf %29 : vector<8x128xf32> to vector<8x128xbf16>
      %c0_18 = arith.constant 0 : index
      %c0_19 = arith.constant 0 : index
      %31 = vector.load %arg10[%c0_18, %c0_19] : memref<128x128xbf16, #tpu.memory_space<vmem>>, vector<128x128xbf16>
      %cst_20 = arith.constant dense<0.000000e+00> : vector<8x128xf32>
      %32 = tpu.matmul %30, %31, %cst_20 {dimension_numbers = #tpu.dot_dimension_numbers<[1], [0], [0], [1], [0, 0, 1, 1], [], []>} : vector<8x128xbf16>, vector<128x128xbf16>, vector<8x128xf32> -> vector<8x128xf32>
      %33 = vector.broadcast %17 : vector<1x128xf32> to vector<8x128xf32>
      %34 = arith.addf %32, %33 : vector<8x128xf32>
      %cst_21 = arith.constant 0.000000e+00 : f32
      %35 = vector.broadcast %cst_21 : f32 to vector<8x128xf32>
      %36 = arith.maximumf %34, %35 : vector<8x128xf32>
      %37 = arith.truncf %36 : vector<8x128xf32> to vector<8x128xbf16>
      %c0_22 = arith.constant 0 : index
      %c0_23 = arith.constant 0 : index
      %38 = vector.load %arg11[%c0_22, %c0_23] : memref<128x128xbf16, #tpu.memory_space<vmem>>, vector<128x128xbf16>
      %cst_24 = arith.constant dense<0.000000e+00> : vector<8x128xf32>
      %39 = tpu.matmul %37, %38, %cst_24 {dimension_numbers = #tpu.dot_dimension_numbers<[1], [0], [0], [1], [0, 0, 1, 1], [], []>} : vector<8x128xbf16>, vector<128x128xbf16>, vector<8x128xf32> -> vector<8x128xf32>
      %40 = vector.broadcast %18 : vector<1x128xf32> to vector<8x128xf32>
      %41 = arith.addf %39, %40 : vector<8x128xf32>
      %c0_25 = arith.constant 0 : index
      %c0_26 = arith.constant 0 : index
      %42 = vector.load %arg13[%c0_25, %c0_26] : memref<8x128xf32, #tpu.memory_space<vmem>>, vector<8x128xf32>
      tpu.vector_store %arg13[%c0_25, %c0_26], %41 {strides = array<i32>} : memref<8x128xf32, #tpu.memory_space<vmem>>, vector<8x128xf32>,
    } else {
    }
    return
  }
  func.func @transform_0(%arg0: i32, %arg1: i32) -> (i32, i32) {
    %c0_i32 = arith.constant 0 : i32
    %c0_i32_0 = arith.constant 0 : i32
    return %arg1, %c0_i32 : i32, i32
  }
  func.func @transform_1(%arg0: i32, %arg1: i32) -> (i32, i32) {
    %c0_i32 = arith.constant 0 : i32
    %c0_i32_0 = arith.constant 0 : i32
    %c0_i32_1 = arith.constant 0 : i32
    return %c0_i32, %c0_i32_0 : i32, i32
  }
  func.func @transform_2(%arg0: i32, %arg1: i32) -> (i32, i32) {
    %c0_i32 = arith.constant 0 : i32
    %c0_i32_0 = arith.constant 0 : i32
    return %c0_i32, %arg1 : i32, i32
  }
  func.func @transform_3(%arg0: i32, %arg1: i32) -> (i32, i32) {
    %c0_i32 = arith.constant 0 : i32
    %c0_i32_0 = arith.constant 0 : i32
    %c0_i32_1 = arith.constant 0 : i32
    return %c0_i32, %c0_i32_0 : i32, i32
  }
  func.func @transform_4(%arg0: i32, %arg1: i32) -> (i32, i32) {
    %c0_i32 = arith.constant 0 : i32
    %c0_i32_0 = arith.constant 0 : i32
    %c0_i32_1 = arith.constant 0 : i32
    return %c0_i32, %c0_i32_0 : i32, i32
  }
  func.func @transform_5(%arg0: i32, %arg1: i32) -> (i32, i32) {
    %c0_i32 = arith.constant 0 : i32
    %c0_i32_0 = arith.constant 0 : i32
    %c0_i32_1 = arith.constant 0 : i32
    return %c0_i32, %c0_i32_0 : i32, i32
  }
  func.func @transform_6(%arg0: i32, %arg1: i32) -> (i32, i32) {
    %c0_i32 = arith.constant 0 : i32
    %c0_i32_0 = arith.constant 0 : i32
    %c0_i32_1 = arith.constant 0 : i32
    return %c0_i32, %c0_i32_0 : i32, i32
  }
  func.func @transform_7(%arg0: i32, %arg1: i32) -> (i32, i32) {
    %c0_i32 = arith.constant 0 : i32
    %c0_i32_0 = arith.constant 0 : i32
    %c0_i32_1 = arith.constant 0 : i32
    return %c0_i32, %c0_i32_0 : i32, i32
  }
  func.func @transform_8(%arg0: i32, %arg1: i32) -> (i32, i32) {
    %c0_i32 = arith.constant 0 : i32
    %c0_i32_0 = arith.constant 0 : i32
    %c0_i32_1 = arith.constant 0 : i32
    return %c0_i32, %c0_i32_0 : i32, i32
  }
  func.func @transform_9(%arg0: i32, %arg1: i32) -> (i32, i32) {
    %c0_i32 = arith.constant 0 : i32
    %c0_i32_0 = arith.constant 0 : i32
    %c0_i32_1 = arith.constant 0 : i32
    return %c0_i32, %c0_i32_0 : i32, i32
  }
  func.func @transform_10(%arg0: i32, %arg1: i32) -> (i32, i32) {
    %c0_i32 = arith.constant 0 : i32
    %c0_i32_0 = arith.constant 0 : i32
    %c0_i32_1 = arith.constant 0 : i32
    return %c0_i32, %c0_i32_0 : i32, i32
  }
  func.func @transform_11(%arg0: i32, %arg1: i32) -> (i32, i32) {
    %c0_i32 = arith.constant 0 : i32
    %c0_i32_0 = arith.constant 0 : i32
    %c0_i32_1 = arith.constant 0 : i32
    return %c0_i32, %c0_i32_0 : i32, i32
  }
}

</mosaic_0001>

<llo_original>
// kernel: tpu_custom_call.1
$region0: #{tpu_custom_call.1}
  #allocation0 [shape = 'u32[]', space=smem, size = 0x4, offset = 0x4, fixed_abs, tag = 'smem constant byte address 0x4 - core index']
  #allocation1 [shape = 'u32[144,128]{1,0:T(1,128)}', space=vmem, size = 0x12000, scoped, tag = 'internal scratch']
  #allocation2 [shape = 'bf16[512,128]{1,0:T(16,128)(2,1)}', space=vmem, size = 0x20000, scoped, tag = 'scratch operand']
  #allocation3 [shape = 'f32[8,128]{1,0:T(8,128)}', space=vmem, size = 0x1000, scoped, tag = 'scratch operand']
  %s0 = inlined_call_operand.hbm [shape: bf16[512,512], index: 0, kind: input, shape index: {}]
  %s1 = inlined_call_operand.hbm [shape: bf16[512,128], index: 1, kind: input, shape index: {}]
  %s2 = inlined_call_operand.vmem [shape: s32[1,512], index: 2, kind: input, shape index: {}]
  %s3 = inlined_call_operand.vmem [shape: f32[8,1], index: 3, kind: input, shape index: {}]
  %s4 = inlined_call_operand.hbm [shape: bf16[128,128], index: 4, kind: input, shape index: {}]
  %s5 = inlined_call_operand.hbm [shape: bf16[128,128], index: 5, kind: input, shape index: {}]
  %s6 = inlined_call_operand.vmem [shape: f32[1,256], index: 6, kind: input, shape index: {}]
  %s7 = inlined_call_operand.hbm [shape: bf16[128,128], index: 7, kind: input, shape index: {}]
  %s8 = inlined_call_operand.hbm [shape: bf16[128,128], index: 8, kind: input, shape index: {}]
  %s9 = inlined_call_operand.hbm [shape: bf16[128,128], index: 9, kind: input, shape index: {}]
  %s10 = inlined_call_operand.vmem [shape: f32[1,384], index: 10, kind: input, shape index: {}]
  %s11 = inlined_call_operand.hbm [shape: f32[8,128], index: 11, kind: output, shape index: {}]
  %s12 = sld [smem:[#allocation0]]
  $region121: #{tpu_custom_call.1} parent=0
    _
  %s14 = ssub.s32 1, %s12
  %s15 = scalar_select 0, %s14, %s12
  $region1: #{tpu_custom_call.1} parent=0
    #allocation4 [shape = 'u8[524288]{0}', space=vmem, size = 0x80000, scoped, tag = 'input window, operand 0']
    #allocation5 [shape = 's32[2]{0}', space=sflag, size = 0x8, scoped, tag = 'scoped memory for tpu_custom_call.1']
    #allocation6 [shape = 's32[2]{0}', space=sflag, size = 0x8, scoped, tag = 'scoped memory for tpu_custom_call.1']
    #allocation7 [shape = 'u8[131072]{0}', space=vmem, size = 0x20000, scoped, tag = 'input window, operand 1, single buffered']
    #allocation8 [shape = 's32[1]{0}', space=sflag, size = 0x4, scoped, tag = 'scoped memory for tpu_custom_call.1']
    #allocation9 [shape = 'u8[32768]{0}', space=vmem, size = 0x8000, scoped, tag = 'input window, operand 4, single buffered']
    #allocation10 [shape = 'u8[32768]{0}', space=vmem, size = 0x8000, scoped, tag = 'input window, operand 5, single buffered']
    #allocation11 [shape = 's32[1]{0}', space=sflag, size = 0x4, scoped, tag = 'scoped memory for tpu_custom_call.1']
    #allocation12 [shape = 'u8[32768]{0}', space=vmem, size = 0x8000, scoped, tag = 'input window, operand 7, single buffered']
    #allocation13 [shape = 'u8[32768]{0}', space=vmem, size = 0x8000, scoped, tag = 'input window, operand 8, single buffered']
    #allocation14 [shape = 's32[1]{0}', space=sflag, size = 0x4, scoped, tag = 'scoped memory for tpu_custom_call.1']
    #allocation15 [shape = 'u8[32768]{0}', space=vmem, size = 0x8000, scoped, tag = 'input window, operand 9, single buffered']
    #allocation16 [shape = 'u8[4096]{0}', space=vmem, size = 0x1000, scoped, tag = 'output window, operand 0, single buffered']
    %16 = vsyncpa [#allocation5], 0
    %s17 = scalar_lea.sflag [#allocation5], 1
    %18 = vsyncpa %s17, 0
    %19 = vsyncpa [#allocation8], 0
    %20 = vsyncpa [#allocation11], 0
    %21 = vsyncpa [#allocation14], 0
    %22 = vsyncpa [#allocation6], 0
    loop: start=0, step=1, limit=6
    $region2: #{tpu_custom_call.1} parent=1 // loop_pre_header
      _
    $region3: #{tpu_custom_call.1} parent=1 // loop_header
      %s24 = sphi 0, %s28
      %p25 = scmp.ge.s32.totalorder %s24, 6
      %s31 = sphi 0, %s43
      %s32 = sphi 0, %s39
      %s33 = sphi 0, %s31
      %s34 = sphi 0, %s32
      %s35 = sphi 0, %s33
      %s36 = sphi 0, %s34
      %s46 = sphi 0, %s48
      %s49 = sphi 0, %s46
      %s50 = sphi 0, %s49
      %s66 = sphi 0, %s50
      %s70 = sphi 0, %s70
      %s72 = sphi 0, %s70
      %s73 = sphi 0, %s72
      %s87 = sphi 0, %s73
      %s93 = sphi 0, %s95
      %s96 = sphi 0, %s93
      %s97 = sphi 0, %s96
      %s113 = sphi 0, %s97
      %s117 = sphi 0, %s117
      %s119 = sphi 0, %s117
      %s120 = sphi 0, %s119
      %s134 = sphi 0, %s120
      %s138 = sphi 0, %s138
      %s140 = sphi 0, %s138
      %s141 = sphi 0, %s140
      %s155 = sphi 0, %s141
      %s159 = sphi 0, %s159
      %s161 = sphi 0, %s159
      %s162 = sphi 0, %s161
      %s176 = sphi 0, %s162
      %s180 = sphi 0, %s180
      %s182 = sphi 0, %s180
      %s183 = sphi 0, %s182
      %s197 = sphi 0, %s183
      %s201 = sphi 0, %s201
      %s203 = sphi 0, %s201
      %s204 = sphi 0, %s203
      %s218 = sphi 0, %s204
      %s222 = sphi 0, %s222
      %s224 = sphi 0, %s222
      %s225 = sphi 0, %s224
      %s239 = sphi 0, %s225
      %s243 = sphi 0, %s243
      %s245 = sphi 0, %s243
      %s246 = sphi 0, %s245
      %s260 = sphi 0, %s246
      %s264 = sphi 0, %s264
      %s266 = sphi 0, %s264
      %s267 = sphi 0, %s266
      %s281 = sphi 0, %s267
      %s285 = sphi 0, %s285
      %s287 = sphi 0, %s285
      %s288 = sphi 0, %s287
      %s302 = sphi 0, %s288
    $region4: #{tpu_custom_call.1} parent=1 // loop_header_branch
      %27 = sbr.rel (%p25) target = $region8
    $region5: #{tpu_custom_call.1} parent=1 // loop_body
      %s29 = ssub.s32 %s24, 1
      %s30 = ssub.s32 %s24, 2
      %s37 = sadd.s32 1, %s32
      %p38 = scmp.ge.s32.totalorder %s37, 2
      %s39 = scalar_select %p38, 0, %s37
      %s40 = sadd.s32 1, %s31
      %s41 = scalar_select %p38, %s40, %s31
      %p42 = scmp.ge.s32.totalorder %s41, 2
      %s43 = scalar_select %p42, 0, %s41
      %s44 = ssub.s32 %s32, %s39
      %p45 = scmp.eq.s32.totalorder %s44, 0
      %s47 = sadd.s32 %s46, 1
      %s48 = scalar_select %p45, %s46, %s47
      %p51 = pneg %p45
      %p52 = scmp.eq.s32.totalorder %s24, 3
      %p53 = por %p51, %p52
      %p54 = scmp.ne.s32.totalorder %s46, %s49
      %p55 = scmp.eq.s32.totalorder %s24, 0
      %p56 = por %p54, %p55
      %p57 = scmp.ne.s32.totalorder %s46, %s49
      %p58 = scmp.eq.s32.totalorder %s29, 3
      %p59 = por %p57, %p58
      %p60 = scmp.ne.s32.totalorder %s49, %s50
      %p61 = scmp.eq.s32.totalorder %s29, 0
      %p62 = por %p60, %p61
      %p63 = scmp.ne.s32.totalorder %s49, %s50
      %p64 = scmp.eq.s32.totalorder %s30, 3
      %p65 = por %p63, %p64
      %p67 = scmp.ne.s32.totalorder %s50, %s66
      %p68 = scmp.eq.s32.totalorder %s30, 0
      %p69 = por %p67, %p68
      %s71 = sadd.s32 %s70, 1
      %p74 = scmp.eq.s32.totalorder %s24, 3
      %p75 = scmp.ne.s32.totalorder %s70, %s72
      %p76 = scmp.eq.s32.totalorder %s24, 0
      %p77 = por %p75, %p76
      %p78 = scmp.ne.s32.totalorder %s70, %s72
      %p79 = scmp.eq.s32.totalorder %s29, 3
      %p80 = por %p78, %p79
      %p81 = scmp.ne.s32.totalorder %s72, %s73
      %p82 = scmp.eq.s32.totalorder %s29, 0
      %p83 = por %p81, %p82
      %p84 = scmp.ne.s32.totalorder %s72, %s73
      %p85 = scmp.eq.s32.totalorder %s30, 3
      %p86 = por %p84, %p85
      %p88 = scmp.ne.s32.totalorder %s73, %s87
      %p89 = scmp.eq.s32.totalorder %s30, 0
      %p90 = por %p88, %p89
      %s91 = ssub.s32 %s32, %s39
      %p92 = scmp.eq.s32.totalorder %s91, 0
      %s94 = sadd.s32 %s93, 1
      %s95 = scalar_select %p92, %s93, %s94
      %p98 = pneg %p92
      %p99 = scmp.eq.s32.totalorder %s24, 3
      %p100 = por %p98, %p99
      %p101 = scmp.ne.s32.totalorder %s93, %s96
      %p102 = scmp.eq.s32.totalorder %s24, 0
      %p103 = por %p101, %p102
      %p104 = scmp.ne.s32.totalorder %s93, %s96
      %p105 = scmp.eq.s32.totalorder %s29, 3
      %p106 = por %p104, %p105
      %p107 = scmp.ne.s32.totalorder %s96, %s97
      %p108 = scmp.eq.s32.totalorder %s29, 0
      %p109 = por %p107, %p108
      %p110 = scmp.ne.s32.totalorder %s96, %s97
      %p111 = scmp.eq.s32.totalorder %s30, 3
      %p112 = por %p110, %p111
      %p114 = scmp.ne.s32.totalorder %s97, %s113
      %p115 = scmp.eq.s32.totalorder %s30, 0
      %p116 = por %p114, %p115
      %s118 = sadd.s32 %s117, 1
      %p121 = scmp.eq.s32.totalorder %s24, 3
      %p122 = scmp.ne.s32.totalorder %s117, %s119
      %p123 = scmp.eq.s32.totalorder %s24, 0
      %p124 = por %p122, %p123
      %p125 = scmp.ne.s32.totalorder %s117, %s119
      %p126 = scmp.eq.s32.totalorder %s29, 3
      %p127 = por %p125, %p126
      %p128 = scmp.ne.s32.totalorder %s119, %s120
      %p129 = scmp.eq.s32.totalorder %s29, 0
      %p130 = por %p128, %p129
      %p131 = scmp.ne.s32.totalorder %s119, %s120
      %p132 = scmp.eq.s32.totalorder %s30, 3
      %p133 = por %p131, %p132
      %p135 = scmp.ne.s32.totalorder %s120, %s134
      %p136 = scmp.eq.s32.totalorder %s30, 0
      %p137 = por %p135, %p136
      %s139 = sadd.s32 %s138, 1
      %p142 = scmp.eq.s32.totalorder %s24, 3
      %p143 = scmp.ne.s32.totalorder %s138, %s140
      %p144 = scmp.eq.s32.totalorder %s24, 0
      %p145 = por %p143, %p144
      %p146 = scmp.ne.s32.totalorder %s138, %s140
      %p147 = scmp.eq.s32.totalorder %s29, 3
      %p148 = por %p146, %p147
      %p149 = scmp.ne.s32.totalorder %s140, %s141
      %p150 = scmp.eq.s32.totalorder %s29, 0
      %p151 = por %p149, %p150
      %p152 = scmp.ne.s32.totalorder %s140, %s141
      %p153 = scmp.eq.s32.totalorder %s30, 3
      %p154 = por %p152, %p153
      %p156 = scmp.ne.s32.totalorder %s141, %s155
      %p157 = scmp.eq.s32.totalorder %s30, 0
      %p158 = por %p156, %p157
      %s160 = sadd.s32 %s159, 1
      %p163 = scmp.eq.s32.totalorder %s24, 3
      %p164 = scmp.ne.s32.totalorder %s159, %s161
      %p165 = scmp.eq.s32.totalorder %s24, 0
      %p166 = por %p164, %p165
      %p167 = scmp.ne.s32.totalorder %s159, %s161
      %p168 = scmp.eq.s32.totalorder %s29, 3
      %p169 = por %p167, %p168
      %p170 = scmp.ne.s32.totalorder %s161, %s162
      %p171 = scmp.eq.s32.totalorder %s29, 0
      %p172 = por %p170, %p171
      %p173 = scmp.ne.s32.totalorder %s161, %s162
      %p174 = scmp.eq.s32.totalorder %s30, 3
      %p175 = por %p173, %p174
      %p177 = scmp.ne.s32.totalorder %s162, %s176
      %p178 = scmp.eq.s32.totalorder %s30, 0
      %p179 = por %p177, %p178
      %s181 = sadd.s32 %s180, 1
      %p184 = scmp.eq.s32.totalorder %s24, 3
      %p185 = scmp.ne.s32.totalorder %s180, %s182
      %p186 = scmp.eq.s32.totalorder %s24, 0
      %p187 = por %p185, %p186
      %p188 = scmp.ne.s32.totalorder %s180, %s182
      %p189 = scmp.eq.s32.totalorder %s29, 3
      %p190 = por %p188, %p189
      %p191 = scmp.ne.s32.totalorder %s182, %s183
      %p192 = scmp.eq.s32.totalorder %s29, 0
      %p193 = por %p191, %p192
      %p194 = scmp.ne.s32.totalorder %s182, %s183
      %p195 = scmp.eq.s32.totalorder %s30, 3
      %p196 = por %p194, %p195
      %p198 = scmp.ne.s32.totalorder %s183, %s197
      %p199 = scmp.eq.s32.totalorder %s30, 0
      %p200 = por %p198, %p199
      %s202 = sadd.s32 %s201, 1
      %p205 = scmp.eq.s32.totalorder %s24, 3
      %p206 = scmp.ne.s32.totalorder %s201, %s203
      %p207 = scmp.eq.s32.totalorder %s24, 0
      %p208 = por %p206, %p207
      %p209 = scmp.ne.s32.totalorder %s201, %s203
      %p210 = scmp.eq.s32.totalorder %s29, 3
      %p211 = por %p209, %p210
      %p212 = scmp.ne.s32.totalorder %s203, %s204
      %p213 = scmp.eq.s32.totalorder %s29, 0
      %p214 = por %p212, %p213
      %p215 = scmp.ne.s32.totalorder %s203, %s204
      %p216 = scmp.eq.s32.totalorder %s30, 3
      %p217 = por %p215, %p216
      %p219 = scmp.ne.s32.totalorder %s204, %s218
      %p220 = scmp.eq.s32.totalorder %s30, 0
      %p221 = por %p219, %p220
      %s223 = sadd.s32 %s222, 1
      %p226 = scmp.eq.s32.totalorder %s24, 3
      %p227 = scmp.ne.s32.totalorder %s222, %s224
      %p228 = scmp.eq.s32.totalorder %s24, 0
      %p229 = por %p227, %p228
      %p230 = scmp.ne.s32.totalorder %s222, %s224
      %p231 = scmp.eq.s32.totalorder %s29, 3
      %p232 = por %p230, %p231
      %p233 = scmp.ne.s32.totalorder %s224, %s225
      %p234 = scmp.eq.s32.totalorder %s29, 0
      %p235 = por %p233, %p234
      %p236 = scmp.ne.s32.totalorder %s224, %s225
      %p237 = scmp.eq.s32.totalorder %s30, 3
      %p238 = por %p236, %p237
      %p240 = scmp.ne.s32.totalorder %s225, %s239
      %p241 = scmp.eq.s32.totalorder %s30, 0
      %p242 = por %p240, %p241
      %s244 = sadd.s32 %s243, 1
      %p247 = scmp.eq.s32.totalorder %s24, 3
      %p248 = scmp.ne.s32.totalorder %s243, %s245
      %p249 = scmp.eq.s32.totalorder %s24, 0
      %p250 = por %p248, %p249
      %p251 = scmp.ne.s32.totalorder %s243, %s245
      %p252 = scmp.eq.s32.totalorder %s29, 3
      %p253 = por %p251, %p252
      %p254 = scmp.ne.s32.totalorder %s245, %s246
      %p255 = scmp.eq.s32.totalorder %s29, 0
      %p256 = por %p254, %p255
      %p257 = scmp.ne.s32.totalorder %s245, %s246
      %p258 = scmp.eq.s32.totalorder %s30, 3
      %p259 = por %p257, %p258
      %p261 = scmp.ne.s32.totalorder %s246, %s260
      %p262 = scmp.eq.s32.totalorder %s30, 0
      %p263 = por %p261, %p262
      %s265 = sadd.s32 %s264, 1
      %p268 = scmp.eq.s32.totalorder %s24, 3
      %p269 = scmp.ne.s32.totalorder %s264, %s266
      %p270 = scmp.eq.s32.totalorder %s24, 0
      %p271 = por %p269, %p270
      %p272 = scmp.ne.s32.totalorder %s264, %s266
      %p273 = scmp.eq.s32.totalorder %s29, 3
      %p274 = por %p272, %p273
      %p275 = scmp.ne.s32.totalorder %s266, %s267
      %p276 = scmp.eq.s32.totalorder %s29, 0
      %p277 = por %p275, %p276
      %p278 = scmp.ne.s32.totalorder %s266, %s267
      %p279 = scmp.eq.s32.totalorder %s30, 3
      %p280 = por %p278, %p279
      %p282 = scmp.ne.s32.totalorder %s267, %s281
      %p283 = scmp.eq.s32.totalorder %s30, 0
      %p284 = por %p282, %p283
      %s286 = sadd.s32 %s285, 1
      %p289 = scmp.eq.s32.totalorder %s24, 3
      %p290 = scmp.ne.s32.totalorder %s285, %s287
      %p291 = scmp.eq.s32.totalorder %s24, 0
      %p292 = por %p290, %p291
      %p293 = scmp.ne.s32.totalorder %s285, %s287
      %p294 = scmp.eq.s32.totalorder %s29, 3
      %p295 = por %p293, %p294
      %p296 = scmp.ne.s32.totalorder %s287, %s288
      %p297 = scmp.eq.s32.totalorder %s29, 0
      %p298 = por %p296, %p297
      %p299 = scmp.ne.s32.totalorder %s287, %s288
      %p300 = scmp.eq.s32.totalorder %s30, 3
      %p301 = por %p299, %p300
      %p303 = scmp.ne.s32.totalorder %s288, %s302
      %p304 = scmp.eq.s32.totalorder %s30, 0
      %p305 = por %p303, %p304
      %p306 = scmp.le.s32.totalorder 1, %s24
      %p307 = scmp.lt.s32.totalorder %s24, 5
      %p308 = pnand %p306, %p307
      %p309 = pneg %p308
      // Predicated region
      $region9: #{tpu_custom_call.1} parent=5 // pred_check
        _
      $region10: #{tpu_custom_call.1} parent=5 // pred_check_branch
        %311 = sbr.rel (%p308) target = $region12
      $region11: #{tpu_custom_call.1} parent=5 // pred_region
        %s312 = ssub.s32 %s24, 1
        // Predicated region
        $region13: #{tpu_custom_call.1} parent=11 // pred_check
          %p313 = pneg %p83
        $region14: #{tpu_custom_call.1} parent=11 // pred_check_branch
          %315 = sbr.rel (%p313) target = $region16
        $region15: #{tpu_custom_call.1} parent=11 // pred_region
          %s317 = ssub.s32 4096, 4096
          %318 = vsyncadd [#allocation8], %s317
          %s319 = sshll.u32 [#allocation7], 4
          %s320 = int_to_ptr.vmem [resolvable:$true] %s319
          %325 = dma.hbm_to_vmem [thread:$0]  %s1, 4096, %s320, [#allocation8], 64, 64, 4
        $region16: #{tpu_custom_call.1} parent=11 // pred_fallthru
          _
        // Predicated region
        $region17: #{tpu_custom_call.1} parent=11 // pred_check
          %p326 = pneg %p130
        $region18: #{tpu_custom_call.1} parent=11 // pred_check_branch
          %328 = sbr.rel (%p326) target = $region20
        $region19: #{tpu_custom_call.1} parent=11 // pred_region
          _
        $region20: #{tpu_custom_call.1} parent=11 // pred_fallthru
          _
        // Predicated region
        $region21: #{tpu_custom_call.1} parent=11 // pred_check
          %p329 = pneg %p151
        $region22: #{tpu_custom_call.1} parent=11 // pred_check_branch
          %331 = sbr.rel (%p329) target = $region24
        $region23: #{tpu_custom_call.1} parent=11 // pred_region
          %s333 = ssub.s32 1024, 1024
          %334 = vsyncadd [#allocation8], %s333
          %s335 = sshll.u32 [#allocation9], 4
          %s336 = int_to_ptr.vmem [resolvable:$true] %s335
          %341 = dma.hbm_to_vmem [thread:$0]  %s4, 1024, %s336, [#allocation8], 64, 64, 4
        $region24: #{tpu_custom_call.1} parent=11 // pred_fallthru
          _
        // Predicated region
        $region25: #{tpu_custom_call.1} parent=11 // pred_check
          %p342 = pneg %p172
        $region26: #{tpu_custom_call.1} parent=11 // pred_check_branch
          %344 = sbr.rel (%p342) target = $region28
        $region27: #{tpu_custom_call.1} parent=11 // pred_region
          %s346 = ssub.s32 1024, 1024
          %347 = vsyncadd [#allocation11], %s346
          %s348 = sshll.u32 [#allocation10], 4
          %s349 = int_to_ptr.vmem [resolvable:$true] %s348
          %354 = dma.hbm_to_vmem [thread:$0]  %s5, 1024, %s349, [#allocation11], 64, 64, 4
        $region28: #{tpu_custom_call.1} parent=11 // pred_fallthru
          _
        // Predicated region
        $region29: #{tpu_custom_call.1} parent=11 // pred_check
          %p355 = pneg %p193
        $region30: #{tpu_custom_call.1} parent=11 // pred_check_branch
          %357 = sbr.rel (%p355) target = $region32
        $region31: #{tpu_custom_call.1} parent=11 // pred_region
          _
        $region32: #{tpu_custom_call.1} parent=11 // pred_fallthru
          _
        // Predicated region
        $region33: #{tpu_custom_call.1} parent=11 // pred_check
          %p358 = pneg %p214
        $region34: #{tpu_custom_call.1} parent=11 // pred_check_branch
          %360 = sbr.rel (%p358) target = $region36
        $region35: #{tpu_custom_call.1} parent=11 // pred_region
          %s362 = ssub.s32 1024, 1024
          %363 = vsyncadd [#allocation11], %s362
          %s364 = sshll.u32 [#allocation12], 4
          %s365 = int_to_ptr.vmem [resolvable:$true] %s364
          %370 = dma.hbm_to_vmem [thread:$0]  %s7, 1024, %s365, [#allocation11], 64, 64, 4
        $region36: #{tpu_custom_call.1} parent=11 // pred_fallthru
          _
        // Predicated region
        $region37: #{tpu_custom_call.1} parent=11 // pred_check
          %p371 = pneg %p235
        $region38: #{tpu_custom_call.1} parent=11 // pred_check_branch
          %373 = sbr.rel (%p371) target = $region40
        $region39: #{tpu_custom_call.1} parent=11 // pred_region
          %s375 = ssub.s32 1024, 1024
          %376 = vsyncadd [#allocation14], %s375
          %s377 = sshll.u32 [#allocation13], 4
          %s378 = int_to_ptr.vmem [resolvable:$true] %s377
          %383 = dma.hbm_to_vmem [thread:$0]  %s8, 1024, %s378, [#allocation14], 64, 64, 4
        $region40: #{tpu_custom_call.1} parent=11 // pred_fallthru
          _
        // Predicated region
        $region41: #{tpu_custom_call.1} parent=11 // pred_check
          %p384 = pneg %p256
        $region42: #{tpu_custom_call.1} parent=11 // pred_check_branch
          %386 = sbr.rel (%p384) target = $region44
        $region43: #{tpu_custom_call.1} parent=11 // pred_region
          %s388 = ssub.s32 1024, 1024
          %389 = vsyncadd [#allocation14], %s388
          %s390 = sshll.u32 [#allocation15], 4
          %s391 = int_to_ptr.vmem [resolvable:$true] %s390
          %396 = dma.hbm_to_vmem [thread:$0]  %s9, 1024, %s391, [#allocation14], 64, 64, 4
        $region44: #{tpu_custom_call.1} parent=11 // pred_fallthru
          _
        // Predicated region
        $region45: #{tpu_custom_call.1} parent=11 // pred_check
          %p397 = pneg %p277
        $region46: #{tpu_custom_call.1} parent=11 // pred_check_branch
          %399 = sbr.rel (%p397) target = $region48
        $region47: #{tpu_custom_call.1} parent=11 // pred_region
          _
        $region48: #{tpu_custom_call.1} parent=11 // pred_fallthru
          _
      $region12: #{tpu_custom_call.1} parent=5 // pred_fallthru
        _
      %p400 = scmp.lt.s32.totalorder %s24, 4
      // Predicated region
      $region49: #{tpu_custom_call.1} parent=5 // pred_check
        %p401 = pneg %p400
      $region50: #{tpu_custom_call.1} parent=5 // pred_check_branch
        %403 = sbr.rel (%p401) target = $region52
      $region51: #{tpu_custom_call.1} parent=5 // pred_region
        // Predicated region
        $region53: #{tpu_custom_call.1} parent=51 // pred_check
          %p404 = pneg %p56
        $region54: #{tpu_custom_call.1} parent=51 // pred_check_branch
          %406 = sbr.rel (%p404) target = $region56
        $region55: #{tpu_custom_call.1} parent=51 // pred_region
          %s407 = sand.u32 %s46, 1
          %s408 = scalar_lea.sflag [#allocation5], %s407
          %s409 = sand.u32 %s46, 1
          %s410 = smul.addr %s409, 512
          %s411 = scalar_lea.vmem [#allocation4], %s410
          %s412 = smul.u32 32, %s32
          %s414 = ssub.s32 8192, 8192
          %415 = vsyncadd %s408, %s414
          %s416 = smul.addr %s412, 4
          %s417 = smul.addr %s416, 64
          %s418 = scalar_lea.hbm %s0, %s417
          %s419 = sshll.u32 %s411, 4
          %s420 = int_to_ptr.vmem [resolvable:$true] %s419
          %425 = dma.hbm_to_vmem [thread:$0]  %s418, 8192, %s420, %s408, 256, 256, 16
        $region56: #{tpu_custom_call.1} parent=51 // pred_fallthru
          _
        // Predicated region
        $region57: #{tpu_custom_call.1} parent=51 // pred_check
          %p426 = pneg %p103
        $region58: #{tpu_custom_call.1} parent=51 // pred_check_branch
          %428 = sbr.rel (%p426) target = $region60
        $region59: #{tpu_custom_call.1} parent=51 // pred_region
          %s429 = smul.u32 2, %s32
          %p430 = scmp.lt.s32.totalorder %s429, 3
          %s431 = scalar_select %p430, %s429, 3
          %s432 = scalar_lea.vmem %s2, %s431
          %s433 = smul.u32 2, %s32
        $region60: #{tpu_custom_call.1} parent=51 // pred_fallthru
          _
      $region52: #{tpu_custom_call.1} parent=5 // pred_fallthru
        _
      %p434 = scmp.le.s32.totalorder 1, %s24
      %p435 = scmp.lt.s32.totalorder %s24, 5
      %p436 = pnand %p434, %p435
      %p437 = pneg %p436
      // Predicated region
      $region61: #{tpu_custom_call.1} parent=5 // pred_check
        _
      $region62: #{tpu_custom_call.1} parent=5 // pred_check_branch
        %439 = sbr.rel (%p436) target = $region64
      $region63: #{tpu_custom_call.1} parent=5 // pred_region
        %s440 = ssub.s32 %s24, 1
        %s441 = sand.u32 %s49, 1
        %s442 = scalar_lea.sflag [#allocation5], %s441
        %s443 = sand.u32 %s49, 1
        %s444 = smul.addr %s443, 512
        %s445 = scalar_lea.vmem [#allocation4], %s444
        // Predicated region
        $region65: #{tpu_custom_call.1} parent=63 // pred_check
          %p446 = pneg %p62
        $region66: #{tpu_custom_call.1} parent=63 // pred_check_branch
          %448 = sbr.rel (%p446) target = $region68
        $region67: #{tpu_custom_call.1} parent=63 // pred_region
          %449 = dma.done %s442, 8192
        $region68: #{tpu_custom_call.1} parent=63 // pred_fallthru
          _
        // Predicated region
        $region69: #{tpu_custom_call.1} parent=63 // pred_check
          %p450 = pneg %p83
        $region70: #{tpu_custom_call.1} parent=63 // pred_check_branch
          %452 = sbr.rel (%p450) target = $region72
        $region71: #{tpu_custom_call.1} parent=63 // pred_region
          %453 = dma.done [#allocation8], 4096
        $region72: #{tpu_custom_call.1} parent=63 // pred_fallthru
          _
        // Predicated region
        $region73: #{tpu_custom_call.1} parent=63 // pred_check
          %p454 = pneg %p151
        $region74: #{tpu_custom_call.1} parent=63 // pred_check_branch
          %456 = sbr.rel (%p454) target = $region76
        $region75: #{tpu_custom_call.1} parent=63 // pred_region
          %457 = dma.done [#allocation8], 1024
        $region76: #{tpu_custom_call.1} parent=63 // pred_fallthru
          _
        // Predicated region
        $region77: #{tpu_custom_call.1} parent=63 // pred_check
          %p458 = pneg %p172
        $region78: #{tpu_custom_call.1} parent=63 // pred_check_branch
          %460 = sbr.rel (%p458) target = $region80
        $region79: #{tpu_custom_call.1} parent=63 // pred_region
          %461 = dma.done [#allocation11], 1024
        $region80: #{tpu_custom_call.1} parent=63 // pred_fallthru
          _
        // Predicated region
        $region81: #{tpu_custom_call.1} parent=63 // pred_check
          %p462 = pneg %p214
        $region82: #{tpu_custom_call.1} parent=63 // pred_check_branch
          %464 = sbr.rel (%p462) target = $region84
        $region83: #{tpu_custom_call.1} parent=63 // pred_region
          %465 = dma.done [#allocation11], 1024
        $region84: #{tpu_custom_call.1} parent=63 // pred_fallthru
          _
        // Predicated region
        $region85: #{tpu_custom_call.1} parent=63 // pred_check
          %p466 = pneg %p235
        $region86: #{tpu_custom_call.1} parent=63 // pred_check_branch
          %468 = sbr.rel (%p466) target = $region88
        $region87: #{tpu_custom_call.1} parent=63 // pred_region
          %469 = dma.done [#allocation14], 1024
        $region88: #{tpu_custom_call.1} parent=63 // pred_fallthru
          _
        // Predicated region
        $region89: #{tpu_custom_call.1} parent=63 // pred_check
          %p470 = pneg %p256
        $region90: #{tpu_custom_call.1} parent=63 // pred_check_branch
          %472 = sbr.rel (%p470) target = $region92
        $region91: #{tpu_custom_call.1} parent=63 // pred_region
          %473 = dma.done [#allocation14], 1024
        $region92: #{tpu_custom_call.1} parent=63 // pred_fallthru
          _
        %s474 = sand.u32 %s49, 1
        %s475 = scalar_lea.sflag [#allocation5], %s474
        %s476 = sand.u32 %s49, 1
        %s477 = smul.addr %s476, 512
        %s478 = scalar_lea.vmem [#allocation4], %s477
        %p479 = pneg %p62
        %p480 = pneg %p59
        %p481 = pneg %p83
        %p482 = pneg %p80
        %s483 = smul.u32 2, %s34
        %p484 = scmp.lt.s32.totalorder %s483, 3
        %s485 = scalar_select %p484, %s483, 3
        %s486 = scalar_lea.vmem %s2, %s485
        %p487 = pneg %p109
        %p488 = pneg %p106
        %p489 = pneg %p130
        %p490 = pneg %p127
        %p491 = pneg %p151
        %p492 = pneg %p148
        %p493 = pneg %p172
        %p494 = pneg %p169
        %p495 = pneg %p193
        %p496 = pneg %p190
        %p497 = pneg %p214
        %p498 = pneg %p211
        %p499 = pneg %p235
        %p500 = pneg %p232
        %p501 = pneg %p256
        %p502 = pneg %p253
        %p503 = pneg %p277
        %p504 = pneg %p274
        %p505 = pneg %p298
        %p506 = pneg %p295
        %s507 = smul.u32 32, %s34
        %s508 = smul.u32 2, %s34
        %p509 = scmp.lt.s32.totalorder %s508, 3
        %s510 = scalar_select %p509, %s508, 3
        %s511 = scalar_lea.vmem %s2, %s510
        %s512 = smul.u32 2, %s34
        %p514 = scmp.eq.s32.totalorder %s33, 0
        // Predicated region
        $region93: #{tpu_custom_call.1} parent=63 // pred_check
          %p515 = pneg %p514
        $region94: #{tpu_custom_call.1} parent=63 // pred_check_branch
          %517 = sbr.rel (%p515) target = $region96
        $region95: #{tpu_custom_call.1} parent=63 // pred_region
          %v518 = vld [vmem:[%s6] sm:$0x1]
          %v519 = vld [vmem:[%s445] sm:$0xff]
          %v520 = vld [vmem:[%s445 + $0x8] sm:$0xff]
          %v521 = vld [vmem:[%s445 + $0x10] sm:$0xff]
          %v522 = vld [vmem:[%s445 + $0x18] sm:$0xff]
          %v523 = vld [vmem:[%s445 + $0x20] sm:$0xff]
          %v524 = vld [vmem:[%s445 + $0x28] sm:$0xff]
          %v525 = vld [vmem:[%s445 + $0x30] sm:$0xff]
          %v526 = vld [vmem:[%s445 + $0x38] sm:$0xff]
          %v527 = vld [vmem:[%s445 + $0x40] sm:$0xff]
          %v528 = vld [vmem:[%s445 + $0x48] sm:$0xff]
          %v529 = vld [vmem:[%s445 + $0x50] sm:$0xff]
          %v530 = vld [vmem:[%s445 + $0x58] sm:$0xff]
          %v531 = vld [vmem:[%s445 + $0x60] sm:$0xff]
          %v532 = vld [vmem:[%s445 + $0x68] sm:$0xff]
          %v533 = vld [vmem:[%s445 + $0x70] sm:$0xff]
          %v534 = vld [vmem:[%s445 + $0x78] sm:$0xff]
          %v535 = vld [vmem:[%s445 + $0x80] sm:$0xff]
          %v536 = vld [vmem:[%s445 + $0x88] sm:$0xff]
          %v537 = vld [vmem:[%s445 + $0x90] sm:$0xff]
          %v538 = vld [vmem:[%s445 + $0x98] sm:$0xff]
          %v539 = vld [vmem:[%s445 + $0xa0] sm:$0xff]
          %v540 = vld [vmem:[%s445 + $0xa8] sm:$0xff]
          %v541 = vld [vmem:[%s445 + $0xb0] sm:$0xff]
          %v542 = vld [vmem:[%s445 + $0xb8] sm:$0xff]
          %v543 = vld [vmem:[%s445 + $0xc0] sm:$0xff]
          %v544 = vld [vmem:[%s445 + $0xc8] sm:$0xff]
          %v545 = vld [vmem:[%s445 + $0xd0] sm:$0xff]
          %v546 = vld [vmem:[%s445 + $0xd8] sm:$0xff]
          %v547 = vld [vmem:[%s445 + $0xe0] sm:$0xff]
          %v548 = vld [vmem:[%s445 + $0xe8] sm:$0xff]
          %v549 = vld [vmem:[%s445 + $0xf0] sm:$0xff]
          %v550 = vld [vmem:[%s445 + $0xf8] sm:$0xff]
          %v551 = vld [vmem:[%s445 + $0x100] sm:$0xff]
          %v552 = vld [vmem:[%s445 + $0x108] sm:$0xff]
          %v553 = vld [vmem:[%s445 + $0x110] sm:$0xff]
          %v554 = vld [vmem:[%s445 + $0x118] sm:$0xff]
          %v555 = vld [vmem:[%s445 + $0x120] sm:$0xff]
          %v556 = vld [vmem:[%s445 + $0x128] sm:$0xff]
          %v557 = vld [vmem:[%s445 + $0x130] sm:$0xff]
          %v558 = vld [vmem:[%s445 + $0x138] sm:$0xff]
          %v559 = vld [vmem:[%s445 + $0x140] sm:$0xff]
          %v560 = vld [vmem:[%s445 + $0x148] sm:$0xff]
          %v561 = vld [vmem:[%s445 + $0x150] sm:$0xff]
          %v562 = vld [vmem:[%s445 + $0x158] sm:$0xff]
          %v563 = vld [vmem:[%s445 + $0x160] sm:$0xff]
          %v564 = vld [vmem:[%s445 + $0x168] sm:$0xff]
          %v565 = vld [vmem:[%s445 + $0x170] sm:$0xff]
          %v566 = vld [vmem:[%s445 + $0x178] sm:$0xff]
          %v567 = vld [vmem:[%s445 + $0x180] sm:$0xff]
          %v568 = vld [vmem:[%s445 + $0x188] sm:$0xff]
          %v569 = vld [vmem:[%s445 + $0x190] sm:$0xff]
          %v570 = vld [vmem:[%s445 + $0x198] sm:$0xff]
          %v571 = vld [vmem:[%s445 + $0x1a0] sm:$0xff]
          %v572 = vld [vmem:[%s445 + $0x1a8] sm:$0xff]
          %v573 = vld [vmem:[%s445 + $0x1b0] sm:$0xff]
          %v574 = vld [vmem:[%s445 + $0x1b8] sm:$0xff]
          %v575 = vld [vmem:[%s445 + $0x1c0] sm:$0xff]
          %v576 = vld [vmem:[%s445 + $0x1c8] sm:$0xff]
          %v577 = vld [vmem:[%s445 + $0x1d0] sm:$0xff]
          %v578 = vld [vmem:[%s445 + $0x1d8] sm:$0xff]
          %v579 = vld [vmem:[%s445 + $0x1e0] sm:$0xff]
          %v580 = vld [vmem:[%s445 + $0x1e8] sm:$0xff]
          %v581 = vld [vmem:[%s445 + $0x1f0] sm:$0xff]
          %v582 = vld [vmem:[%s445 + $0x1f8] sm:$0xff]
          %v583 = vld [vmem:[#allocation7] sm:$0xf]
          %v584 = vld [vmem:[#allocation7 + $0x4] sm:$0xf]
          %v585 = vld [vmem:[#allocation7 + $0x8] sm:$0xf]
          %v586 = vld [vmem:[#allocation7 + $0xc] sm:$0xf]
          %v587 = vld [vmem:[#allocation7 + $0x10] sm:$0xf]
          %v588 = vld [vmem:[#allocation7 + $0x14] sm:$0xf]
          %v589 = vld [vmem:[#allocation7 + $0x18] sm:$0xf]
          %v590 = vld [vmem:[#allocation7 + $0x1c] sm:$0xf]
          %v591 = vld [vmem:[#allocation7 + $0x20] sm:$0xf]
          %v592 = vld [vmem:[#allocation7 + $0x24] sm:$0xf]
          %v593 = vld [vmem:[#allocation7 + $0x28] sm:$0xf]
          %v594 = vld [vmem:[#allocation7 + $0x2c] sm:$0xf]
          %v595 = vld [vmem:[#allocation7 + $0x30] sm:$0xf]
          %v596 = vld [vmem:[#allocation7 + $0x34] sm:$0xf]
          %v597 = vld [vmem:[#allocation7 + $0x38] sm:$0xf]
          %v598 = vld [vmem:[#allocation7 + $0x3c] sm:$0xf]
          %v599 = vld [vmem:[#allocation7 + $0x40] sm:$0xf]
          %v600 = vld [vmem:[#allocation7 + $0x44] sm:$0xf]
          %v601 = vld [vmem:[#allocation7 + $0x48] sm:$0xf]
          %v602 = vld [vmem:[#allocation7 + $0x4c] sm:$0xf]
          %v603 = vld [vmem:[#allocation7 + $0x50] sm:$0xf]
          %v604 = vld [vmem:[#allocation7 + $0x54] sm:$0xf]
          %v605 = vld [vmem:[#allocation7 + $0x58] sm:$0xf]
          %v606 = vld [vmem:[#allocation7 + $0x5c] sm:$0xf]
          %v607 = vld [vmem:[#allocation7 + $0x60] sm:$0xf]
          %v608 = vld [vmem:[#allocation7 + $0x64] sm:$0xf]
          %v609 = vld [vmem:[#allocation7 + $0x68] sm:$0xf]
          %v610 = vld [vmem:[#allocation7 + $0x6c] sm:$0xf]
          %v611 = vld [vmem:[#allocation7 + $0x70] sm:$0xf]
          %v612 = vld [vmem:[#allocation7 + $0x74] sm:$0xf]
          %v613 = vld [vmem:[#allocation7 + $0x78] sm:$0xf]
          %v614 = vld [vmem:[#allocation7 + $0x7c] sm:$0xf]
          %v615 = vld [vmem:[#allocation7 + $0x80] sm:$0xf]
          %v616 = vld [vmem:[#allocation7 + $0x84] sm:$0xf]
          %v617 = vld [vmem:[#allocation7 + $0x88] sm:$0xf]
          %v618 = vld [vmem:[#allocation7 + $0x8c] sm:$0xf]
          %v619 = vld [vmem:[#allocation7 + $0x90] sm:$0xf]
          %v620 = vld [vmem:[#allocation7 + $0x94] sm:$0xf]
          %v621 = vld [vmem:[#allocation7 + $0x98] sm:$0xf]
          %v622 = vld [vmem:[#allocation7 + $0x9c] sm:$0xf]
          %v623 = vld [vmem:[#allocation7 + $0xa0] sm:$0xf]
          %v624 = vld [vmem:[#allocation7 + $0xa4] sm:$0xf]
          %v625 = vld [vmem:[#allocation7 + $0xa8] sm:$0xf]
          %v626 = vld [vmem:[#allocation7 + $0xac] sm:$0xf]
          %v627 = vld [vmem:[#allocation7 + $0xb0] sm:$0xf]
          %v628 = vld [vmem:[#allocation7 + $0xb4] sm:$0xf]
          %v629 = vld [vmem:[#allocation7 + $0xb8] sm:$0xf]
          %v630 = vld [vmem:[#allocation7 + $0xbc] sm:$0xf]
          %v631 = vld [vmem:[#allocation7 + $0xc0] sm:$0xf]
          %v632 = vld [vmem:[#allocation7 + $0xc4] sm:$0xf]
          %v633 = vld [vmem:[#allocation7 + $0xc8] sm:$0xf]
          %v634 = vld [vmem:[#allocation7 + $0xcc] sm:$0xf]
          %v635 = vld [vmem:[#allocation7 + $0xd0] sm:$0xf]
          %v636 = vld [vmem:[#allocation7 + $0xd4] sm:$0xf]
          %v637 = vld [vmem:[#allocation7 + $0xd8] sm:$0xf]
          %v638 = vld [vmem:[#allocation7 + $0xdc] sm:$0xf]
          %v639 = vld [vmem:[#allocation7 + $0xe0] sm:$0xf]
          %v640 = vld [vmem:[#allocation7 + $0xe4] sm:$0xf]
          %v641 = vld [vmem:[#allocation7 + $0xe8] sm:$0xf]
          %v642 = vld [vmem:[#allocation7 + $0xec] sm:$0xf]
          %v643 = vld [vmem:[#allocation7 + $0xf0] sm:$0xf]
          %v644 = vld [vmem:[#allocation7 + $0xf4] sm:$0xf]
          %v645 = vld [vmem:[#allocation7 + $0xf8] sm:$0xf]
          %v646 = vld [vmem:[#allocation7 + $0xfc] sm:$0xf]
          %v711 = vunpack.c.l.b16 %v519
          %v712 = vunpack.c.h.b16 %v519
          %v713 = vunpack.c.l.b16 %v520
          %v714 = vunpack.c.h.b16 %v520
          %v715 = vunpack.c.l.b16 %v521
          %v716 = vunpack.c.h.b16 %v521
          %v717 = vunpack.c.l.b16 %v522
          %v718 = vunpack.c.h.b16 %v522
          %v719 = vunpack.c.l.b16 %v523
          %v720 = vunpack.c.h.b16 %v523
          %v721 = vunpack.c.l.b16 %v524
          %v722 = vunpack.c.h.b16 %v524
          %v723 = vunpack.c.l.b16 %v525
          %v724 = vunpack.c.h.b16 %v525
          %v725 = vunpack.c.l.b16 %v526
          %v726 = vunpack.c.h.b16 %v526
          %v727 = vunpack.c.l.b16 %v527
          %v728 = vunpack.c.h.b16 %v527
          %v729 = vunpack.c.l.b16 %v528
          %v730 = vunpack.c.h.b16 %v528
          %v731 = vunpack.c.l.b16 %v529
          %v732 = vunpack.c.h.b16 %v529
          %v733 = vunpack.c.l.b16 %v530
          %v734 = vunpack.c.h.b16 %v530
          %v735 = vunpack.c.l.b16 %v531
          %v736 = vunpack.c.h.b16 %v531
          %v737 = vunpack.c.l.b16 %v532
          %v738 = vunpack.c.h.b16 %v532
          %v739 = vunpack.c.l.b16 %v533
          %v740 = vunpack.c.h.b16 %v533
          %v741 = vunpack.c.l.b16 %v534
          %v742 = vunpack.c.h.b16 %v534
          %v743 = vunpack.c.l.b16 %v535
          %v744 = vunpack.c.h.b16 %v535
          %v745 = vunpack.c.l.b16 %v536
          %v746 = vunpack.c.h.b16 %v536
          %v747 = vunpack.c.l.b16 %v537
          %v748 = vunpack.c.h.b16 %v537
          %v749 = vunpack.c.l.b16 %v538
          %v750 = vunpack.c.h.b16 %v538
          %v751 = vunpack.c.l.b16 %v539
          %v752 = vunpack.c.h.b16 %v539
          %v753 = vunpack.c.l.b16 %v540
          %v754 = vunpack.c.h.b16 %v540
          %v755 = vunpack.c.l.b16 %v541
          %v756 = vunpack.c.h.b16 %v541
          %v757 = vunpack.c.l.b16 %v542
          %v758 = vunpack.c.h.b16 %v542
          %v759 = vunpack.c.l.b16 %v543
          %v760 = vunpack.c.h.b16 %v543
          %v761 = vunpack.c.l.b16 %v544
          %v762 = vunpack.c.h.b16 %v544
          %v763 = vunpack.c.l.b16 %v545
          %v764 = vunpack.c.h.b16 %v545
          %v765 = vunpack.c.l.b16 %v546
          %v766 = vunpack.c.h.b16 %v546
          %v767 = vunpack.c.l.b16 %v547
          %v768 = vunpack.c.h.b16 %v547
          %v769 = vunpack.c.l.b16 %v548
          %v770 = vunpack.c.h.b16 %v548
          %v771 = vunpack.c.l.b16 %v549
          %v772 = vunpack.c.h.b16 %v549
          %v773 = vunpack.c.l.b16 %v550
          %v774 = vunpack.c.h.b16 %v550
          %v775 = vunpack.c.l.b16 %v551
          %v776 = vunpack.c.h.b16 %v551
          %v777 = vunpack.c.l.b16 %v552
          %v778 = vunpack.c.h.b16 %v552
          %v779 = vunpack.c.l.b16 %v553
          %v780 = vunpack.c.h.b16 %v553
          %v781 = vunpack.c.l.b16 %v554
          %v782 = vunpack.c.h.b16 %v554
          %v783 = vunpack.c.l.b16 %v555
          %v784 = vunpack.c.h.b16 %v555
          %v785 = vunpack.c.l.b16 %v556
          %v786 = vunpack.c.h.b16 %v556
          %v787 = vunpack.c.l.b16 %v557
          %v788 = vunpack.c.h.b16 %v557
          %v789 = vunpack.c.l.b16 %v558
          %v790 = vunpack.c.h.b16 %v558
          %v791 = vunpack.c.l.b16 %v559
          %v792 = vunpack.c.h.b16 %v559
          %v793 = vunpack.c.l.b16 %v560
          %v794 = vunpack.c.h.b16 %v560
          %v795 = vunpack.c.l.b16 %v561
          %v796 = vunpack.c.h.b16 %v561
          %v797 = vunpack.c.l.b16 %v562
          %v798 = vunpack.c.h.b16 %v562
          %v799 = vunpack.c.l.b16 %v563
          %v800 = vunpack.c.h.b16 %v563
          %v801 = vunpack.c.l.b16 %v564
          %v802 = vunpack.c.h.b16 %v564
          %v803 = vunpack.c.l.b16 %v565
          %v804 = vunpack.c.h.b16 %v565
          %v805 = vunpack.c.l.b16 %v566
          %v806 = vunpack.c.h.b16 %v566
          %v807 = vunpack.c.l.b16 %v567
          %v808 = vunpack.c.h.b16 %v567
          %v809 = vunpack.c.l.b16 %v568
          %v810 = vunpack.c.h.b16 %v568
          %v811 = vunpack.c.l.b16 %v569
          %v812 = vunpack.c.h.b16 %v569
          %v813 = vunpack.c.l.b16 %v570
          %v814 = vunpack.c.h.b16 %v570
          %v815 = vunpack.c.l.b16 %v571
          %v816 = vunpack.c.h.b16 %v571
          %v817 = vunpack.c.l.b16 %v572
          %v818 = vunpack.c.h.b16 %v572
          %v819 = vunpack.c.l.b16 %v573
          %v820 = vunpack.c.h.b16 %v573
          %v821 = vunpack.c.l.b16 %v574
          %v822 = vunpack.c.h.b16 %v574
          %v823 = vunpack.c.l.b16 %v575
          %v824 = vunpack.c.h.b16 %v575
          %v825 = vunpack.c.l.b16 %v576
          %v826 = vunpack.c.h.b16 %v576
          %v827 = vunpack.c.l.b16 %v577
          %v828 = vunpack.c.h.b16 %v577
          %v829 = vunpack.c.l.b16 %v578
          %v830 = vunpack.c.h.b16 %v578
          %v831 = vunpack.c.l.b16 %v579
          %v832 = vunpack.c.h.b16 %v579
          %v833 = vunpack.c.l.b16 %v580
          %v834 = vunpack.c.h.b16 %v580
          %v835 = vunpack.c.l.b16 %v581
          %v836 = vunpack.c.h.b16 %v581
          %v837 = vunpack.c.l.b16 %v582
          %v838 = vunpack.c.h.b16 %v582
          %v839 = vpack.c.b16 %v715, %v711
          %v840 = vpack.c.b16 %v716, %v712
          %v841 = vpack.c.b16 %v717, %v713
          %v842 = vpack.c.b16 %v718, %v714
          %v843 = vpack.c.b16 %v723, %v719
          %v844 = vpack.c.b16 %v724, %v720
          %v845 = vpack.c.b16 %v725, %v721
          %v846 = vpack.c.b16 %v726, %v722
          %v847 = vpack.c.b16 %v731, %v727
          %v848 = vpack.c.b16 %v732, %v728
          %v849 = vpack.c.b16 %v733, %v729
          %v850 = vpack.c.b16 %v734, %v730
          %v851 = vpack.c.b16 %v739, %v735
          %v852 = vpack.c.b16 %v740, %v736
          %v853 = vpack.c.b16 %v741, %v737
          %v854 = vpack.c.b16 %v742, %v738
          %v855 = vpack.c.b16 %v747, %v743
          %v856 = vpack.c.b16 %v748, %v744
          %v857 = vpack.c.b16 %v749, %v745
          %v858 = vpack.c.b16 %v750, %v746
          %v859 = vpack.c.b16 %v755, %v751
          %v860 = vpack.c.b16 %v756, %v752
          %v861 = vpack.c.b16 %v757, %v753
          %v862 = vpack.c.b16 %v758, %v754
          %v863 = vpack.c.b16 %v763, %v759
          %v864 = vpack.c.b16 %v764, %v760
          %v865 = vpack.c.b16 %v765, %v761
          %v866 = vpack.c.b16 %v766, %v762
          %v867 = vpack.c.b16 %v771, %v767
          %v868 = vpack.c.b16 %v772, %v768
          %v869 = vpack.c.b16 %v773, %v769
          %v870 = vpack.c.b16 %v774, %v770
          %v871 = vpack.c.b16 %v779, %v775
          %v872 = vpack.c.b16 %v780, %v776
          %v873 = vpack.c.b16 %v781, %v777
          %v874 = vpack.c.b16 %v782, %v778
          %v875 = vpack.c.b16 %v787, %v783
          %v876 = vpack.c.b16 %v788, %v784
          %v877 = vpack.c.b16 %v789, %v785
          %v878 = vpack.c.b16 %v790, %v786
          %v879 = vpack.c.b16 %v795, %v791
          %v880 = vpack.c.b16 %v796, %v792
          %v881 = vpack.c.b16 %v797, %v793
          %v882 = vpack.c.b16 %v798, %v794
          %v883 = vpack.c.b16 %v803, %v799
          %v884 = vpack.c.b16 %v804, %v800
          %v885 = vpack.c.b16 %v805, %v801
          %v886 = vpack.c.b16 %v806, %v802
          %v887 = vpack.c.b16 %v811, %v807
          %v888 = vpack.c.b16 %v812, %v808
          %v889 = vpack.c.b16 %v813, %v809
          %v890 = vpack.c.b16 %v814, %v810
          %v891 = vpack.c.b16 %v819, %v815
          %v892 = vpack.c.b16 %v820, %v816
          %v893 = vpack.c.b16 %v821, %v817
          %v894 = vpack.c.b16 %v822, %v818
          %v895 = vpack.c.b16 %v827, %v823
          %v896 = vpack.c.b16 %v828, %v824
          %v897 = vpack.c.b16 %v829, %v825
          %v898 = vpack.c.b16 %v830, %v826
          %v899 = vpack.c.b16 %v835, %v831
          %v900 = vpack.c.b16 %v836, %v832
          %v901 = vpack.c.b16 %v837, %v833
          %v902 = vpack.c.b16 %v838, %v834
          %v1031 = vunpack.c.l.b16 %v583
          %v1032 = vunpack.c.l.b16 %v584
          %v1033 = vunpack.c.l.b16 %v585
          %v1034 = vunpack.c.l.b16 %v586
          %v1035 = vunpack.c.l.b16 %v587
          %v1036 = vunpack.c.l.b16 %v588
          %v1037 = vunpack.c.l.b16 %v589
          %v1038 = vunpack.c.l.b16 %v590
          %v1039 = vunpack.c.l.b16 %v591
          %v1040 = vunpack.c.l.b16 %v592
          %v1041 = vunpack.c.l.b16 %v593
          %v1042 = vunpack.c.l.b16 %v594
          %v1043 = vunpack.c.l.b16 %v595
          %v1044 = vunpack.c.l.b16 %v596
          %v1045 = vunpack.c.l.b16 %v597
          %v1046 = vunpack.c.l.b16 %v598
          %v1047 = vunpack.c.l.b16 %v599
          %v1048 = vunpack.c.l.b16 %v600
          %v1049 = vunpack.c.l.b16 %v601
          %v1050 = vunpack.c.l.b16 %v602
          %v1051 = vunpack.c.l.b16 %v603
          %v1052 = vunpack.c.l.b16 %v604
          %v1053 = vunpack.c.l.b16 %v605
          %v1054 = vunpack.c.l.b16 %v606
          %v1055 = vunpack.c.l.b16 %v607
          %v1056 = vunpack.c.l.b16 %v608
          %v1057 = vunpack.c.l.b16 %v609
          %v1058 = vunpack.c.l.b16 %v610
          %v1059 = vunpack.c.l.b16 %v611
          %v1060 = vunpack.c.l.b16 %v612
          %v1061 = vunpack.c.l.b16 %v613
          %v1062 = vunpack.c.l.b16 %v614
          %v1063 = vunpack.c.l.b16 %v615
          %v1064 = vunpack.c.l.b16 %v616
          %v1065 = vunpack.c.l.b16 %v617
          %v1066 = vunpack.c.l.b16 %v618
          %v1067 = vunpack.c.l.b16 %v619
          %v1068 = vunpack.c.l.b16 %v620
          %v1069 = vunpack.c.l.b16 %v621
          %v1070 = vunpack.c.l.b16 %v622
          %v1071 = vunpack.c.l.b16 %v623
          %v1072 = vunpack.c.l.b16 %v624
          %v1073 = vunpack.c.l.b16 %v625
          %v1074 = vunpack.c.l.b16 %v626
          %v1075 = vunpack.c.l.b16 %v627
          %v1076 = vunpack.c.l.b16 %v628
          %v1077 = vunpack.c.l.b16 %v629
          %v1078 = vunpack.c.l.b16 %v630
          %v1079 = vunpack.c.l.b16 %v631
          %v1080 = vunpack.c.l.b16 %v632
          %v1081 = vunpack.c.l.b16 %v633
          %v1082 = vunpack.c.l.b16 %v634
          %v1083 = vunpack.c.l.b16 %v635
          %v1084 = vunpack.c.l.b16 %v636
          %v1085 = vunpack.c.l.b16 %v637
          %v1086 = vunpack.c.l.b16 %v638
          %v1087 = vunpack.c.l.b16 %v639
          %v1088 = vunpack.c.l.b16 %v640
          %v1089 = vunpack.c.l.b16 %v641
          %v1090 = vunpack.c.l.b16 %v642
          %v1091 = vunpack.c.l.b16 %v643
          %v1092 = vunpack.c.l.b16 %v644
          %v1093 = vunpack.c.l.b16 %v645
          %v1094 = vunpack.c.l.b16 %v646
          %v1095 = vpack.c.b16 %v1032, %v1031
          %v1096 = vpack.c.b16 %v1034, %v1033
          %v1097 = vpack.c.b16 %v1036, %v1035
          %v1098 = vpack.c.b16 %v1038, %v1037
          %v1099 = vpack.c.b16 %v1040, %v1039
          %v1100 = vpack.c.b16 %v1042, %v1041
          %v1101 = vpack.c.b16 %v1044, %v1043
          %v1102 = vpack.c.b16 %v1046, %v1045
          %v1103 = vpack.c.b16 %v1048, %v1047
          %v1104 = vpack.c.b16 %v1050, %v1049
          %v1105 = vpack.c.b16 %v1052, %v1051
          %v1106 = vpack.c.b16 %v1054, %v1053
          %v1107 = vpack.c.b16 %v1056, %v1055
          %v1108 = vpack.c.b16 %v1058, %v1057
          %v1109 = vpack.c.b16 %v1060, %v1059
          %v1110 = vpack.c.b16 %v1062, %v1061
          %v1111 = vpack.c.b16 %v1064, %v1063
          %v1112 = vpack.c.b16 %v1066, %v1065
          %v1113 = vpack.c.b16 %v1068, %v1067
          %v1114 = vpack.c.b16 %v1070, %v1069
          %v1115 = vpack.c.b16 %v1072, %v1071
          %v1116 = vpack.c.b16 %v1074, %v1073
          %v1117 = vpack.c.b16 %v1076, %v1075
          %v1118 = vpack.c.b16 %v1078, %v1077
          %v1119 = vpack.c.b16 %v1080, %v1079
          %v1120 = vpack.c.b16 %v1082, %v1081
          %v1121 = vpack.c.b16 %v1084, %v1083
          %v1122 = vpack.c.b16 %v1086, %v1085
          %v1123 = vpack.c.b16 %v1088, %v1087
          %v1124 = vpack.c.b16 %v1090, %v1089
          %v1125 = vpack.c.b16 %v1092, %v1091
          %v1126 = vpack.c.b16 %v1094, %v1093
          %1159 = vmatprep.subr.bf16.mxu0 0
          %1160 = vmatpush1.bf16.msra.mxu0 %v1095
          %1161 = vmatprep.subr.bf16.mxu0 0
          %1162 = vmatpush1.bf16.msra.mxu0 %v1096
          %1163 = vmatprep.subr.bf16.mxu0 0
          %1164 = vmatpush1.bf16.msra.mxu0 %v1097
          %1165 = vmatprep.subr.bf16.mxu0 0
          %1166 = vmatpush1.bf16.msra.mxu0 %v1098
          %1167 = vmatprep.subr.bf16.mxu0 0
          %1168 = vmatpush1.bf16.msra.mxu0 %v1099
          %1169 = vmatprep.subr.bf16.mxu0 0
          %1170 = vmatpush1.bf16.msra.mxu0 %v1100
          %1171 = vmatprep.subr.bf16.mxu0 0
          %1172 = vmatpush1.bf16.msra.mxu0 %v1101
          %1173 = vmatprep.subr.bf16.mxu0 0
          %1174 = vmatpush1.bf16.msra.mxu0 %v1102
          %1175 = vmatprep.subr.bf16.mxu0 0
          %1176 = vmatpush1.bf16.msra.mxu0 %v1103
          %1177 = vmatprep.subr.bf16.mxu0 0
          %1178 = vmatpush1.bf16.msra.mxu0 %v1104
          %1179 = vmatprep.subr.bf16.mxu0 0
          %1180 = vmatpush1.bf16.msra.mxu0 %v1105
          %1181 = vmatprep.subr.bf16.mxu0 0
          %1182 = vmatpush1.bf16.msra.mxu0 %v1106
          %1183 = vmatprep.subr.bf16.mxu0 0
          %1184 = vmatpush1.bf16.msra.mxu0 %v1107
          %1185 = vmatprep.subr.bf16.mxu0 0
          %1186 = vmatpush1.bf16.msra.mxu0 %v1108
          %1187 = vmatprep.subr.bf16.mxu0 0
          %1188 = vmatpush1.bf16.msra.mxu0 %v1109
          %1189 = vmatprep.subr.bf16.mxu0 0
          %1190 = vmatpush1.bf16.msra.mxu0 %v1110
          %1191 = vmatprep.mubr.bf16.mxu0 %v840
          %1192 = vmatmul.mubr.bf16.gmra.mrb[0].mxu0 %v839
          %v1193 = vpop.f32.mrb[0].mxu0
          %v1194 = vadd.f32 0.0, %v1193
          %v1195 = vpop.f32.mrb[0].mxu0
          %v1196 = vpop.f32.mrb[0].mxu0
          %v1197 = vadd.f32 0.0, %v1196
          %v1198 = vpop.f32.mrb[0].mxu0
          %1199 = vmatprep.mubr.bf16.mxu0 %v844
          %1200 = vmatmul.mubr.bf16.gmra.mrb[0].mxu0 %v843
          %v1201 = vpop.f32.mrb[0].mxu0
          %v1202 = vadd.f32 0.0, %v1201
          %v1203 = vpop.f32.mrb[0].mxu0
          %v1204 = vpop.f32.mrb[0].mxu0
          %v1205 = vadd.f32 0.0, %v1204
          %v1206 = vpop.f32.mrb[0].mxu0
          %1207 = vmatprep.mubr.bf16.mxu0 %v848
          %1208 = vmatmul.mubr.bf16.gmra.mrb[0].mxu0 %v847
          %v1209 = vpop.f32.mrb[0].mxu0
          %v1210 = vadd.f32 0.0, %v1209
          %v1211 = vpop.f32.mrb[0].mxu0
          %v1212 = vpop.f32.mrb[0].mxu0
          %v1213 = vadd.f32 0.0, %v1212
          %v1214 = vpop.f32.mrb[0].mxu0
          %1215 = vmatprep.mubr.bf16.mxu0 %v852
          %1216 = vmatmul.mubr.bf16.gmra.mrb[0].mxu0 %v851
          %v1217 = vpop.f32.mrb[0].mxu0
          %v1218 = vadd.f32 0.0, %v1217
          %v1219 = vpop.f32.mrb[0].mxu0
          %v1220 = vpop.f32.mrb[0].mxu0
          %v1221 = vadd.f32 0.0, %v1220
          %v1222 = vpop.f32.mrb[0].mxu0
          %1223 = vmatprep.mubr.bf16.mxu0 %v856
          %1224 = vmatmul.mubr.bf16.gmra.mrb[0].mxu0 %v855
          %v1225 = vpop.f32.mrb[0].mxu0
          %v1226 = vadd.f32 0.0, %v1225
          %v1227 = vpop.f32.mrb[0].mxu0
          %v1228 = vpop.f32.mrb[0].mxu0
          %v1229 = vadd.f32 0.0, %v1228
          %v1230 = vpop.f32.mrb[0].mxu0
          %1231 = vmatprep.mubr.bf16.mxu0 %v860
          %1232 = vmatmul.mubr.bf16.gmra.mrb[0].mxu0 %v859
          %v1233 = vpop.f32.mrb[0].mxu0
          %v1234 = vadd.f32 0.0, %v1233
          %v1235 = vpop.f32.mrb[0].mxu0
          %v1236 = vpop.f32.mrb[0].mxu0
          %v1237 = vadd.f32 0.0, %v1236
          %v1238 = vpop.f32.mrb[0].mxu0
          %1239 = vmatprep.mubr.bf16.mxu0 %v864
          %1240 = vmatmul.mubr.bf16.gmra.mrb[0].mxu0 %v863
          %v1241 = vpop.f32.mrb[0].mxu0
          %v1242 = vadd.f32 0.0, %v1241
          %v1243 = vpop.f32.mrb[0].mxu0
          %v1244 = vpop.f32.mrb[0].mxu0
          %v1245 = vadd.f32 0.0, %v1244
          %v1246 = vpop.f32.mrb[0].mxu0
          %1247 = vmatprep.mubr.bf16.mxu0 %v868
          %1248 = vmatmul.mubr.bf16.gmra.mrb[0].mxu0 %v867
          %v1249 = vpop.f32.mrb[0].mxu0
          %v1250 = vadd.f32 0.0, %v1249
          %v1251 = vpop.f32.mrb[0].mxu0
          %v1252 = vpop.f32.mrb[0].mxu0
          %v1253 = vadd.f32 0.0, %v1252
          %v1254 = vpop.f32.mrb[0].mxu0
          %1255 = vmatprep.mubr.bf16.mxu0 %v872
          %1256 = vmatmul.mubr.bf16.gmra.mrb[0].mxu0 %v871
          %v1257 = vpop.f32.mrb[0].mxu0
          %v1258 = vadd.f32 0.0, %v1257
          %v1259 = vpop.f32.mrb[0].mxu0
          %v1260 = vpop.f32.mrb[0].mxu0
          %v1261 = vadd.f32 0.0, %v1260
          %v1262 = vpop.f32.mrb[0].mxu0
          %1263 = vmatprep.mubr.bf16.mxu0 %v876
          %1264 = vmatmul.mubr.bf16.gmra.mrb[0].mxu0 %v875
          %v1265 = vpop.f32.mrb[0].mxu0
          %v1266 = vadd.f32 0.0, %v1265
          %v1267 = vpop.f32.mrb[0].mxu0
          %v1268 = vpop.f32.mrb[0].mxu0
          %v1269 = vadd.f32 0.0, %v1268
          %v1270 = vpop.f32.mrb[0].mxu0
          %1271 = vmatprep.mubr.bf16.mxu0 %v880
          %1272 = vmatmul.mubr.bf16.gmra.mrb[0].mxu0 %v879
          %v1273 = vpop.f32.mrb[0].mxu0
          %v1274 = vadd.f32 0.0, %v1273
          %v1275 = vpop.f32.mrb[0].mxu0
          %v1276 = vpop.f32.mrb[0].mxu0
          %v1277 = vadd.f32 0.0, %v1276
          %v1278 = vpop.f32.mrb[0].mxu0
          %1279 = vmatprep.mubr.bf16.mxu0 %v884
          %1280 = vmatmul.mubr.bf16.gmra.mrb[0].mxu0 %v883
          %v1281 = vpop.f32.mrb[0].mxu0
          %v1282 = vadd.f32 0.0, %v1281
          %v1283 = vpop.f32.mrb[0].mxu0
          %v1284 = vpop.f32.mrb[0].mxu0
          %v1285 = vadd.f32 0.0, %v1284
          %v1286 = vpop.f32.mrb[0].mxu0
          %1287 = vmatprep.mubr.bf16.mxu0 %v888
          %1288 = vmatmul.mubr.bf16.gmra.mrb[0].mxu0 %v887
          %v1289 = vpop.f32.mrb[0].mxu0
          %v1290 = vadd.f32 0.0, %v1289
          %v1291 = vpop.f32.mrb[0].mxu0
          %v1292 = vpop.f32.mrb[0].mxu0
          %v1293 = vadd.f32 0.0, %v1292
          %v1294 = vpop.f32.mrb[0].mxu0
          %1295 = vmatprep.mubr.bf16.mxu0 %v892
          %1296 = vmatmul.mubr.bf16.gmra.mrb[0].mxu0 %v891
          %v1297 = vpop.f32.mrb[0].mxu0
          %v1298 = vadd.f32 0.0, %v1297
          %v1299 = vpop.f32.mrb[0].mxu0
          %v1300 = vpop.f32.mrb[0].mxu0
          %v1301 = vadd.f32 0.0, %v1300
          %v1302 = vpop.f32.mrb[0].mxu0
          %1303 = vmatprep.mubr.bf16.mxu0 %v896
          %1304 = vmatmul.mubr.bf16.gmra.mrb[0].mxu0 %v895
          %v1305 = vpop.f32.mrb[0].mxu0
          %v1306 = vadd.f32 0.0, %v1305
          %v1307 = vpop.f32.mrb[0].mxu0
          %v1308 = vpop.f32.mrb[0].mxu0
          %v1309 = vadd.f32 0.0, %v1308
          %v1310 = vpop.f32.mrb[0].mxu0
          %1311 = vmatprep.mubr.bf16.mxu0 %v900
          %1312 = vmatmul.mubr.bf16.gmra.mrb[0].mxu0 %v899
          %v1313 = vpop.f32.mrb[0].mxu0
          %v1314 = vadd.f32 0.0, %v1313
          %v1315 = vpop.f32.mrb[0].mxu0
          %v1316 = vpop.f32.mrb[0].mxu0
          %v1317 = vadd.f32 0.0, %v1316
          %v1318 = vpop.f32.mrb[0].mxu0
          %1319 = vdwg.mxu0
          %1320 = vmatprep.subr.bf16.mxu0 0
          %1321 = vmatpush1.bf16.msra.mxu0 %v1111
          %1322 = vmatprep.subr.bf16.mxu0 0
          %1323 = vmatpush1.bf16.msra.mxu0 %v1112
          %1324 = vmatprep.subr.bf16.mxu0 0
          %1325 = vmatpush1.bf16.msra.mxu0 %v1113
          %1326 = vmatprep.subr.bf16.mxu0 0
          %1327 = vmatpush1.bf16.msra.mxu0 %v1114
          %1328 = vmatprep.subr.bf16.mxu0 0
          %1329 = vmatpush1.bf16.msra.mxu0 %v1115
          %1330 = vmatprep.subr.bf16.mxu0 0
          %1331 = vmatpush1.bf16.msra.mxu0 %v1116
          %1332 = vmatprep.subr.bf16.mxu0 0
          %1333 = vmatpush1.bf16.msra.mxu0 %v1117
          %1334 = vmatprep.subr.bf16.mxu0 0
          %1335 = vmatpush1.bf16.msra.mxu0 %v1118
          %1336 = vmatprep.subr.bf16.mxu0 0
          %1337 = vmatpush1.bf16.msra.mxu0 %v1119
          %1338 = vmatprep.subr.bf16.mxu0 0
          %1339 = vmatpush1.bf16.msra.mxu0 %v1120
          %1340 = vmatprep.subr.bf16.mxu0 0
          %1341 = vmatpush1.bf16.msra.mxu0 %v1121
          %1342 = vmatprep.subr.bf16.mxu0 0
          %1343 = vmatpush1.bf16.msra.mxu0 %v1122
          %1344 = vmatprep.subr.bf16.mxu0 0
          %1345 = vmatpush1.bf16.msra.mxu0 %v1123
          %1346 = vmatprep.subr.bf16.mxu0 0
          %1347 = vmatpush1.bf16.msra.mxu0 %v1124
          %1348 = vmatprep.subr.bf16.mxu0 0
          %1349 = vmatpush1.bf16.msra.mxu0 %v1125
          %1350 = vmatprep.subr.bf16.mxu0 0
          %1351 = vmatpush1.bf16.msra.mxu0 %v1126
          %1352 = vmatprep.mubr.bf16.mxu0 %v842
          %1353 = vmatmul.mubr.bf16.gmra.mrb[0].mxu0 %v841
          %v1354 = vpop.f32.mrb[0].mxu0
          %v1355 = vadd.f32 %v1194, %v1354
          %v1356 = vpop.f32.mrb[0].mxu0
          %v1357 = vpop.f32.mrb[0].mxu0
          %v1358 = vadd.f32 %v1197, %v1357
          %v1359 = vpop.f32.mrb[0].mxu0
          %1360 = vmatprep.mubr.bf16.mxu0 %v846
          %1361 = vmatmul.mubr.bf16.gmra.mrb[0].mxu0 %v845
          %v1362 = vpop.f32.mrb[0].mxu0
          %v1363 = vadd.f32 %v1202, %v1362
          %v1364 = vpop.f32.mrb[0].mxu0
          %v1365 = vpop.f32.mrb[0].mxu0
          %v1366 = vadd.f32 %v1205, %v1365
          %v1367 = vpop.f32.mrb[0].mxu0
          %1368 = vmatprep.mubr.bf16.mxu0 %v850
          %1369 = vmatmul.mubr.bf16.gmra.mrb[0].mxu0 %v849
          %v1370 = vpop.f32.mrb[0].mxu0
          %v1371 = vadd.f32 %v1210, %v1370
          %v1372 = vpop.f32.mrb[0].mxu0
          %v1373 = vpop.f32.mrb[0].mxu0
          %v1374 = vadd.f32 %v1213, %v1373
          %v1375 = vpop.f32.mrb[0].mxu0
          %1376 = vmatprep.mubr.bf16.mxu0 %v854
          %1377 = vmatmul.mubr.bf16.gmra.mrb[0].mxu0 %v853
          %v1378 = vpop.f32.mrb[0].mxu0
          %v1379 = vadd.f32 %v1218, %v1378
          %v1380 = vpop.f32.mrb[0].mxu0
          %v1381 = vpop.f32.mrb[0].mxu0
          %v1382 = vadd.f32 %v1221, %v1381
          %v1383 = vpop.f32.mrb[0].mxu0
          %1384 = vmatprep.mubr.bf16.mxu0 %v858
          %1385 = vmatmul.mubr.bf16.gmra.mrb[0].mxu0 %v857
          %v1386 = vpop.f32.mrb[0].mxu0
          %v1387 = vadd.f32 %v1226, %v1386
          %v1388 = vpop.f32.mrb[0].mxu0
          %v1389 = vpop.f32.mrb[0].mxu0
          %v1390 = vadd.f32 %v1229, %v1389
          %v1391 = vpop.f32.mrb[0].mxu0
          %1392 = vmatprep.mubr.bf16.mxu0 %v862
          %1393 = vmatmul.mubr.bf16.gmra.mrb[0].mxu0 %v861
          %v1394 = vpop.f32.mrb[0].mxu0
          %v1395 = vadd.f32 %v1234, %v1394
          %v1396 = vpop.f32.mrb[0].mxu0
          %v1397 = vpop.f32.mrb[0].mxu0
          %v1398 = vadd.f32 %v1237, %v1397
          %v1399 = vpop.f32.mrb[0].mxu0
          %1400 = vmatprep.mubr.bf16.mxu0 %v866
          %1401 = vmatmul.mubr.bf16.gmra.mrb[0].mxu0 %v865
          %v1402 = vpop.f32.mrb[0].mxu0
          %v1403 = vadd.f32 %v1242, %v1402
          %v1404 = vpop.f32.mrb[0].mxu0
          %v1405 = vpop.f32.mrb[0].mxu0
          %v1406 = vadd.f32 %v1245, %v1405
          %v1407 = vpop.f32.mrb[0].mxu0
          %1408 = vmatprep.mubr.bf16.mxu0 %v870
          %1409 = vmatmul.mubr.bf16.gmra.mrb[0].mxu0 %v869
          %v1410 = vpop.f32.mrb[0].mxu0
          %v1411 = vadd.f32 %v1250, %v1410
          %v1412 = vpop.f32.mrb[0].mxu0
          %v1413 = vpop.f32.mrb[0].mxu0
          %v1414 = vadd.f32 %v1253, %v1413
          %v1415 = vpop.f32.mrb[0].mxu0
          %1416 = vmatprep.mubr.bf16.mxu0 %v874
          %1417 = vmatmul.mubr.bf16.gmra.mrb[0].mxu0 %v873
          %v1418 = vpop.f32.mrb[0].mxu0
          %v1419 = vadd.f32 %v1258, %v1418
          %v1420 = vpop.f32.mrb[0].mxu0
          %v1421 = vpop.f32.mrb[0].mxu0
          %v1422 = vadd.f32 %v1261, %v1421
          %v1423 = vpop.f32.mrb[0].mxu0
          %1424 = vmatprep.mubr.bf16.mxu0 %v878
          %1425 = vmatmul.mubr.bf16.gmra.mrb[0].mxu0 %v877
          %v1426 = vpop.f32.mrb[0].mxu0
          %v1427 = vadd.f32 %v1266, %v1426
          %v1428 = vpop.f32.mrb[0].mxu0
          %v1429 = vpop.f32.mrb[0].mxu0
          %v1430 = vadd.f32 %v1269, %v1429
          %v1431 = vpop.f32.mrb[0].mxu0
          %1432 = vmatprep.mubr.bf16.mxu0 %v882
          %1433 = vmatmul.mubr.bf16.gmra.mrb[0].mxu0 %v881
          %v1434 = vpop.f32.mrb[0].mxu0
          %v1435 = vadd.f32 %v1274, %v1434
          %v1436 = vpop.f32.mrb[0].mxu0
          %v1437 = vpop.f32.mrb[0].mxu0
          %v1438 = vadd.f32 %v1277, %v1437
          %v1439 = vpop.f32.mrb[0].mxu0
          %1440 = vmatprep.mubr.bf16.mxu0 %v886
          %1441 = vmatmul.mubr.bf16.gmra.mrb[0].mxu0 %v885
          %v1442 = vpop.f32.mrb[0].mxu0
          %v1443 = vadd.f32 %v1282, %v1442
          %v1444 = vpop.f32.mrb[0].mxu0
          %v1445 = vpop.f32.mrb[0].mxu0
          %v1446 = vadd.f32 %v1285, %v1445
          %v1447 = vpop.f32.mrb[0].mxu0
          %1448 = vmatprep.mubr.bf16.mxu0 %v890
          %1449 = vmatmul.mubr.bf16.gmra.mrb[0].mxu0 %v889
          %v1450 = vpop.f32.mrb[0].mxu0
          %v1451 = vadd.f32 %v1290, %v1450
          %v1452 = vpop.f32.mrb[0].mxu0
          %v1453 = vpop.f32.mrb[0].mxu0
          %v1454 = vadd.f32 %v1293, %v1453
          %v1455 = vpop.f32.mrb[0].mxu0
          %1456 = vmatprep.mubr.bf16.mxu0 %v894
          %1457 = vmatmul.mubr.bf16.gmra.mrb[0].mxu0 %v893
          %v1458 = vpop.f32.mrb[0].mxu0
          %v1459 = vadd.f32 %v1298, %v1458
          %v1460 = vpop.f32.mrb[0].mxu0
          %v1461 = vpop.f32.mrb[0].mxu0
          %v1462 = vadd.f32 %v1301, %v1461
          %v1463 = vpop.f32.mrb[0].mxu0
          %1464 = vmatprep.mubr.bf16.mxu0 %v898
          %1465 = vmatmul.mubr.bf16.gmra.mrb[0].mxu0 %v897
          %v1466 = vpop.f32.mrb[0].mxu0
          %v1467 = vadd.f32 %v1306, %v1466
          %v1468 = vpop.f32.mrb[0].mxu0
          %v1469 = vpop.f32.mrb[0].mxu0
          %v1470 = vadd.f32 %v1309, %v1469
          %v1471 = vpop.f32.mrb[0].mxu0
          %1472 = vmatprep.mubr.bf16.mxu0 %v902
          %1473 = vmatmul.mubr.bf16.gmra.mrb[0].mxu0 %v901
          %v1474 = vpop.f32.mrb[0].mxu0
          %v1475 = vadd.f32 %v1314, %v1474
          %v1476 = vpop.f32.mrb[0].mxu0
          %v1477 = vpop.f32.mrb[0].mxu0
          %v1478 = vadd.f32 %v1317, %v1477
          %v1479 = vpop.f32.mrb[0].mxu0
          %1480 = vdwg.mxu0
          %v1481 = vpack.c.bf16 %v1358, %v1355
          %v1482 = vpack.c.bf16 %v1366, %v1363
          %v1483 = vpack.c.bf16 %v1374, %v1371
          %v1484 = vpack.c.bf16 %v1382, %v1379
          %v1485 = vpack.c.bf16 %v1390, %v1387
          %v1486 = vpack.c.bf16 %v1398, %v1395
          %v1487 = vpack.c.bf16 %v1406, %v1403
          %v1488 = vpack.c.bf16 %v1414, %v1411
          %v1489 = vpack.c.bf16 %v1422, %v1419
          %v1490 = vpack.c.bf16 %v1430, %v1427
          %v1491 = vpack.c.bf16 %v1438, %v1435
          %v1492 = vpack.c.bf16 %v1446, %v1443
          %v1493 = vpack.c.bf16 %v1454, %v1451
          %v1494 = vpack.c.bf16 %v1462, %v1459
          %v1495 = vpack.c.bf16 %v1470, %v1467
          %v1496 = vpack.c.bf16 %v1478, %v1475
          %v1497 = vld [vmem:[#allocation9] sm:$0xf]
          %v1498 = vld [vmem:[#allocation9 + $0x4] sm:$0xf]
          %v1499 = vld [vmem:[#allocation9 + $0x8] sm:$0xf]
          %v1500 = vld [vmem:[#allocation9 + $0xc] sm:$0xf]
          %v1501 = vld [vmem:[#allocation9 + $0x10] sm:$0xf]
          %v1502 = vld [vmem:[#allocation9 + $0x14] sm:$0xf]
          %v1503 = vld [vmem:[#allocation9 + $0x18] sm:$0xf]
          %v1504 = vld [vmem:[#allocation9 + $0x1c] sm:$0xf]
          %v1505 = vld [vmem:[#allocation9 + $0x20] sm:$0xf]
          %v1506 = vld [vmem:[#allocation9 + $0x24] sm:$0xf]
          %v1507 = vld [vmem:[#allocation9 + $0x28] sm:$0xf]
          %v1508 = vld [vmem:[#allocation9 + $0x2c] sm:$0xf]
          %v1509 = vld [vmem:[#allocation9 + $0x30] sm:$0xf]
          %v1510 = vld [vmem:[#allocation9 + $0x34] sm:$0xf]
          %v1511 = vld [vmem:[#allocation9 + $0x38] sm:$0xf]
          %v1512 = vld [vmem:[#allocation9 + $0x3c] sm:$0xf]
          %s1513 = smul.u32 %s34, 256
          %v1515 = vlaneseq
          %v1516 = vshrl.u32 %v1515, 7
          %v1517 = vsub.s32 0, %v1516
          %v1518 = vrot.slane %v518, %v1517
          %v1536 = vunpack.c.l.b16 %v1497
          %v1537 = vunpack.c.l.b16 %v1498
          %v1538 = vunpack.c.l.b16 %v1499
          %v1539 = vunpack.c.l.b16 %v1500
          %v1540 = vunpack.c.l.b16 %v1501
          %v1541 = vunpack.c.l.b16 %v1502
          %v1542 = vunpack.c.l.b16 %v1503
          %v1543 = vunpack.c.l.b16 %v1504
          %v1544 = vunpack.c.l.b16 %v1505
          %v1545 = vunpack.c.l.b16 %v1506
          %v1546 = vunpack.c.l.b16 %v1507
          %v1547 = vunpack.c.l.b16 %v1508
          %v1548 = vunpack.c.l.b16 %v1509
          %v1549 = vunpack.c.l.b16 %v1510
          %v1550 = vunpack.c.l.b16 %v1511
          %v1551 = vunpack.c.l.b16 %v1512
          %v1552 = vpack.c.b16 %v1537, %v1536
          %v1553 = vpack.c.b16 %v1539, %v1538
          %v1554 = vpack.c.b16 %v1541, %v1540
          %v1555 = vpack.c.b16 %v1543, %v1542
          %v1556 = vpack.c.b16 %v1545, %v1544
          %v1557 = vpack.c.b16 %v1547, %v1546
          %v1558 = vpack.c.b16 %v1549, %v1548
          %v1559 = vpack.c.b16 %v1551, %v1550
          %1568 = vmatprep.subr.bf16.mxu0 0
          %1569 = vmatpush1.bf16.msra.mxu0 %v1552
          %1570 = vmatprep.subr.bf16.mxu0 0
          %1571 = vmatpush1.bf16.msra.mxu0 %v1553
          %1572 = vmatprep.subr.bf16.mxu0 0
          %1573 = vmatpush1.bf16.msra.mxu0 %v1554
          %1574 = vmatprep.subr.bf16.mxu0 0
          %1575 = vmatpush1.bf16.msra.mxu0 %v1555
          %1576 = vmatprep.subr.bf16.mxu0 0
          %1577 = vmatpush1.bf16.msra.mxu0 %v1556
          %1578 = vmatprep.subr.bf16.mxu0 0
          %1579 = vmatpush1.bf16.msra.mxu0 %v1557
          %1580 = vmatprep.subr.bf16.mxu0 0
          %1581 = vmatpush1.bf16.msra.mxu0 %v1558
          %1582 = vmatprep.subr.bf16.mxu0 0
          %1583 = vmatpush1.bf16.msra.mxu0 %v1559
          %1584 = vmatprep.subr.bf16.mxu0 0
          %1585 = vmatpush1.bf16.msra.mxu0 0
          %1586 = vmatprep.subr.bf16.mxu0 0
          %1587 = vmatpush1.bf16.msra.mxu0 0
          %1588 = vmatprep.subr.bf16.mxu0 0
          %1589 = vmatpush1.bf16.msra.mxu0 0
          %1590 = vmatprep.subr.bf16.mxu0 0
          %1591 = vmatpush1.bf16.msra.mxu0 0
          %1592 = vmatprep.subr.bf16.mxu0 0
          %1593 = vmatpush1.bf16.msra.mxu0 0
          %1594 = vmatprep.subr.bf16.mxu0 0
          %1595 = vmatpush1.bf16.msra.mxu0 0
          %1596 = vmatprep.subr.bf16.mxu0 0
          %1597 = vmatpush1.bf16.msra.mxu0 0
          %1598 = vmatprep.subr.bf16.mxu0 0
          %1599 = vmatpush1.bf16.msra.mxu0 0
          %1600 = vmatprep.mubr.bf16.mxu0 0
          %1601 = vmatmul.mubr.bf16.gmra.mrb[0].mxu0 %v1481
          %v1602 = vpop.f32.mrb[0].mxu0
          %v1603 = vadd.f32 %v1518, %v1602
          %v1604 = vpop.f32.mrb[0].mxu0
          %v1605 = vpop.f32.mrb[0].mxu0
          %v1606 = vadd.f32 %v1518, %v1605
          %v1607 = vpop.f32.mrb[0].mxu0
          %1608 = vmatprep.mubr.bf16.mxu0 0
          %1609 = vmatmul.mubr.bf16.gmra.mrb[0].mxu0 %v1482
          %v1610 = vpop.f32.mrb[0].mxu0
          %v1611 = vadd.f32 %v1518, %v1610
          %v1612 = vpop.f32.mrb[0].mxu0
          %v1613 = vpop.f32.mrb[0].mxu0
          %v1614 = vadd.f32 %v1518, %v1613
          %v1615 = vpop.f32.mrb[0].mxu0
          %1616 = vmatprep.mubr.bf16.mxu0 0
          %1617 = vmatmul.mubr.bf16.gmra.mrb[0].mxu0 %v1483
          %v1618 = vpop.f32.mrb[0].mxu0
          %v1619 = vadd.f32 %v1518, %v1618
          %v1620 = vpop.f32.mrb[0].mxu0
          %v1621 = vpop.f32.mrb[0].mxu0
          %v1622 = vadd.f32 %v1518, %v1621
          %v1623 = vpop.f32.mrb[0].mxu0
          %1624 = vmatprep.mubr.bf16.mxu0 0
          %1625 = vmatmul.mubr.bf16.gmra.mrb[0].mxu0 %v1484
          %v1626 = vpop.f32.mrb[0].mxu0
          %v1627 = vadd.f32 %v1518, %v1626
          %v1628 = vpop.f32.mrb[0].mxu0
          %v1629 = vpop.f32.mrb[0].mxu0
          %v1630 = vadd.f32 %v1518, %v1629
          %v1631 = vpop.f32.mrb[0].mxu0
          %1632 = vmatprep.mubr.bf16.mxu0 0
          %1633 = vmatmul.mubr.bf16.gmra.mrb[0].mxu0 %v1485
          %v1634 = vpop.f32.mrb[0].mxu0
          %v1635 = vadd.f32 %v1518, %v1634
          %v1636 = vpop.f32.mrb[0].mxu0
          %v1637 = vpop.f32.mrb[0].mxu0
          %v1638 = vadd.f32 %v1518, %v1637
          %v1639 = vpop.f32.mrb[0].mxu0
          %1640 = vmatprep.mubr.bf16.mxu0 0
          %1641 = vmatmul.mubr.bf16.gmra.mrb[0].mxu0 %v1486
          %v1642 = vpop.f32.mrb[0].mxu0
          %v1643 = vadd.f32 %v1518, %v1642
          %v1644 = vpop.f32.mrb[0].mxu0
          %v1645 = vpop.f32.mrb[0].mxu0
          %v1646 = vadd.f32 %v1518, %v1645
          %v1647 = vpop.f32.mrb[0].mxu0
          %1648 = vmatprep.mubr.bf16.mxu0 0
          %1649 = vmatmul.mubr.bf16.gmra.mrb[0].mxu0 %v1487
          %v1650 = vpop.f32.mrb[0].mxu0
          %v1651 = vadd.f32 %v1518, %v1650
          %v1652 = vpop.f32.mrb[0].mxu0
          %v1653 = vpop.f32.mrb[0].mxu0
          %v1654 = vadd.f32 %v1518, %v1653
          %v1655 = vpop.f32.mrb[0].mxu0
          %1656 = vmatprep.mubr.bf16.mxu0 0
          %1657 = vmatmul.mubr.bf16.gmra.mrb[0].mxu0 %v1488
          %v1658 = vpop.f32.mrb[0].mxu0
          %v1659 = vadd.f32 %v1518, %v1658
          %v1660 = vpop.f32.mrb[0].mxu0
          %v1661 = vpop.f32.mrb[0].mxu0
          %v1662 = vadd.f32 %v1518, %v1661
          %v1663 = vpop.f32.mrb[0].mxu0
          %1664 = vmatprep.mubr.bf16.mxu0 0
          %1665 = vmatmul.mubr.bf16.gmra.mrb[0].mxu0 %v1489
          %v1666 = vpop.f32.mrb[0].mxu0
          %v1667 = vadd.f32 %v1518, %v1666
          %v1668 = vpop.f32.mrb[0].mxu0
          %v1669 = vpop.f32.mrb[0].mxu0
          %v1670 = vadd.f32 %v1518, %v1669
          %v1671 = vpop.f32.mrb[0].mxu0
          %1672 = vmatprep.mubr.bf16.mxu0 0
          %1673 = vmatmul.mubr.bf16.gmra.mrb[0].mxu0 %v1490
          %v1674 = vpop.f32.mrb[0].mxu0
          %v1675 = vadd.f32 %v1518, %v1674
          %v1676 = vpop.f32.mrb[0].mxu0
          %v1677 = vpop.f32.mrb[0].mxu0
          %v1678 = vadd.f32 %v1518, %v1677
          %v1679 = vpop.f32.mrb[0].mxu0
          %1680 = vmatprep.mubr.bf16.mxu0 0
          %1681 = vmatmul.mubr.bf16.gmra.mrb[0].mxu0 %v1491
          %v1682 = vpop.f32.mrb[0].mxu0
          %v1683 = vadd.f32 %v1518, %v1682
          %v1684 = vpop.f32.mrb[0].mxu0
          %v1685 = vpop.f32.mrb[0].mxu0
          %v1686 = vadd.f32 %v1518, %v1685
          %v1687 = vpop.f32.mrb[0].mxu0
          %1688 = vmatprep.mubr.bf16.mxu0 0
          %1689 = vmatmul.mubr.bf16.gmra.mrb[0].mxu0 %v1492
          %v1690 = vpop.f32.mrb[0].mxu0
          %v1691 = vadd.f32 %v1518, %v1690
          %v1692 = vpop.f32.mrb[0].mxu0
          %v1693 = vpop.f32.mrb[0].mxu0
          %v1694 = vadd.f32 %v1518, %v1693
          %v1695 = vpop.f32.mrb[0].mxu0
          %1696 = vmatprep.mubr.bf16.mxu0 0
          %1697 = vmatmul.mubr.bf16.gmra.mrb[0].mxu0 %v1493
          %v1698 = vpop.f32.mrb[0].mxu0
          %v1699 = vadd.f32 %v1518, %v1698
          %v1700 = vpop.f32.mrb[0].mxu0
          %v1701 = vpop.f32.mrb[0].mxu0
          %v1702 = vadd.f32 %v1518, %v1701
          %v1703 = vpop.f32.mrb[0].mxu0
          %1704 = vmatprep.mubr.bf16.mxu0 0
          %1705 = vmatmul.mubr.bf16.gmra.mrb[0].mxu0 %v1494
          %v1706 = vpop.f32.mrb[0].mxu0
          %v1707 = vadd.f32 %v1518, %v1706
          %v1708 = vpop.f32.mrb[0].mxu0
          %v1709 = vpop.f32.mrb[0].mxu0
          %v1710 = vadd.f32 %v1518, %v1709
          %v1711 = vpop.f32.mrb[0].mxu0
          %1712 = vmatprep.mubr.bf16.mxu0 0
          %1713 = vmatmul.mubr.bf16.gmra.mrb[0].mxu0 %v1495
          %v1714 = vpop.f32.mrb[0].mxu0
          %v1715 = vadd.f32 %v1518, %v1714
          %v1716 = vpop.f32.mrb[0].mxu0
          %v1717 = vpop.f32.mrb[0].mxu0
          %v1718 = vadd.f32 %v1518, %v1717
          %v1719 = vpop.f32.mrb[0].mxu0
          %1720 = vmatprep.mubr.bf16.mxu0 0
          %1721 = vmatmul.mubr.bf16.gmra.mrb[0].mxu0 %v1496
          %v1722 = vpop.f32.mrb[0].mxu0
          %v1723 = vadd.f32 %v1518, %v1722
          %v1724 = vpop.f32.mrb[0].mxu0
          %v1725 = vpop.f32.mrb[0].mxu0
          %v1726 = vadd.f32 %v1518, %v1725
          %v1727 = vpop.f32.mrb[0].mxu0
          %1728 = vdwg.mxu0
          %v1729 = vmax.f32 %v1603, 0.0
          %v1730 = vmax.f32 %v1606, 0.0
          %v1731 = vmax.f32 %v1611, 0.0
          %v1732 = vmax.f32 %v1614, 0.0
          %v1733 = vmax.f32 %v1619, 0.0
          %v1734 = vmax.f32 %v1622, 0.0
          %v1735 = vmax.f32 %v1627, 0.0
          %v1736 = vmax.f32 %v1630, 0.0
          %v1737 = vmax.f32 %v1635, 0.0
          %v1738 = vmax.f32 %v1638, 0.0
          %v1739 = vmax.f32 %v1643, 0.0
          %v1740 = vmax.f32 %v1646, 0.0
          %v1741 = vmax.f32 %v1651, 0.0
          %v1742 = vmax.f32 %v1654, 0.0
          %v1743 = vmax.f32 %v1659, 0.0
          %v1744 = vmax.f32 %v1662, 0.0
          %v1745 = vmax.f32 %v1667, 0.0
          %v1746 = vmax.f32 %v1670, 0.0
          %v1747 = vmax.f32 %v1675, 0.0
          %v1748 = vmax.f32 %v1678, 0.0
          %v1749 = vmax.f32 %v1683, 0.0
          %v1750 = vmax.f32 %v1686, 0.0
          %v1751 = vmax.f32 %v1691, 0.0
          %v1752 = vmax.f32 %v1694, 0.0
          %v1753 = vmax.f32 %v1699, 0.0
          %v1754 = vmax.f32 %v1702, 0.0
          %v1755 = vmax.f32 %v1707, 0.0
          %v1756 = vmax.f32 %v1710, 0.0
          %v1757 = vmax.f32 %v1715, 0.0
          %v1758 = vmax.f32 %v1718, 0.0
          %v1759 = vmax.f32 %v1723, 0.0
          %v1760 = vmax.f32 %v1726, 0.0
          %v1761 = vpack.c.bf16 %v1730, %v1729
          %v1762 = vpack.c.bf16 %v1732, %v1731
          %v1763 = vpack.c.bf16 %v1734, %v1733
          %v1764 = vpack.c.bf16 %v1736, %v1735
          %v1765 = vpack.c.bf16 %v1738, %v1737
          %v1766 = vpack.c.bf16 %v1740, %v1739
          %v1767 = vpack.c.bf16 %v1742, %v1741
          %v1768 = vpack.c.bf16 %v1744, %v1743
          %v1769 = vpack.c.bf16 %v1746, %v1745
          %v1770 = vpack.c.bf16 %v1748, %v1747
          %v1771 = vpack.c.bf16 %v1750, %v1749
          %v1772 = vpack.c.bf16 %v1752, %v1751
          %v1773 = vpack.c.bf16 %v1754, %v1753
          %v1774 = vpack.c.bf16 %v1756, %v1755
          %v1775 = vpack.c.bf16 %v1758, %v1757
          %v1776 = vpack.c.bf16 %v1760, %v1759
          %s1777 = sshra.s32 %s1513, 4
          %s1778 = sand.u32 %s1513, 15
          %s1779 = smul.addr %s1777, 8
          %s1780 = scalar_lea.vmem [#allocation2], %s1779
          %1781 = vst [vmem:[%s1780] sm:$0xff] %v1761
          %1782 = vst [vmem:[%s1780 + $0x8] sm:$0xff] %v1762
          %1783 = vst [vmem:[%s1780 + $0x10] sm:$0xff] %v1763
          %1784 = vst [vmem:[%s1780 + $0x18] sm:$0xff] %v1764
          %1785 = vst [vmem:[%s1780 + $0x20] sm:$0xff] %v1765
          %1786 = vst [vmem:[%s1780 + $0x28] sm:$0xff] %v1766
          %1787 = vst [vmem:[%s1780 + $0x30] sm:$0xff] %v1767
          %1788 = vst [vmem:[%s1780 + $0x38] sm:$0xff] %v1768
          %1789 = vst [vmem:[%s1780 + $0x40] sm:$0xff] %v1769
          %1790 = vst [vmem:[%s1780 + $0x48] sm:$0xff] %v1770
          %1791 = vst [vmem:[%s1780 + $0x50] sm:$0xff] %v1771
          %1792 = vst [vmem:[%s1780 + $0x58] sm:$0xff] %v1772
          %1793 = vst [vmem:[%s1780 + $0x60] sm:$0xff] %v1773
          %1794 = vst [vmem:[%s1780 + $0x68] sm:$0xff] %v1774
          %1795 = vst [vmem:[%s1780 + $0x70] sm:$0xff] %v1775
          %1796 = vst [vmem:[%s1780 + $0x78] sm:$0xff] %v1776
        $region96: #{tpu_custom_call.1} parent=63 // pred_fallthru
          _
        %p1797 = scmp.eq.s32.totalorder %s33, 1
        %p1798 = scmp.eq.s32.totalorder %s34, 0
        %p1799 = pnand %p1797, %p1798
        %p1800 = pneg %p1799
        // Predicated region
        $region97: #{tpu_custom_call.1} parent=63 // pred_check
          _
        $region98: #{tpu_custom_call.1} parent=63 // pred_check_branch
          %1802 = sbr.rel (%p1799) target = $region100
        $region99: #{tpu_custom_call.1} parent=63 // pred_region
          %1803 = vst [vmem:[#allocation3] sm:$0xff] 0.0
        $region100: #{tpu_custom_call.1} parent=63 // pred_fallthru
          _
        // Predicated region
        $region101: #{tpu_custom_call.1} parent=63 // pred_check
          %p1804 = pneg %p1797
        $region102: #{tpu_custom_call.1} parent=63 // pred_check_branch
          %1806 = sbr.rel (%p1804) target = $region104
        $region103: #{tpu_custom_call.1} parent=63 // pred_region
          %v1807 = vld [vmem:[%s6 + $0x1] sm:$0x1]
          %v1808 = vld [vmem:[%s445] sm:$0xff]
          %v1809 = vld [vmem:[%s445 + $0x8] sm:$0xff]
          %v1810 = vld [vmem:[%s445 + $0x10] sm:$0xff]
          %v1811 = vld [vmem:[%s445 + $0x18] sm:$0xff]
          %v1812 = vld [vmem:[%s445 + $0x20] sm:$0xff]
          %v1813 = vld [vmem:[%s445 + $0x28] sm:$0xff]
          %v1814 = vld [vmem:[%s445 + $0x30] sm:$0xff]
          %v1815 = vld [vmem:[%s445 + $0x38] sm:$0xff]
          %v1816 = vld [vmem:[%s445 + $0x40] sm:$0xff]
          %v1817 = vld [vmem:[%s445 + $0x48] sm:$0xff]
          %v1818 = vld [vmem:[%s445 + $0x50] sm:$0xff]
          %v1819 = vld [vmem:[%s445 + $0x58] sm:$0xff]
          %v1820 = vld [vmem:[%s445 + $0x60] sm:$0xff]
          %v1821 = vld [vmem:[%s445 + $0x68] sm:$0xff]
          %v1822 = vld [vmem:[%s445 + $0x70] sm:$0xff]
          %v1823 = vld [vmem:[%s445 + $0x78] sm:$0xff]
          %v1824 = vld [vmem:[%s445 + $0x80] sm:$0xff]
          %v1825 = vld [vmem:[%s445 + $0x88] sm:$0xff]
          %v1826 = vld [vmem:[%s445 + $0x90] sm:$0xff]
          %v1827 = vld [vmem:[%s445 + $0x98] sm:$0xff]
          %v1828 = vld [vmem:[%s445 + $0xa0] sm:$0xff]
          %v1829 = vld [vmem:[%s445 + $0xa8] sm:$0xff]
          %v1830 = vld [vmem:[%s445 + $0xb0] sm:$0xff]
          %v1831 = vld [vmem:[%s445 + $0xb8] sm:$0xff]
          %v1832 = vld [vmem:[%s445 + $0xc0] sm:$0xff]
          %v1833 = vld [vmem:[%s445 + $0xc8] sm:$0xff]
          %v1834 = vld [vmem:[%s445 + $0xd0] sm:$0xff]
          %v1835 = vld [vmem:[%s445 + $0xd8] sm:$0xff]
          %v1836 = vld [vmem:[%s445 + $0xe0] sm:$0xff]
          %v1837 = vld [vmem:[%s445 + $0xe8] sm:$0xff]
          %v1838 = vld [vmem:[%s445 + $0xf0] sm:$0xff]
          %v1839 = vld [vmem:[%s445 + $0xf8] sm:$0xff]
          %v1840 = vld [vmem:[%s445 + $0x100] sm:$0xff]
          %v1841 = vld [vmem:[%s445 + $0x108] sm:$0xff]
          %v1842 = vld [vmem:[%s445 + $0x110] sm:$0xff]
          %v1843 = vld [vmem:[%s445 + $0x118] sm:$0xff]
          %v1844 = vld [vmem:[%s445 + $0x120] sm:$0xff]
          %v1845 = vld [vmem:[%s445 + $0x128] sm:$0xff]
          %v1846 = vld [vmem:[%s445 + $0x130] sm:$0xff]
          %v1847 = vld [vmem:[%s445 + $0x138] sm:$0xff]
          %v1848 = vld [vmem:[%s445 + $0x140] sm:$0xff]
          %v1849 = vld [vmem:[%s445 + $0x148] sm:$0xff]
          %v1850 = vld [vmem:[%s445 + $0x150] sm:$0xff]
          %v1851 = vld [vmem:[%s445 + $0x158] sm:$0xff]
          %v1852 = vld [vmem:[%s445 + $0x160] sm:$0xff]
          %v1853 = vld [vmem:[%s445 + $0x168] sm:$0xff]
          %v1854 = vld [vmem:[%s445 + $0x170] sm:$0xff]
          %v1855 = vld [vmem:[%s445 + $0x178] sm:$0xff]
          %v1856 = vld [vmem:[%s445 + $0x180] sm:$0xff]
          %v1857 = vld [vmem:[%s445 + $0x188] sm:$0xff]
          %v1858 = vld [vmem:[%s445 + $0x190] sm:$0xff]
          %v1859 = vld [vmem:[%s445 + $0x198] sm:$0xff]
          %v1860 = vld [vmem:[%s445 + $0x1a0] sm:$0xff]
          %v1861 = vld [vmem:[%s445 + $0x1a8] sm:$0xff]
          %v1862 = vld [vmem:[%s445 + $0x1b0] sm:$0xff]
          %v1863 = vld [vmem:[%s445 + $0x1b8] sm:$0xff]
          %v1864 = vld [vmem:[%s445 + $0x1c0] sm:$0xff]
          %v1865 = vld [vmem:[%s445 + $0x1c8] sm:$0xff]
          %v1866 = vld [vmem:[%s445 + $0x1d0] sm:$0xff]
          %v1867 = vld [vmem:[%s445 + $0x1d8] sm:$0xff]
          %v1868 = vld [vmem:[%s445 + $0x1e0] sm:$0xff]
          %v1869 = vld [vmem:[%s445 + $0x1e8] sm:$0xff]
          %v1870 = vld [vmem:[%s445 + $0x1f0] sm:$0xff]
          %v1871 = vld [vmem:[%s445 + $0x1f8] sm:$0xff]
          %v1872 = vld [vmem:[#allocation2] sm:$0xff]
          %v1873 = vld [vmem:[#allocation2 + $0x8] sm:$0xff]
          %v1874 = vld [vmem:[#allocation2 + $0x10] sm:$0xff]
          %v1875 = vld [vmem:[#allocation2 + $0x18] sm:$0xff]
          %v1876 = vld [vmem:[#allocation2 + $0x20] sm:$0xff]
          %v1877 = vld [vmem:[#allocation2 + $0x28] sm:$0xff]
          %v1878 = vld [vmem:[#allocation2 + $0x30] sm:$0xff]
          %v1879 = vld [vmem:[#allocation2 + $0x38] sm:$0xff]
          %v1880 = vld [vmem:[#allocation2 + $0x40] sm:$0xff]
          %v1881 = vld [vmem:[#allocation2 + $0x48] sm:$0xff]
          %v1882 = vld [vmem:[#allocation2 + $0x50] sm:$0xff]
          %v1883 = vld [vmem:[#allocation2 + $0x58] sm:$0xff]
          %v1884 = vld [vmem:[#allocation2 + $0x60] sm:$0xff]
          %v1885 = vld [vmem:[#allocation2 + $0x68] sm:$0xff]
          %v1886 = vld [vmem:[#allocation2 + $0x70] sm:$0xff]
          %v1887 = vld [vmem:[#allocation2 + $0x78] sm:$0xff]
          %v1888 = vld [vmem:[#allocation2 + $0x80] sm:$0xff]
          %v1889 = vld [vmem:[#allocation2 + $0x88] sm:$0xff]
          %v1890 = vld [vmem:[#allocation2 + $0x90] sm:$0xff]
          %v1891 = vld [vmem:[#allocation2 + $0x98] sm:$0xff]
          %v1892 = vld [vmem:[#allocation2 + $0xa0] sm:$0xff]
          %v1893 = vld [vmem:[#allocation2 + $0xa8] sm:$0xff]
          %v1894 = vld [vmem:[#allocation2 + $0xb0] sm:$0xff]
          %v1895 = vld [vmem:[#allocation2 + $0xb8] sm:$0xff]
          %v1896 = vld [vmem:[#allocation2 + $0xc0] sm:$0xff]
          %v1897 = vld [vmem:[#allocation2 + $0xc8] sm:$0xff]
          %v1898 = vld [vmem:[#allocation2 + $0xd0] sm:$0xff]
          %v1899 = vld [vmem:[#allocation2 + $0xd8] sm:$0xff]
          %v1900 = vld [vmem:[#allocation2 + $0xe0] sm:$0xff]
          %v1901 = vld [vmem:[#allocation2 + $0xe8] sm:$0xff]
          %v1902 = vld [vmem:[#allocation2 + $0xf0] sm:$0xff]
          %v1903 = vld [vmem:[#allocation2 + $0xf8] sm:$0xff]
          %v1968 = vunpack.c.l.b16 %v1808
          %v1969 = vunpack.c.h.b16 %v1808
          %v1970 = vunpack.c.l.b16 %v1809
          %v1971 = vunpack.c.h.b16 %v1809
          %v1972 = vunpack.c.l.b16 %v1810
          %v1973 = vunpack.c.h.b16 %v1810
          %v1974 = vunpack.c.l.b16 %v1811
          %v1975 = vunpack.c.h.b16 %v1811
          %v1976 = vunpack.c.l.b16 %v1812
          %v1977 = vunpack.c.h.b16 %v1812
          %v1978 = vunpack.c.l.b16 %v1813
          %v1979 = vunpack.c.h.b16 %v1813
          %v1980 = vunpack.c.l.b16 %v1814
          %v1981 = vunpack.c.h.b16 %v1814
          %v1982 = vunpack.c.l.b16 %v1815
          %v1983 = vunpack.c.h.b16 %v1815
          %v1984 = vunpack.c.l.b16 %v1816
          %v1985 = vunpack.c.h.b16 %v1816
          %v1986 = vunpack.c.l.b16 %v1817
          %v1987 = vunpack.c.h.b16 %v1817
          %v1988 = vunpack.c.l.b16 %v1818
          %v1989 = vunpack.c.h.b16 %v1818
          %v1990 = vunpack.c.l.b16 %v1819
          %v1991 = vunpack.c.h.b16 %v1819
          %v1992 = vunpack.c.l.b16 %v1820
          %v1993 = vunpack.c.h.b16 %v1820
          %v1994 = vunpack.c.l.b16 %v1821
          %v1995 = vunpack.c.h.b16 %v1821
          %v1996 = vunpack.c.l.b16 %v1822
          %v1997 = vunpack.c.h.b16 %v1822
          %v1998 = vunpack.c.l.b16 %v1823
          %v1999 = vunpack.c.h.b16 %v1823
          %v2000 = vunpack.c.l.b16 %v1824
          %v2001 = vunpack.c.h.b16 %v1824
          %v2002 = vunpack.c.l.b16 %v1825
          %v2003 = vunpack.c.h.b16 %v1825
          %v2004 = vunpack.c.l.b16 %v1826
          %v2005 = vunpack.c.h.b16 %v1826
          %v2006 = vunpack.c.l.b16 %v1827
          %v2007 = vunpack.c.h.b16 %v1827
          %v2008 = vunpack.c.l.b16 %v1828
          %v2009 = vunpack.c.h.b16 %v1828
          %v2010 = vunpack.c.l.b16 %v1829
          %v2011 = vunpack.c.h.b16 %v1829
          %v2012 = vunpack.c.l.b16 %v1830
          %v2013 = vunpack.c.h.b16 %v1830
          %v2014 = vunpack.c.l.b16 %v1831
          %v2015 = vunpack.c.h.b16 %v1831
          %v2016 = vunpack.c.l.b16 %v1832
          %v2017 = vunpack.c.h.b16 %v1832
          %v2018 = vunpack.c.l.b16 %v1833
          %v2019 = vunpack.c.h.b16 %v1833
          %v2020 = vunpack.c.l.b16 %v1834
          %v2021 = vunpack.c.h.b16 %v1834
          %v2022 = vunpack.c.l.b16 %v1835
          %v2023 = vunpack.c.h.b16 %v1835
          %v2024 = vunpack.c.l.b16 %v1836
          %v2025 = vunpack.c.h.b16 %v1836
          %v2026 = vunpack.c.l.b16 %v1837
          %v2027 = vunpack.c.h.b16 %v1837
          %v2028 = vunpack.c.l.b16 %v1838
          %v2029 = vunpack.c.h.b16 %v1838
          %v2030 = vunpack.c.l.b16 %v1839
          %v2031 = vunpack.c.h.b16 %v1839
          %v2032 = vunpack.c.l.b16 %v1840
          %v2033 = vunpack.c.h.b16 %v1840
          %v2034 = vunpack.c.l.b16 %v1841
          %v2035 = vunpack.c.h.b16 %v1841
          %v2036 = vunpack.c.l.b16 %v1842
          %v2037 = vunpack.c.h.b16 %v1842
          %v2038 = vunpack.c.l.b16 %v1843
          %v2039 = vunpack.c.h.b16 %v1843
          %v2040 = vunpack.c.l.b16 %v1844
          %v2041 = vunpack.c.h.b16 %v1844
          %v2042 = vunpack.c.l.b16 %v1845
          %v2043 = vunpack.c.h.b16 %v1845
          %v2044 = vunpack.c.l.b16 %v1846
          %v2045 = vunpack.c.h.b16 %v1846
          %v2046 = vunpack.c.l.b16 %v1847
          %v2047 = vunpack.c.h.b16 %v1847
          %v2048 = vunpack.c.l.b16 %v1848
          %v2049 = vunpack.c.h.b16 %v1848
          %v2050 = vunpack.c.l.b16 %v1849
          %v2051 = vunpack.c.h.b16 %v1849
          %v2052 = vunpack.c.l.b16 %v1850
          %v2053 = vunpack.c.h.b16 %v1850
          %v2054 = vunpack.c.l.b16 %v1851
          %v2055 = vunpack.c.h.b16 %v1851
          %v2056 = vunpack.c.l.b16 %v1852
          %v2057 = vunpack.c.h.b16 %v1852
          %v2058 = vunpack.c.l.b16 %v1853
          %v2059 = vunpack.c.h.b16 %v1853
          %v2060 = vunpack.c.l.b16 %v1854
          %v2061 = vunpack.c.h.b16 %v1854
          %v2062 = vunpack.c.l.b16 %v1855
          %v2063 = vunpack.c.h.b16 %v1855
          %v2064 = vunpack.c.l.b16 %v1856
          %v2065 = vunpack.c.h.b16 %v1856
          %v2066 = vunpack.c.l.b16 %v1857
          %v2067 = vunpack.c.h.b16 %v1857
          %v2068 = vunpack.c.l.b16 %v1858
          %v2069 = vunpack.c.h.b16 %v1858
          %v2070 = vunpack.c.l.b16 %v1859
          %v2071 = vunpack.c.h.b16 %v1859
          %v2072 = vunpack.c.l.b16 %v1860
          %v2073 = vunpack.c.h.b16 %v1860
          %v2074 = vunpack.c.l.b16 %v1861
          %v2075 = vunpack.c.h.b16 %v1861
          %v2076 = vunpack.c.l.b16 %v1862
          %v2077 = vunpack.c.h.b16 %v1862
          %v2078 = vunpack.c.l.b16 %v1863
          %v2079 = vunpack.c.h.b16 %v1863
          %v2080 = vunpack.c.l.b16 %v1864
          %v2081 = vunpack.c.h.b16 %v1864
          %v2082 = vunpack.c.l.b16 %v1865
          %v2083 = vunpack.c.h.b16 %v1865
          %v2084 = vunpack.c.l.b16 %v1866
          %v2085 = vunpack.c.h.b16 %v1866
          %v2086 = vunpack.c.l.b16 %v1867
          %v2087 = vunpack.c.h.b16 %v1867
          %v2088 = vunpack.c.l.b16 %v1868
          %v2089 = vunpack.c.h.b16 %v1868
          %v2090 = vunpack.c.l.b16 %v1869
          %v2091 = vunpack.c.h.b16 %v1869
          %v2092 = vunpack.c.l.b16 %v1870
          %v2093 = vunpack.c.h.b16 %v1870
          %v2094 = vunpack.c.l.b16 %v1871
          %v2095 = vunpack.c.h.b16 %v1871
          %v2096 = vpack.c.b16 %v1972, %v1968
          %v2097 = vpack.c.b16 %v1973, %v1969
          %v2098 = vpack.c.b16 %v1974, %v1970
          %v2099 = vpack.c.b16 %v1975, %v1971
          %v2100 = vpack.c.b16 %v1980, %v1976
          %v2101 = vpack.c.b16 %v1981, %v1977
          %v2102 = vpack.c.b16 %v1982, %v1978
          %v2103 = vpack.c.b16 %v1983, %v1979
          %v2104 = vpack.c.b16 %v1988, %v1984
          %v2105 = vpack.c.b16 %v1989, %v1985
          %v2106 = vpack.c.b16 %v1990, %v1986
          %v2107 = vpack.c.b16 %v1991, %v1987
          %v2108 = vpack.c.b16 %v1996, %v1992
          %v2109 = vpack.c.b16 %v1997, %v1993
          %v2110 = vpack.c.b16 %v1998, %v1994
          %v2111 = vpack.c.b16 %v1999, %v1995
          %v2112 = vpack.c.b16 %v2004, %v2000
          %v2113 = vpack.c.b16 %v2005, %v2001
          %v2114 = vpack.c.b16 %v2006, %v2002
          %v2115 = vpack.c.b16 %v2007, %v2003
          %v2116 = vpack.c.b16 %v2012, %v2008
          %v2117 = vpack.c.b16 %v2013, %v2009
          %v2118 = vpack.c.b16 %v2014, %v2010
          %v2119 = vpack.c.b16 %v2015, %v2011
          %v2120 = vpack.c.b16 %v2020, %v2016
          %v2121 = vpack.c.b16 %v2021, %v2017
          %v2122 = vpack.c.b16 %v2022, %v2018
          %v2123 = vpack.c.b16 %v2023, %v2019
          %v2124 = vpack.c.b16 %v2028, %v2024
          %v2125 = vpack.c.b16 %v2029, %v2025
          %v2126 = vpack.c.b16 %v2030, %v2026
          %v2127 = vpack.c.b16 %v2031, %v2027
          %v2128 = vpack.c.b16 %v2036, %v2032
          %v2129 = vpack.c.b16 %v2037, %v2033
          %v2130 = vpack.c.b16 %v2038, %v2034
          %v2131 = vpack.c.b16 %v2039, %v2035
          %v2132 = vpack.c.b16 %v2044, %v2040
          %v2133 = vpack.c.b16 %v2045, %v2041
          %v2134 = vpack.c.b16 %v2046, %v2042
          %v2135 = vpack.c.b16 %v2047, %v2043
          %v2136 = vpack.c.b16 %v2052, %v2048
          %v2137 = vpack.c.b16 %v2053, %v2049
          %v2138 = vpack.c.b16 %v2054, %v2050
          %v2139 = vpack.c.b16 %v2055, %v2051
          %v2140 = vpack.c.b16 %v2060, %v2056
          %v2141 = vpack.c.b16 %v2061, %v2057
          %v2142 = vpack.c.b16 %v2062, %v2058
          %v2143 = vpack.c.b16 %v2063, %v2059
          %v2144 = vpack.c.b16 %v2068, %v2064
          %v2145 = vpack.c.b16 %v2069, %v2065
          %v2146 = vpack.c.b16 %v2070, %v2066
          %v2147 = vpack.c.b16 %v2071, %v2067
          %v2148 = vpack.c.b16 %v2076, %v2072
          %v2149 = vpack.c.b16 %v2077, %v2073
          %v2150 = vpack.c.b16 %v2078, %v2074
          %v2151 = vpack.c.b16 %v2079, %v2075
          %v2152 = vpack.c.b16 %v2084, %v2080
          %v2153 = vpack.c.b16 %v2085, %v2081
          %v2154 = vpack.c.b16 %v2086, %v2082
          %v2155 = vpack.c.b16 %v2087, %v2083
          %v2156 = vpack.c.b16 %v2092, %v2088
          %v2157 = vpack.c.b16 %v2093, %v2089
          %v2158 = vpack.c.b16 %v2094, %v2090
          %v2159 = vpack.c.b16 %v2095, %v2091
          %2224 = vmatprep.subr.bf16.mxu0 0
          %2225 = vmatpush1.bf16.msra.mxu0 %v1872
          %2226 = vmatprep.subr.bf16.mxu0 0
          %2227 = vmatpush1.bf16.msra.mxu0 %v1873
          %2228 = vmatprep.subr.bf16.mxu0 0
          %2229 = vmatpush1.bf16.msra.mxu0 %v1874
          %2230 = vmatprep.subr.bf16.mxu0 0
          %2231 = vmatpush1.bf16.msra.mxu0 %v1875
          %2232 = vmatprep.subr.bf16.mxu0 0
          %2233 = vmatpush1.bf16.msra.mxu0 %v1876
          %2234 = vmatprep.subr.bf16.mxu0 0
          %2235 = vmatpush1.bf16.msra.mxu0 %v1877
          %2236 = vmatprep.subr.bf16.mxu0 0
          %2237 = vmatpush1.bf16.msra.mxu0 %v1878
          %2238 = vmatprep.subr.bf16.mxu0 0
          %2239 = vmatpush1.bf16.msra.mxu0 %v1879
          %2240 = vmatprep.subr.bf16.mxu0 0
          %2241 = vmatpush1.bf16.msra.mxu0 %v1880
          %2242 = vmatprep.subr.bf16.mxu0 0
          %2243 = vmatpush1.bf16.msra.mxu0 %v1881
          %2244 = vmatprep.subr.bf16.mxu0 0
          %2245 = vmatpush1.bf16.msra.mxu0 %v1882
          %2246 = vmatprep.subr.bf16.mxu0 0
          %2247 = vmatpush1.bf16.msra.mxu0 %v1883
          %2248 = vmatprep.subr.bf16.mxu0 0
          %2249 = vmatpush1.bf16.msra.mxu0 %v1884
          %2250 = vmatprep.subr.bf16.mxu0 0
          %2251 = vmatpush1.bf16.msra.mxu0 %v1885
          %2252 = vmatprep.subr.bf16.mxu0 0
          %2253 = vmatpush1.bf16.msra.mxu0 %v1886
          %2254 = vmatprep.subr.bf16.mxu0 0
          %2255 = vmatpush1.bf16.msra.mxu0 %v1887
          %2256 = vmatprep.mubr.bf16.mxu0 %v2097
          %2257 = vmatmul.mubr.bf16.gmra.mrb[0].mxu0 %v2096
          %v2258 = vpop.f32.mrb[0].mxu0
          %v2259 = vadd.f32 0.0, %v2258
          %v2260 = vpop.f32.mrb[0].mxu0
          %v2261 = vpop.f32.mrb[0].mxu0
          %v2262 = vadd.f32 0.0, %v2261
          %v2263 = vpop.f32.mrb[0].mxu0
          %2264 = vmatprep.mubr.bf16.mxu0 %v2101
          %2265 = vmatmul.mubr.bf16.gmra.mrb[0].mxu0 %v2100
          %v2266 = vpop.f32.mrb[0].mxu0
          %v2267 = vadd.f32 0.0, %v2266
          %v2268 = vpop.f32.mrb[0].mxu0
          %v2269 = vpop.f32.mrb[0].mxu0
          %v2270 = vadd.f32 0.0, %v2269
          %v2271 = vpop.f32.mrb[0].mxu0
          %2272 = vmatprep.mubr.bf16.mxu0 %v2105
          %2273 = vmatmul.mubr.bf16.gmra.mrb[0].mxu0 %v2104
          %v2274 = vpop.f32.mrb[0].mxu0
          %v2275 = vadd.f32 0.0, %v2274
          %v2276 = vpop.f32.mrb[0].mxu0
          %v2277 = vpop.f32.mrb[0].mxu0
          %v2278 = vadd.f32 0.0, %v2277
          %v2279 = vpop.f32.mrb[0].mxu0
          %2280 = vmatprep.mubr.bf16.mxu0 %v2109
          %2281 = vmatmul.mubr.bf16.gmra.mrb[0].mxu0 %v2108
          %v2282 = vpop.f32.mrb[0].mxu0
          %v2283 = vadd.f32 0.0, %v2282
          %v2284 = vpop.f32.mrb[0].mxu0
          %v2285 = vpop.f32.mrb[0].mxu0
          %v2286 = vadd.f32 0.0, %v2285
          %v2287 = vpop.f32.mrb[0].mxu0
          %2288 = vmatprep.mubr.bf16.mxu0 %v2113
          %2289 = vmatmul.mubr.bf16.gmra.mrb[0].mxu0 %v2112
          %v2290 = vpop.f32.mrb[0].mxu0
          %v2291 = vadd.f32 0.0, %v2290
          %v2292 = vpop.f32.mrb[0].mxu0
          %v2293 = vpop.f32.mrb[0].mxu0
          %v2294 = vadd.f32 0.0, %v2293
          %v2295 = vpop.f32.mrb[0].mxu0
          %2296 = vmatprep.mubr.bf16.mxu0 %v2117
          %2297 = vmatmul.mubr.bf16.gmra.mrb[0].mxu0 %v2116
          %v2298 = vpop.f32.mrb[0].mxu0
          %v2299 = vadd.f32 0.0, %v2298
          %v2300 = vpop.f32.mrb[0].mxu0
          %v2301 = vpop.f32.mrb[0].mxu0
          %v2302 = vadd.f32 0.0, %v2301
          %v2303 = vpop.f32.mrb[0].mxu0
          %2304 = vmatprep.mubr.bf16.mxu0 %v2121
          %2305 = vmatmul.mubr.bf16.gmra.mrb[0].mxu0 %v2120
          %v2306 = vpop.f32.mrb[0].mxu0
          %v2307 = vadd.f32 0.0, %v2306
          %v2308 = vpop.f32.mrb[0].mxu0
          %v2309 = vpop.f32.mrb[0].mxu0
          %v2310 = vadd.f32 0.0, %v2309
          %v2311 = vpop.f32.mrb[0].mxu0
          %2312 = vmatprep.mubr.bf16.mxu0 %v2125
          %2313 = vmatmul.mubr.bf16.gmra.mrb[0].mxu0 %v2124
          %v2314 = vpop.f32.mrb[0].mxu0
          %v2315 = vadd.f32 0.0, %v2314
          %v2316 = vpop.f32.mrb[0].mxu0
          %v2317 = vpop.f32.mrb[0].mxu0
          %v2318 = vadd.f32 0.0, %v2317
          %v2319 = vpop.f32.mrb[0].mxu0
          %2320 = vmatprep.mubr.bf16.mxu0 %v2129
          %2321 = vmatmul.mubr.bf16.gmra.mrb[0].mxu0 %v2128
          %v2322 = vpop.f32.mrb[0].mxu0
          %v2323 = vadd.f32 0.0, %v2322
          %v2324 = vpop.f32.mrb[0].mxu0
          %v2325 = vpop.f32.mrb[0].mxu0
          %v2326 = vadd.f32 0.0, %v2325
          %v2327 = vpop.f32.mrb[0].mxu0
          %2328 = vmatprep.mubr.bf16.mxu0 %v2133
          %2329 = vmatmul.mubr.bf16.gmra.mrb[0].mxu0 %v2132
          %v2330 = vpop.f32.mrb[0].mxu0
          %v2331 = vadd.f32 0.0, %v2330
          %v2332 = vpop.f32.mrb[0].mxu0
          %v2333 = vpop.f32.mrb[0].mxu0
          %v2334 = vadd.f32 0.0, %v2333
          %v2335 = vpop.f32.mrb[0].mxu0
          %2336 = vmatprep.mubr.bf16.mxu0 %v2137
          %2337 = vmatmul.mubr.bf16.gmra.mrb[0].mxu0 %v2136
          %v2338 = vpop.f32.mrb[0].mxu0
          %v2339 = vadd.f32 0.0, %v2338
          %v2340 = vpop.f32.mrb[0].mxu0
          %v2341 = vpop.f32.mrb[0].mxu0
          %v2342 = vadd.f32 0.0, %v2341
          %v2343 = vpop.f32.mrb[0].mxu0
          %2344 = vmatprep.mubr.bf16.mxu0 %v2141
          %2345 = vmatmul.mubr.bf16.gmra.mrb[0].mxu0 %v2140
          %v2346 = vpop.f32.mrb[0].mxu0
          %v2347 = vadd.f32 0.0, %v2346
          %v2348 = vpop.f32.mrb[0].mxu0
          %v2349 = vpop.f32.mrb[0].mxu0
          %v2350 = vadd.f32 0.0, %v2349
          %v2351 = vpop.f32.mrb[0].mxu0
          %2352 = vmatprep.mubr.bf16.mxu0 %v2145
          %2353 = vmatmul.mubr.bf16.gmra.mrb[0].mxu0 %v2144
          %v2354 = vpop.f32.mrb[0].mxu0
          %v2355 = vadd.f32 0.0, %v2354
          %v2356 = vpop.f32.mrb[0].mxu0
          %v2357 = vpop.f32.mrb[0].mxu0
          %v2358 = vadd.f32 0.0, %v2357
          %v2359 = vpop.f32.mrb[0].mxu0
          %2360 = vmatprep.mubr.bf16.mxu0 %v2149
          %2361 = vmatmul.mubr.bf16.gmra.mrb[0].mxu0 %v2148
          %v2362 = vpop.f32.mrb[0].mxu0
          %v2363 = vadd.f32 0.0, %v2362
          %v2364 = vpop.f32.mrb[0].mxu0
          %v2365 = vpop.f32.mrb[0].mxu0
          %v2366 = vadd.f32 0.0, %v2365
          %v2367 = vpop.f32.mrb[0].mxu0
          %2368 = vmatprep.mubr.bf16.mxu0 %v2153
          %2369 = vmatmul.mubr.bf16.gmra.mrb[0].mxu0 %v2152
          %v2370 = vpop.f32.mrb[0].mxu0
          %v2371 = vadd.f32 0.0, %v2370
          %v2372 = vpop.f32.mrb[0].mxu0
          %v2373 = vpop.f32.mrb[0].mxu0
          %v2374 = vadd.f32 0.0, %v2373
          %v2375 = vpop.f32.mrb[0].mxu0
          %2376 = vmatprep.mubr.bf16.mxu0 %v2157
          %2377 = vmatmul.mubr.bf16.gmra.mrb[0].mxu0 %v2156
          %v2378 = vpop.f32.mrb[0].mxu0
          %v2379 = vadd.f32 0.0, %v2378
          %v2380 = vpop.f32.mrb[0].mxu0
          %v2381 = vpop.f32.mrb[0].mxu0
          %v2382 = vadd.f32 0.0, %v2381
          %v2383 = vpop.f32.mrb[0].mxu0
          %2384 = vdwg.mxu0
          %2385 = vmatprep.subr.bf16.mxu0 0
          %2386 = vmatpush1.bf16.msra.mxu0 %v1888
          %2387 = vmatprep.subr.bf16.mxu0 0
          %2388 = vmatpush1.bf16.msra.mxu0 %v1889
          %2389 = vmatprep.subr.bf16.mxu0 0
          %2390 = vmatpush1.bf16.msra.mxu0 %v1890
          %2391 = vmatprep.subr.bf16.mxu0 0
          %2392 = vmatpush1.bf16.msra.mxu0 %v1891
          %2393 = vmatprep.subr.bf16.mxu0 0
          %2394 = vmatpush1.bf16.msra.mxu0 %v1892
          %2395 = vmatprep.subr.bf16.mxu0 0
          %2396 = vmatpush1.bf16.msra.mxu0 %v1893
          %2397 = vmatprep.subr.bf16.mxu0 0
          %2398 = vmatpush1.bf16.msra.mxu0 %v1894
          %2399 = vmatprep.subr.bf16.mxu0 0
          %2400 = vmatpush1.bf16.msra.mxu0 %v1895
          %2401 = vmatprep.subr.bf16.mxu0 0
          %2402 = vmatpush1.bf16.msra.mxu0 %v1896
          %2403 = vmatprep.subr.bf16.mxu0 0
          %2404 = vmatpush1.bf16.msra.mxu0 %v1897
          %2405 = vmatprep.subr.bf16.mxu0 0
          %2406 = vmatpush1.bf16.msra.mxu0 %v1898
          %2407 = vmatprep.subr.bf16.mxu0 0
          %2408 = vmatpush1.bf16.msra.mxu0 %v1899
          %2409 = vmatprep.subr.bf16.mxu0 0
          %2410 = vmatpush1.bf16.msra.mxu0 %v1900
          %2411 = vmatprep.subr.bf16.mxu0 0
          %2412 = vmatpush1.bf16.msra.mxu0 %v1901
          %2413 = vmatprep.subr.bf16.mxu0 0
          %2414 = vmatpush1.bf16.msra.mxu0 %v1902
          %2415 = vmatprep.subr.bf16.mxu0 0
          %2416 = vmatpush1.bf16.msra.mxu0 %v1903
          %2417 = vmatprep.mubr.bf16.mxu0 %v2099
          %2418 = vmatmul.mubr.bf16.gmra.mrb[0].mxu0 %v2098
          %v2419 = vpop.f32.mrb[0].mxu0
          %v2420 = vadd.f32 %v2259, %v2419
          %v2421 = vpop.f32.mrb[0].mxu0
          %v2422 = vpop.f32.mrb[0].mxu0
          %v2423 = vadd.f32 %v2262, %v2422
          %v2424 = vpop.f32.mrb[0].mxu0
          %2425 = vmatprep.mubr.bf16.mxu0 %v2103
          %2426 = vmatmul.mubr.bf16.gmra.mrb[0].mxu0 %v2102
          %v2427 = vpop.f32.mrb[0].mxu0
          %v2428 = vadd.f32 %v2267, %v2427
          %v2429 = vpop.f32.mrb[0].mxu0
          %v2430 = vpop.f32.mrb[0].mxu0
          %v2431 = vadd.f32 %v2270, %v2430
          %v2432 = vpop.f32.mrb[0].mxu0
          %2433 = vmatprep.mubr.bf16.mxu0 %v2107
          %2434 = vmatmul.mubr.bf16.gmra.mrb[0].mxu0 %v2106
          %v2435 = vpop.f32.mrb[0].mxu0
          %v2436 = vadd.f32 %v2275, %v2435
          %v2437 = vpop.f32.mrb[0].mxu0
          %v2438 = vpop.f32.mrb[0].mxu0
          %v2439 = vadd.f32 %v2278, %v2438
          %v2440 = vpop.f32.mrb[0].mxu0
          %2441 = vmatprep.mubr.bf16.mxu0 %v2111
          %2442 = vmatmul.mubr.bf16.gmra.mrb[0].mxu0 %v2110
          %v2443 = vpop.f32.mrb[0].mxu0
          %v2444 = vadd.f32 %v2283, %v2443
          %v2445 = vpop.f32.mrb[0].mxu0
          %v2446 = vpop.f32.mrb[0].mxu0
          %v2447 = vadd.f32 %v2286, %v2446
          %v2448 = vpop.f32.mrb[0].mxu0
          %2449 = vmatprep.mubr.bf16.mxu0 %v2115
          %2450 = vmatmul.mubr.bf16.gmra.mrb[0].mxu0 %v2114
          %v2451 = vpop.f32.mrb[0].mxu0
          %v2452 = vadd.f32 %v2291, %v2451
          %v2453 = vpop.f32.mrb[0].mxu0
          %v2454 = vpop.f32.mrb[0].mxu0
          %v2455 = vadd.f32 %v2294, %v2454
          %v2456 = vpop.f32.mrb[0].mxu0
          %2457 = vmatprep.mubr.bf16.mxu0 %v2119
          %2458 = vmatmul.mubr.bf16.gmra.mrb[0].mxu0 %v2118
          %v2459 = vpop.f32.mrb[0].mxu0
          %v2460 = vadd.f32 %v2299, %v2459
          %v2461 = vpop.f32.mrb[0].mxu0
          %v2462 = vpop.f32.mrb[0].mxu0
          %v2463 = vadd.f32 %v2302, %v2462
          %v2464 = vpop.f32.mrb[0].mxu0
          %2465 = vmatprep.mubr.bf16.mxu0 %v2123
          %2466 = vmatmul.mubr.bf16.gmra.mrb[0].mxu0 %v2122
          %v2467 = vpop.f32.mrb[0].mxu0
          %v2468 = vadd.f32 %v2307, %v2467
          %v2469 = vpop.f32.mrb[0].mxu0
          %v2470 = vpop.f32.mrb[0].mxu0
          %v2471 = vadd.f32 %v2310, %v2470
          %v2472 = vpop.f32.mrb[0].mxu0
          %2473 = vmatprep.mubr.bf16.mxu0 %v2127
          %2474 = vmatmul.mubr.bf16.gmra.mrb[0].mxu0 %v2126
          %v2475 = vpop.f32.mrb[0].mxu0
          %v2476 = vadd.f32 %v2315, %v2475
          %v2477 = vpop.f32.mrb[0].mxu0
          %v2478 = vpop.f32.mrb[0].mxu0
          %v2479 = vadd.f32 %v2318, %v2478
          %v2480 = vpop.f32.mrb[0].mxu0
          %2481 = vmatprep.mubr.bf16.mxu0 %v2131
          %2482 = vmatmul.mubr.bf16.gmra.mrb[0].mxu0 %v2130
          %v2483 = vpop.f32.mrb[0].mxu0
          %v2484 = vadd.f32 %v2323, %v2483
          %v2485 = vpop.f32.mrb[0].mxu0
          %v2486 = vpop.f32.mrb[0].mxu0
          %v2487 = vadd.f32 %v2326, %v2486
          %v2488 = vpop.f32.mrb[0].mxu0
          %2489 = vmatprep.mubr.bf16.mxu0 %v2135
          %2490 = vmatmul.mubr.bf16.gmra.mrb[0].mxu0 %v2134
          %v2491 = vpop.f32.mrb[0].mxu0
          %v2492 = vadd.f32 %v2331, %v2491
          %v2493 = vpop.f32.mrb[0].mxu0
          %v2494 = vpop.f32.mrb[0].mxu0
          %v2495 = vadd.f32 %v2334, %v2494
          %v2496 = vpop.f32.mrb[0].mxu0
          %2497 = vmatprep.mubr.bf16.mxu0 %v2139
          %2498 = vmatmul.mubr.bf16.gmra.mrb[0].mxu0 %v2138
          %v2499 = vpop.f32.mrb[0].mxu0
          %v2500 = vadd.f32 %v2339, %v2499
          %v2501 = vpop.f32.mrb[0].mxu0
          %v2502 = vpop.f32.mrb[0].mxu0
          %v2503 = vadd.f32 %v2342, %v2502
          %v2504 = vpop.f32.mrb[0].mxu0
          %2505 = vmatprep.mubr.bf16.mxu0 %v2143
          %2506 = vmatmul.mubr.bf16.gmra.mrb[0].mxu0 %v2142
          %v2507 = vpop.f32.mrb[0].mxu0
          %v2508 = vadd.f32 %v2347, %v2507
          %v2509 = vpop.f32.mrb[0].mxu0
          %v2510 = vpop.f32.mrb[0].mxu0
          %v2511 = vadd.f32 %v2350, %v2510
          %v2512 = vpop.f32.mrb[0].mxu0
          %2513 = vmatprep.mubr.bf16.mxu0 %v2147
          %2514 = vmatmul.mubr.bf16.gmra.mrb[0].mxu0 %v2146
          %v2515 = vpop.f32.mrb[0].mxu0
          %v2516 = vadd.f32 %v2355, %v2515
          %v2517 = vpop.f32.mrb[0].mxu0
          %v2518 = vpop.f32.mrb[0].mxu0
          %v2519 = vadd.f32 %v2358, %v2518
          %v2520 = vpop.f32.mrb[0].mxu0
          %2521 = vmatprep.mubr.bf16.mxu0 %v2151
          %2522 = vmatmul.mubr.bf16.gmra.mrb[0].mxu0 %v2150
          %v2523 = vpop.f32.mrb[0].mxu0
          %v2524 = vadd.f32 %v2363, %v2523
          %v2525 = vpop.f32.mrb[0].mxu0
          %v2526 = vpop.f32.mrb[0].mxu0
          %v2527 = vadd.f32 %v2366, %v2526
          %v2528 = vpop.f32.mrb[0].mxu0
          %2529 = vmatprep.mubr.bf16.mxu0 %v2155
          %2530 = vmatmul.mubr.bf16.gmra.mrb[0].mxu0 %v2154
          %v2531 = vpop.f32.mrb[0].mxu0
          %v2532 = vadd.f32 %v2371, %v2531
          %v2533 = vpop.f32.mrb[0].mxu0
          %v2534 = vpop.f32.mrb[0].mxu0
          %v2535 = vadd.f32 %v2374, %v2534
          %v2536 = vpop.f32.mrb[0].mxu0
          %2537 = vmatprep.mubr.bf16.mxu0 %v2159
          %2538 = vmatmul.mubr.bf16.gmra.mrb[0].mxu0 %v2158
          %v2539 = vpop.f32.mrb[0].mxu0
          %v2540 = vadd.f32 %v2379, %v2539
          %v2541 = vpop.f32.mrb[0].mxu0
          %v2542 = vpop.f32.mrb[0].mxu0
          %v2543 = vadd.f32 %v2382, %v2542
          %v2544 = vpop.f32.mrb[0].mxu0
          %2545 = vdwg.mxu0
          %v2546 = vpack.c.bf16 %v2423, %v2420
          %v2547 = vpack.c.bf16 %v2431, %v2428
          %v2548 = vpack.c.bf16 %v2439, %v2436
          %v2549 = vpack.c.bf16 %v2447, %v2444
          %v2550 = vpack.c.bf16 %v2455, %v2452
          %v2551 = vpack.c.bf16 %v2463, %v2460
          %v2552 = vpack.c.bf16 %v2471, %v2468
          %v2553 = vpack.c.bf16 %v2479, %v2476
          %v2554 = vpack.c.bf16 %v2487, %v2484
          %v2555 = vpack.c.bf16 %v2495, %v2492
          %v2556 = vpack.c.bf16 %v2503, %v2500
          %v2557 = vpack.c.bf16 %v2511, %v2508
          %v2558 = vpack.c.bf16 %v2519, %v2516
          %v2559 = vpack.c.bf16 %v2527, %v2524
          %v2560 = vpack.c.bf16 %v2535, %v2532
          %v2561 = vpack.c.bf16 %v2543, %v2540
          %v2562 = vld [vmem:[#allocation10] sm:$0xf]
          %v2563 = vld [vmem:[#allocation10 + $0x4] sm:$0xf]
          %v2564 = vld [vmem:[#allocation10 + $0x8] sm:$0xf]
          %v2565 = vld [vmem:[#allocation10 + $0xc] sm:$0xf]
          %v2566 = vld [vmem:[#allocation10 + $0x10] sm:$0xf]
          %v2567 = vld [vmem:[#allocation10 + $0x14] sm:$0xf]
          %v2568 = vld [vmem:[#allocation10 + $0x18] sm:$0xf]
          %v2569 = vld [vmem:[#allocation10 + $0x1c] sm:$0xf]
          %v2570 = vld [vmem:[#allocation10 + $0x20] sm:$0xf]
          %v2571 = vld [vmem:[#allocation10 + $0x24] sm:$0xf]
          %v2572 = vld [vmem:[#allocation10 + $0x28] sm:$0xf]
          %v2573 = vld [vmem:[#allocation10 + $0x2c] sm:$0xf]
          %v2574 = vld [vmem:[#allocation10 + $0x30] sm:$0xf]
          %v2575 = vld [vmem:[#allocation10 + $0x34] sm:$0xf]
          %v2576 = vld [vmem:[#allocation10 + $0x38] sm:$0xf]
          %v2577 = vld [vmem:[#allocation10 + $0x3c] sm:$0xf]
          %v2579 = vlaneseq
          %v2580 = vshrl.u32 %v2579, 7
          %v2581 = vsub.s32 0, %v2580
          %v2582 = vrot.slane %v1807, %v2581
          %v2600 = vunpack.c.l.b16 %v2562
          %v2601 = vunpack.c.l.b16 %v2563
          %v2602 = vunpack.c.l.b16 %v2564
          %v2603 = vunpack.c.l.b16 %v2565
          %v2604 = vunpack.c.l.b16 %v2566
          %v2605 = vunpack.c.l.b16 %v2567
          %v2606 = vunpack.c.l.b16 %v2568
          %v2607 = vunpack.c.l.b16 %v2569
          %v2608 = vunpack.c.l.b16 %v2570
          %v2609 = vunpack.c.l.b16 %v2571
          %v2610 = vunpack.c.l.b16 %v2572
          %v2611 = vunpack.c.l.b16 %v2573
          %v2612 = vunpack.c.l.b16 %v2574
          %v2613 = vunpack.c.l.b16 %v2575
          %v2614 = vunpack.c.l.b16 %v2576
          %v2615 = vunpack.c.l.b16 %v2577
          %v2616 = vpack.c.b16 %v2601, %v2600
          %v2617 = vpack.c.b16 %v2603, %v2602
          %v2618 = vpack.c.b16 %v2605, %v2604
          %v2619 = vpack.c.b16 %v2607, %v2606
          %v2620 = vpack.c.b16 %v2609, %v2608
          %v2621 = vpack.c.b16 %v2611, %v2610
          %v2622 = vpack.c.b16 %v2613, %v2612
          %v2623 = vpack.c.b16 %v2615, %v2614
          %2632 = vmatprep.subr.bf16.mxu0 0
          %2633 = vmatpush1.bf16.msra.mxu0 %v2616
          %2634 = vmatprep.subr.bf16.mxu0 0
          %2635 = vmatpush1.bf16.msra.mxu0 %v2617
          %2636 = vmatprep.subr.bf16.mxu0 0
          %2637 = vmatpush1.bf16.msra.mxu0 %v2618
          %2638 = vmatprep.subr.bf16.mxu0 0
          %2639 = vmatpush1.bf16.msra.mxu0 %v2619
          %2640 = vmatprep.subr.bf16.mxu0 0
          %2641 = vmatpush1.bf16.msra.mxu0 %v2620
          %2642 = vmatprep.subr.bf16.mxu0 0
          %2643 = vmatpush1.bf16.msra.mxu0 %v2621
          %2644 = vmatprep.subr.bf16.mxu0 0
          %2645 = vmatpush1.bf16.msra.mxu0 %v2622
          %2646 = vmatprep.subr.bf16.mxu0 0
          %2647 = vmatpush1.bf16.msra.mxu0 %v2623
          %2648 = vmatprep.subr.bf16.mxu0 0
          %2649 = vmatpush1.bf16.msra.mxu0 0
          %2650 = vmatprep.subr.bf16.mxu0 0
          %2651 = vmatpush1.bf16.msra.mxu0 0
          %2652 = vmatprep.subr.bf16.mxu0 0
          %2653 = vmatpush1.bf16.msra.mxu0 0
          %2654 = vmatprep.subr.bf16.mxu0 0
          %2655 = vmatpush1.bf16.msra.mxu0 0
          %2656 = vmatprep.subr.bf16.mxu0 0
          %2657 = vmatpush1.bf16.msra.mxu0 0
          %2658 = vmatprep.subr.bf16.mxu0 0
          %2659 = vmatpush1.bf16.msra.mxu0 0
          %2660 = vmatprep.subr.bf16.mxu0 0
          %2661 = vmatpush1.bf16.msra.mxu0 0
          %2662 = vmatprep.subr.bf16.mxu0 0
          %2663 = vmatpush1.bf16.msra.mxu0 0
          %2664 = vmatprep.mubr.bf16.mxu0 0
          %2665 = vmatmul.mubr.bf16.gmra.mrb[0].mxu0 %v2546
          %v2666 = vpop.f32.mrb[0].mxu0
          %v2667 = vadd.f32 %v2582, %v2666
          %v2668 = vpop.f32.mrb[0].mxu0
          %v2669 = vpop.f32.mrb[0].mxu0
          %v2670 = vadd.f32 %v2582, %v2669
          %v2671 = vpop.f32.mrb[0].mxu0
          %2672 = vmatprep.mubr.bf16.mxu0 0
          %2673 = vmatmul.mubr.bf16.gmra.mrb[0].mxu0 %v2547
          %v2674 = vpop.f32.mrb[0].mxu0
          %v2675 = vadd.f32 %v2582, %v2674
          %v2676 = vpop.f32.mrb[0].mxu0
          %v2677 = vpop.f32.mrb[0].mxu0
          %v2678 = vadd.f32 %v2582, %v2677
          %v2679 = vpop.f32.mrb[0].mxu0
          %2680 = vmatprep.mubr.bf16.mxu0 0
          %2681 = vmatmul.mubr.bf16.gmra.mrb[0].mxu0 %v2548
          %v2682 = vpop.f32.mrb[0].mxu0
          %v2683 = vadd.f32 %v2582, %v2682
          %v2684 = vpop.f32.mrb[0].mxu0
          %v2685 = vpop.f32.mrb[0].mxu0
          %v2686 = vadd.f32 %v2582, %v2685
          %v2687 = vpop.f32.mrb[0].mxu0
          %2688 = vmatprep.mubr.bf16.mxu0 0
          %2689 = vmatmul.mubr.bf16.gmra.mrb[0].mxu0 %v2549
          %v2690 = vpop.f32.mrb[0].mxu0
          %v2691 = vadd.f32 %v2582, %v2690
          %v2692 = vpop.f32.mrb[0].mxu0
          %v2693 = vpop.f32.mrb[0].mxu0
          %v2694 = vadd.f32 %v2582, %v2693
          %v2695 = vpop.f32.mrb[0].mxu0
          %2696 = vmatprep.mubr.bf16.mxu0 0
          %2697 = vmatmul.mubr.bf16.gmra.mrb[0].mxu0 %v2550
          %v2698 = vpop.f32.mrb[0].mxu0
          %v2699 = vadd.f32 %v2582, %v2698
          %v2700 = vpop.f32.mrb[0].mxu0
          %v2701 = vpop.f32.mrb[0].mxu0
          %v2702 = vadd.f32 %v2582, %v2701
          %v2703 = vpop.f32.mrb[0].mxu0
          %2704 = vmatprep.mubr.bf16.mxu0 0
          %2705 = vmatmul.mubr.bf16.gmra.mrb[0].mxu0 %v2551
          %v2706 = vpop.f32.mrb[0].mxu0
          %v2707 = vadd.f32 %v2582, %v2706
          %v2708 = vpop.f32.mrb[0].mxu0
          %v2709 = vpop.f32.mrb[0].mxu0
          %v2710 = vadd.f32 %v2582, %v2709
          %v2711 = vpop.f32.mrb[0].mxu0
          %2712 = vmatprep.mubr.bf16.mxu0 0
          %2713 = vmatmul.mubr.bf16.gmra.mrb[0].mxu0 %v2552
          %v2714 = vpop.f32.mrb[0].mxu0
          %v2715 = vadd.f32 %v2582, %v2714
          %v2716 = vpop.f32.mrb[0].mxu0
          %v2717 = vpop.f32.mrb[0].mxu0
          %v2718 = vadd.f32 %v2582, %v2717
          %v2719 = vpop.f32.mrb[0].mxu0
          %2720 = vmatprep.mubr.bf16.mxu0 0
          %2721 = vmatmul.mubr.bf16.gmra.mrb[0].mxu0 %v2553
          %v2722 = vpop.f32.mrb[0].mxu0
          %v2723 = vadd.f32 %v2582, %v2722
          %v2724 = vpop.f32.mrb[0].mxu0
          %v2725 = vpop.f32.mrb[0].mxu0
          %v2726 = vadd.f32 %v2582, %v2725
          %v2727 = vpop.f32.mrb[0].mxu0
          %2728 = vmatprep.mubr.bf16.mxu0 0
          %2729 = vmatmul.mubr.bf16.gmra.mrb[0].mxu0 %v2554
          %v2730 = vpop.f32.mrb[0].mxu0
          %v2731 = vadd.f32 %v2582, %v2730
          %v2732 = vpop.f32.mrb[0].mxu0
          %v2733 = vpop.f32.mrb[0].mxu0
          %v2734 = vadd.f32 %v2582, %v2733
          %v2735 = vpop.f32.mrb[0].mxu0
          %2736 = vmatprep.mubr.bf16.mxu0 0
          %2737 = vmatmul.mubr.bf16.gmra.mrb[0].mxu0 %v2555
          %v2738 = vpop.f32.mrb[0].mxu0
          %v2739 = vadd.f32 %v2582, %v2738
          %v2740 = vpop.f32.mrb[0].mxu0
          %v2741 = vpop.f32.mrb[0].mxu0
          %v2742 = vadd.f32 %v2582, %v2741
          %v2743 = vpop.f32.mrb[0].mxu0
          %2744 = vmatprep.mubr.bf16.mxu0 0
          %2745 = vmatmul.mubr.bf16.gmra.mrb[0].mxu0 %v2556
          %v2746 = vpop.f32.mrb[0].mxu0
          %v2747 = vadd.f32 %v2582, %v2746
          %v2748 = vpop.f32.mrb[0].mxu0
          %v2749 = vpop.f32.mrb[0].mxu0
          %v2750 = vadd.f32 %v2582, %v2749
          %v2751 = vpop.f32.mrb[0].mxu0
          %2752 = vmatprep.mubr.bf16.mxu0 0
          %2753 = vmatmul.mubr.bf16.gmra.mrb[0].mxu0 %v2557
          %v2754 = vpop.f32.mrb[0].mxu0
          %v2755 = vadd.f32 %v2582, %v2754
          %v2756 = vpop.f32.mrb[0].mxu0
          %v2757 = vpop.f32.mrb[0].mxu0
          %v2758 = vadd.f32 %v2582, %v2757
          %v2759 = vpop.f32.mrb[0].mxu0
          %2760 = vmatprep.mubr.bf16.mxu0 0
          %2761 = vmatmul.mubr.bf16.gmra.mrb[0].mxu0 %v2558
          %v2762 = vpop.f32.mrb[0].mxu0
          %v2763 = vadd.f32 %v2582, %v2762
          %v2764 = vpop.f32.mrb[0].mxu0
          %v2765 = vpop.f32.mrb[0].mxu0
          %v2766 = vadd.f32 %v2582, %v2765
          %v2767 = vpop.f32.mrb[0].mxu0
          %2768 = vmatprep.mubr.bf16.mxu0 0
          %2769 = vmatmul.mubr.bf16.gmra.mrb[0].mxu0 %v2559
          %v2770 = vpop.f32.mrb[0].mxu0
          %v2771 = vadd.f32 %v2582, %v2770
          %v2772 = vpop.f32.mrb[0].mxu0
          %v2773 = vpop.f32.mrb[0].mxu0
          %v2774 = vadd.f32 %v2582, %v2773
          %v2775 = vpop.f32.mrb[0].mxu0
          %2776 = vmatprep.mubr.bf16.mxu0 0
          %2777 = vmatmul.mubr.bf16.gmra.mrb[0].mxu0 %v2560
          %v2778 = vpop.f32.mrb[0].mxu0
          %v2779 = vadd.f32 %v2582, %v2778
          %v2780 = vpop.f32.mrb[0].mxu0
          %v2781 = vpop.f32.mrb[0].mxu0
          %v2782 = vadd.f32 %v2582, %v2781
          %v2783 = vpop.f32.mrb[0].mxu0
          %2784 = vmatprep.mubr.bf16.mxu0 0
          %2785 = vmatmul.mubr.bf16.gmra.mrb[0].mxu0 %v2561
          %v2786 = vpop.f32.mrb[0].mxu0
          %v2787 = vadd.f32 %v2582, %v2786
          %v2788 = vpop.f32.mrb[0].mxu0
          %v2789 = vpop.f32.mrb[0].mxu0
          %v2790 = vadd.f32 %v2582, %v2789
          %v2791 = vpop.f32.mrb[0].mxu0
          %2792 = vdwg.mxu0
          %v2793 = vmax.f32 %v2667, 0.0
          %v2794 = vmax.f32 %v2670, 0.0
          %v2795 = vmax.f32 %v2675, 0.0
          %v2796 = vmax.f32 %v2678, 0.0
          %v2797 = vmax.f32 %v2683, 0.0
          %v2798 = vmax.f32 %v2686, 0.0
          %v2799 = vmax.f32 %v2691, 0.0
          %v2800 = vmax.f32 %v2694, 0.0
          %v2801 = vmax.f32 %v2699, 0.0
          %v2802 = vmax.f32 %v2702, 0.0
          %v2803 = vmax.f32 %v2707, 0.0
          %v2804 = vmax.f32 %v2710, 0.0
          %v2805 = vmax.f32 %v2715, 0.0
          %v2806 = vmax.f32 %v2718, 0.0
          %v2807 = vmax.f32 %v2723, 0.0
          %v2808 = vmax.f32 %v2726, 0.0
          %v2809 = vmax.f32 %v2731, 0.0
          %v2810 = vmax.f32 %v2734, 0.0
          %v2811 = vmax.f32 %v2739, 0.0
          %v2812 = vmax.f32 %v2742, 0.0
          %v2813 = vmax.f32 %v2747, 0.0
          %v2814 = vmax.f32 %v2750, 0.0
          %v2815 = vmax.f32 %v2755, 0.0
          %v2816 = vmax.f32 %v2758, 0.0
          %v2817 = vmax.f32 %v2763, 0.0
          %v2818 = vmax.f32 %v2766, 0.0
          %v2819 = vmax.f32 %v2771, 0.0
          %v2820 = vmax.f32 %v2774, 0.0
          %v2821 = vmax.f32 %v2779, 0.0
          %v2822 = vmax.f32 %v2782, 0.0
          %v2823 = vmax.f32 %v2787, 0.0
          %v2824 = vmax.f32 %v2790, 0.0
          %v2825 = vpack.c.bf16 %v2794, %v2793
          %v2826 = vpack.c.bf16 %v2796, %v2795
          %v2827 = vpack.c.bf16 %v2798, %v2797
          %v2828 = vpack.c.bf16 %v2800, %v2799
          %v2829 = vpack.c.bf16 %v2802, %v2801
          %v2830 = vpack.c.bf16 %v2804, %v2803
          %v2831 = vpack.c.bf16 %v2806, %v2805
          %v2832 = vpack.c.bf16 %v2808, %v2807
          %v2833 = vpack.c.bf16 %v2810, %v2809
          %v2834 = vpack.c.bf16 %v2812, %v2811
          %v2835 = vpack.c.bf16 %v2814, %v2813
          %v2836 = vpack.c.bf16 %v2816, %v2815
          %v2837 = vpack.c.bf16 %v2818, %v2817
          %v2838 = vpack.c.bf16 %v2820, %v2819
          %v2839 = vpack.c.bf16 %v2822, %v2821
          %v2840 = vpack.c.bf16 %v2824, %v2823
          %v2841 = vlaneseq
          %v2842 = vshrl.u32 %v2841, 7
          %v2843 = vld [vmem:[%s511] sm:$0x3]
          %v2844 = vlaneseq
          %v2845 = vshrl.u32 %v2844, 7
          %v2846 = vsub.s32 0, %v2845
          %v2847 = vrot.slane %v2843, %v2846
          %v2848 = vlaneseq
          %v2849 = vshrl.u32 %v2848, 7
          %v2850 = vsub.s32 1, %v2849
          %v2851 = vrot.slane %v2843, %v2850
          %vm2852 = vcmp.eq.s32.totalorder %v2842, %v2847
          %vm2853 = vcmp.eq.s32.totalorder %v2842, %v2851
          %v2854 = vsel %vm2852, 1, 0
          %v2855 = vsel %vm2853, 1, 0
          %v2856 = vcvt.s32.f32 %v2854
          %v2857 = vcvt.s32.f32 %v2855
          %v2858 = vpack.c.bf16 %v2856, %v2856
          %v2859 = vpack.c.bf16 %v2857, %v2857
          %v2860 = vld [vmem:[#allocation3] sm:$0xff]
          %2861 = vmatprep.subr.bf16.mxu0 0
          %2862 = vmatpush1.bf16.msra.mxu0 %v2825
          %2863 = vmatprep.subr.bf16.mxu0 0
          %2864 = vmatpush1.bf16.msra.mxu0 %v2826
          %2865 = vmatprep.subr.bf16.mxu0 0
          %2866 = vmatpush1.bf16.msra.mxu0 %v2827
          %2867 = vmatprep.subr.bf16.mxu0 0
          %2868 = vmatpush1.bf16.msra.mxu0 %v2828
          %2869 = vmatprep.subr.bf16.mxu0 0
          %2870 = vmatpush1.bf16.msra.mxu0 %v2829
          %2871 = vmatprep.subr.bf16.mxu0 0
          %2872 = vmatpush1.bf16.msra.mxu0 %v2830
          %2873 = vmatprep.subr.bf16.mxu0 0
          %2874 = vmatpush1.bf16.msra.mxu0 %v2831
          %2875 = vmatprep.subr.bf16.mxu0 0
          %2876 = vmatpush1.bf16.msra.mxu0 %v2832
          %2877 = vmatprep.subr.bf16.mxu0 0
          %2878 = vmatpush1.bf16.msra.mxu0 %v2833
          %2879 = vmatprep.subr.bf16.mxu0 0
          %2880 = vmatpush1.bf16.msra.mxu0 %v2834
          %2881 = vmatprep.subr.bf16.mxu0 0
          %2882 = vmatpush1.bf16.msra.mxu0 %v2835
          %2883 = vmatprep.subr.bf16.mxu0 0
          %2884 = vmatpush1.bf16.msra.mxu0 %v2836
          %2885 = vmatprep.subr.bf16.mxu0 0
          %2886 = vmatpush1.bf16.msra.mxu0 %v2837
          %2887 = vmatprep.subr.bf16.mxu0 0
          %2888 = vmatpush1.bf16.msra.mxu0 %v2838
          %2889 = vmatprep.subr.bf16.mxu0 0
          %2890 = vmatpush1.bf16.msra.mxu0 %v2839
          %2891 = vmatprep.subr.bf16.mxu0 0
          %2892 = vmatpush1.bf16.msra.mxu0 %v2840
          %2893 = vmatprep.mubr.bf16.mxu0 %v2859
          %2894 = vmatmul.mubr.bf16.gmra.mrb[0].mxu0 %v2858
          %v2895 = vpop.f32.mrb[0].mxu0
          %v2896 = vadd.f32 0.0, %v2895
          %v2897 = vpop.f32.mrb[0].mxu0
          %v2898 = vpop.f32.mrb[0].mxu0
          %v2899 = vpop.f32.mrb[0].mxu0
          %2900 = vdwg.mxu0
          %v2901 = vadd.f32 %v2860, %v2896
          %2902 = vst [vmem:[#allocation3] sm:$0xff] %v2901
        $region104: #{tpu_custom_call.1} parent=63 // pred_fallthru
          _
        %p2903 = scmp.eq.s32.totalorder %s34, 1
        %p2904 = pnand %p1797, %p2903
        %p2905 = pneg %p2904
        // Predicated region
        $region105: #{tpu_custom_call.1} parent=63 // pred_check
          _
        $region106: #{tpu_custom_call.1} parent=63 // pred_check_branch
          %2907 = sbr.rel (%p2904) target = $region108
        $region107: #{tpu_custom_call.1} parent=63 // pred_region
          %v2908 = vld [vmem:[%s10] sm:$0x1]
          %v2909 = vld [vmem:[%s10 + $0x1] sm:$0x1]
          %v2910 = vld [vmem:[%s10 + $0x2] sm:$0x1]
          %v2911 = vld [vmem:[#allocation3] sm:$0xff]
          %v2912 = vld [vmem:[%s3] sm:$0xff]
          %2914 = vset.pattern.permute.xlu0 0
          %2915 = vperm.xlu0 %2914, %v2912
          %v2916 = vpop.permute.xlu0 %2915
          %v2918 = vmul.f32 %v2911, %v2916
          %v2919 = vpack.c.bf16 %v2918, %v2918
          %v2920 = vld [vmem:[#allocation12] sm:$0xf]
          %v2921 = vld [vmem:[#allocation12 + $0x4] sm:$0xf]
          %v2922 = vld [vmem:[#allocation12 + $0x8] sm:$0xf]
          %v2923 = vld [vmem:[#allocation12 + $0xc] sm:$0xf]
          %v2924 = vld [vmem:[#allocation12 + $0x10] sm:$0xf]
          %v2925 = vld [vmem:[#allocation12 + $0x14] sm:$0xf]
          %v2926 = vld [vmem:[#allocation12 + $0x18] sm:$0xf]
          %v2927 = vld [vmem:[#allocation12 + $0x1c] sm:$0xf]
          %v2928 = vld [vmem:[#allocation12 + $0x20] sm:$0xf]
          %v2929 = vld [vmem:[#allocation12 + $0x24] sm:$0xf]
          %v2930 = vld [vmem:[#allocation12 + $0x28] sm:$0xf]
          %v2931 = vld [vmem:[#allocation12 + $0x2c] sm:$0xf]
          %v2932 = vld [vmem:[#allocation12 + $0x30] sm:$0xf]
          %v2933 = vld [vmem:[#allocation12 + $0x34] sm:$0xf]
          %v2934 = vld [vmem:[#allocation12 + $0x38] sm:$0xf]
          %v2935 = vld [vmem:[#allocation12 + $0x3c] sm:$0xf]
          %v2937 = vlaneseq
          %v2938 = vshrl.u32 %v2937, 7
          %v2939 = vsub.s32 0, %v2938
          %v2940 = vrot.slane %v2908, %v2939
          %v2958 = vunpack.c.l.b16 %v2920
          %v2959 = vunpack.c.l.b16 %v2921
          %v2960 = vunpack.c.l.b16 %v2922
          %v2961 = vunpack.c.l.b16 %v2923
          %v2962 = vunpack.c.l.b16 %v2924
          %v2963 = vunpack.c.l.b16 %v2925
          %v2964 = vunpack.c.l.b16 %v2926
          %v2965 = vunpack.c.l.b16 %v2927
          %v2966 = vunpack.c.l.b16 %v2928
          %v2967 = vunpack.c.l.b16 %v2929
          %v2968 = vunpack.c.l.b16 %v2930
          %v2969 = vunpack.c.l.b16 %v2931
          %v2970 = vunpack.c.l.b16 %v2932
          %v2971 = vunpack.c.l.b16 %v2933
          %v2972 = vunpack.c.l.b16 %v2934
          %v2973 = vunpack.c.l.b16 %v2935
          %v2974 = vpack.c.b16 %v2959, %v2958
          %v2975 = vpack.c.b16 %v2961, %v2960
          %v2976 = vpack.c.b16 %v2963, %v2962
          %v2977 = vpack.c.b16 %v2965, %v2964
          %v2978 = vpack.c.b16 %v2967, %v2966
          %v2979 = vpack.c.b16 %v2969, %v2968
          %v2980 = vpack.c.b16 %v2971, %v2970
          %v2981 = vpack.c.b16 %v2973, %v2972
          %2990 = vmatprep.subr.bf16.mxu0 0
          %2991 = vmatpush1.bf16.msra.mxu0 %v2974
          %2992 = vmatprep.subr.bf16.mxu0 0
          %2993 = vmatpush1.bf16.msra.mxu0 %v2975
          %2994 = vmatprep.subr.bf16.mxu0 0
          %2995 = vmatpush1.bf16.msra.mxu0 %v2976
          %2996 = vmatprep.subr.bf16.mxu0 0
          %2997 = vmatpush1.bf16.msra.mxu0 %v2977
          %2998 = vmatprep.subr.bf16.mxu0 0
          %2999 = vmatpush1.bf16.msra.mxu0 %v2978
          %3000 = vmatprep.subr.bf16.mxu0 0
          %3001 = vmatpush1.bf16.msra.mxu0 %v2979
          %3002 = vmatprep.subr.bf16.mxu0 0
          %3003 = vmatpush1.bf16.msra.mxu0 %v2980
          %3004 = vmatprep.subr.bf16.mxu0 0
          %3005 = vmatpush1.bf16.msra.mxu0 %v2981
          %3006 = vmatprep.subr.bf16.mxu0 0
          %3007 = vmatpush1.bf16.msra.mxu0 0
          %3008 = vmatprep.subr.bf16.mxu0 0
          %3009 = vmatpush1.bf16.msra.mxu0 0
          %3010 = vmatprep.subr.bf16.mxu0 0
          %3011 = vmatpush1.bf16.msra.mxu0 0
          %3012 = vmatprep.subr.bf16.mxu0 0
          %3013 = vmatpush1.bf16.msra.mxu0 0
          %3014 = vmatprep.subr.bf16.mxu0 0
          %3015 = vmatpush1.bf16.msra.mxu0 0
          %3016 = vmatprep.subr.bf16.mxu0 0
          %3017 = vmatpush1.bf16.msra.mxu0 0
          %3018 = vmatprep.subr.bf16.mxu0 0
          %3019 = vmatpush1.bf16.msra.mxu0 0
          %3020 = vmatprep.subr.bf16.mxu0 0
          %3021 = vmatpush1.bf16.msra.mxu0 0
          %3022 = vmatprep.mubr.bf16.mxu0 0
          %3023 = vmatmul.mubr.bf16.gmra.mrb[0].mxu0 %v2919
          %v3024 = vpop.f32.mrb[0].mxu0
          %v3025 = vadd.f32 %v2940, %v3024
          %v3026 = vpop.f32.mrb[0].mxu0
          %v3027 = vpop.f32.mrb[0].mxu0
          %v3028 = vpop.f32.mrb[0].mxu0
          %3029 = vdwg.mxu0
          %v3030 = vmax.f32 %v3025, 0.0
          %v3031 = vpack.c.bf16 %v3030, %v3030
          %v3032 = vld [vmem:[#allocation13] sm:$0xf]
          %v3033 = vld [vmem:[#allocation13 + $0x4] sm:$0xf]
          %v3034 = vld [vmem:[#allocation13 + $0x8] sm:$0xf]
          %v3035 = vld [vmem:[#allocation13 + $0xc] sm:$0xf]
          %v3036 = vld [vmem:[#allocation13 + $0x10] sm:$0xf]
          %v3037 = vld [vmem:[#allocation13 + $0x14] sm:$0xf]
          %v3038 = vld [vmem:[#allocation13 + $0x18] sm:$0xf]
          %v3039 = vld [vmem:[#allocation13 + $0x1c] sm:$0xf]
          %v3040 = vld [vmem:[#allocation13 + $0x20] sm:$0xf]
          %v3041 = vld [vmem:[#allocation13 + $0x24] sm:$0xf]
          %v3042 = vld [vmem:[#allocation13 + $0x28] sm:$0xf]
          %v3043 = vld [vmem:[#allocation13 + $0x2c] sm:$0xf]
          %v3044 = vld [vmem:[#allocation13 + $0x30] sm:$0xf]
          %v3045 = vld [vmem:[#allocation13 + $0x34] sm:$0xf]
          %v3046 = vld [vmem:[#allocation13 + $0x38] sm:$0xf]
          %v3047 = vld [vmem:[#allocation13 + $0x3c] sm:$0xf]
          %v3049 = vlaneseq
          %v3050 = vshrl.u32 %v3049, 7
          %v3051 = vsub.s32 0, %v3050
          %v3052 = vrot.slane %v2909, %v3051
          %v3070 = vunpack.c.l.b16 %v3032
          %v3071 = vunpack.c.l.b16 %v3033
          %v3072 = vunpack.c.l.b16 %v3034
          %v3073 = vunpack.c.l.b16 %v3035
          %v3074 = vunpack.c.l.b16 %v3036
          %v3075 = vunpack.c.l.b16 %v3037
          %v3076 = vunpack.c.l.b16 %v3038
          %v3077 = vunpack.c.l.b16 %v3039
          %v3078 = vunpack.c.l.b16 %v3040
          %v3079 = vunpack.c.l.b16 %v3041
          %v3080 = vunpack.c.l.b16 %v3042
          %v3081 = vunpack.c.l.b16 %v3043
          %v3082 = vunpack.c.l.b16 %v3044
          %v3083 = vunpack.c.l.b16 %v3045
          %v3084 = vunpack.c.l.b16 %v3046
          %v3085 = vunpack.c.l.b16 %v3047
          %v3086 = vpack.c.b16 %v3071, %v3070
          %v3087 = vpack.c.b16 %v3073, %v3072
          %v3088 = vpack.c.b16 %v3075, %v3074
          %v3089 = vpack.c.b16 %v3077, %v3076
          %v3090 = vpack.c.b16 %v3079, %v3078
          %v3091 = vpack.c.b16 %v3081, %v3080
          %v3092 = vpack.c.b16 %v3083, %v3082
          %v3093 = vpack.c.b16 %v3085, %v3084
          %3102 = vmatprep.subr.bf16.mxu0 0
          %3103 = vmatpush1.bf16.msra.mxu0 %v3086
          %3104 = vmatprep.subr.bf16.mxu0 0
          %3105 = vmatpush1.bf16.msra.mxu0 %v3087
          %3106 = vmatprep.subr.bf16.mxu0 0
          %3107 = vmatpush1.bf16.msra.mxu0 %v3088
          %3108 = vmatprep.subr.bf16.mxu0 0
          %3109 = vmatpush1.bf16.msra.mxu0 %v3089
          %3110 = vmatprep.subr.bf16.mxu0 0
          %3111 = vmatpush1.bf16.msra.mxu0 %v3090
          %3112 = vmatprep.subr.bf16.mxu0 0
          %3113 = vmatpush1.bf16.msra.mxu0 %v3091
          %3114 = vmatprep.subr.bf16.mxu0 0
          %3115 = vmatpush1.bf16.msra.mxu0 %v3092
          %3116 = vmatprep.subr.bf16.mxu0 0
          %3117 = vmatpush1.bf16.msra.mxu0 %v3093
          %3118 = vmatprep.subr.bf16.mxu0 0
          %3119 = vmatpush1.bf16.msra.mxu0 0
          %3120 = vmatprep.subr.bf16.mxu0 0
          %3121 = vmatpush1.bf16.msra.mxu0 0
          %3122 = vmatprep.subr.bf16.mxu0 0
          %3123 = vmatpush1.bf16.msra.mxu0 0
          %3124 = vmatprep.subr.bf16.mxu0 0
          %3125 = vmatpush1.bf16.msra.mxu0 0
          %3126 = vmatprep.subr.bf16.mxu0 0
          %3127 = vmatpush1.bf16.msra.mxu0 0
          %3128 = vmatprep.subr.bf16.mxu0 0
          %3129 = vmatpush1.bf16.msra.mxu0 0
          %3130 = vmatprep.subr.bf16.mxu0 0
          %3131 = vmatpush1.bf16.msra.mxu0 0
          %3132 = vmatprep.subr.bf16.mxu0 0
          %3133 = vmatpush1.bf16.msra.mxu0 0
          %3134 = vmatprep.mubr.bf16.mxu0 0
          %3135 = vmatmul.mubr.bf16.gmra.mrb[0].mxu0 %v3031
          %v3136 = vpop.f32.mrb[0].mxu0
          %v3137 = vadd.f32 %v3052, %v3136
          %v3138 = vpop.f32.mrb[0].mxu0
          %v3139 = vpop.f32.mrb[0].mxu0
          %v3140 = vpop.f32.mrb[0].mxu0
          %3141 = vdwg.mxu0
          %v3142 = vmax.f32 %v3137, 0.0
          %v3143 = vpack.c.bf16 %v3142, %v3142
          %v3144 = vld [vmem:[#allocation15] sm:$0xf]
          %v3145 = vld [vmem:[#allocation15 + $0x4] sm:$0xf]
          %v3146 = vld [vmem:[#allocation15 + $0x8] sm:$0xf]
          %v3147 = vld [vmem:[#allocation15 + $0xc] sm:$0xf]
          %v3148 = vld [vmem:[#allocation15 + $0x10] sm:$0xf]
          %v3149 = vld [vmem:[#allocation15 + $0x14] sm:$0xf]
          %v3150 = vld [vmem:[#allocation15 + $0x18] sm:$0xf]
          %v3151 = vld [vmem:[#allocation15 + $0x1c] sm:$0xf]
          %v3152 = vld [vmem:[#allocation15 + $0x20] sm:$0xf]
          %v3153 = vld [vmem:[#allocation15 + $0x24] sm:$0xf]
          %v3154 = vld [vmem:[#allocation15 + $0x28] sm:$0xf]
          %v3155 = vld [vmem:[#allocation15 + $0x2c] sm:$0xf]
          %v3156 = vld [vmem:[#allocation15 + $0x30] sm:$0xf]
          %v3157 = vld [vmem:[#allocation15 + $0x34] sm:$0xf]
          %v3158 = vld [vmem:[#allocation15 + $0x38] sm:$0xf]
          %v3159 = vld [vmem:[#allocation15 + $0x3c] sm:$0xf]
          %v3161 = vlaneseq
          %v3162 = vshrl.u32 %v3161, 7
          %v3163 = vsub.s32 0, %v3162
          %v3164 = vrot.slane %v2910, %v3163
          %v3182 = vunpack.c.l.b16 %v3144
          %v3183 = vunpack.c.l.b16 %v3145
          %v3184 = vunpack.c.l.b16 %v3146
          %v3185 = vunpack.c.l.b16 %v3147
          %v3186 = vunpack.c.l.b16 %v3148
          %v3187 = vunpack.c.l.b16 %v3149
          %v3188 = vunpack.c.l.b16 %v3150
          %v3189 = vunpack.c.l.b16 %v3151
          %v3190 = vunpack.c.l.b16 %v3152
          %v3191 = vunpack.c.l.b16 %v3153
          %v3192 = vunpack.c.l.b16 %v3154
          %v3193 = vunpack.c.l.b16 %v3155
          %v3194 = vunpack.c.l.b16 %v3156
          %v3195 = vunpack.c.l.b16 %v3157
          %v3196 = vunpack.c.l.b16 %v3158
          %v3197 = vunpack.c.l.b16 %v3159
          %v3198 = vpack.c.b16 %v3183, %v3182
          %v3199 = vpack.c.b16 %v3185, %v3184
          %v3200 = vpack.c.b16 %v3187, %v3186
          %v3201 = vpack.c.b16 %v3189, %v3188
          %v3202 = vpack.c.b16 %v3191, %v3190
          %v3203 = vpack.c.b16 %v3193, %v3192
          %v3204 = vpack.c.b16 %v3195, %v3194
          %v3205 = vpack.c.b16 %v3197, %v3196
          %3214 = vmatprep.subr.bf16.mxu0 0
          %3215 = vmatpush1.bf16.msra.mxu0 %v3198
          %3216 = vmatprep.subr.bf16.mxu0 0
          %3217 = vmatpush1.bf16.msra.mxu0 %v3199
          %3218 = vmatprep.subr.bf16.mxu0 0
          %3219 = vmatpush1.bf16.msra.mxu0 %v3200
          %3220 = vmatprep.subr.bf16.mxu0 0
          %3221 = vmatpush1.bf16.msra.mxu0 %v3201
          %3222 = vmatprep.subr.bf16.mxu0 0
          %3223 = vmatpush1.bf16.msra.mxu0 %v3202
          %3224 = vmatprep.subr.bf16.mxu0 0
          %3225 = vmatpush1.bf16.msra.mxu0 %v3203
          %3226 = vmatprep.subr.bf16.mxu0 0
          %3227 = vmatpush1.bf16.msra.mxu0 %v3204
          %3228 = vmatprep.subr.bf16.mxu0 0
          %3229 = vmatpush1.bf16.msra.mxu0 %v3205
          %3230 = vmatprep.subr.bf16.mxu0 0
          %3231 = vmatpush1.bf16.msra.mxu0 0
          %3232 = vmatprep.subr.bf16.mxu0 0
          %3233 = vmatpush1.bf16.msra.mxu0 0
          %3234 = vmatprep.subr.bf16.mxu0 0
          %3235 = vmatpush1.bf16.msra.mxu0 0
          %3236 = vmatprep.subr.bf16.mxu0 0
          %3237 = vmatpush1.bf16.msra.mxu0 0
          %3238 = vmatprep.subr.bf16.mxu0 0
          %3239 = vmatpush1.bf16.msra.mxu0 0
          %3240 = vmatprep.subr.bf16.mxu0 0
          %3241 = vmatpush1.bf16.msra.mxu0 0
          %3242 = vmatprep.subr.bf16.mxu0 0
          %3243 = vmatpush1.bf16.msra.mxu0 0
          %3244 = vmatprep.subr.bf16.mxu0 0
          %3245 = vmatpush1.bf16.msra.mxu0 0
          %3246 = vmatprep.mubr.bf16.mxu0 0
          %3247 = vmatmul.mubr.bf16.gmra.mrb[0].mxu0 %v3143
          %v3248 = vpop.f32.mrb[0].mxu0
          %v3249 = vadd.f32 %v3164, %v3248
          %v3250 = vpop.f32.mrb[0].mxu0
          %v3251 = vpop.f32.mrb[0].mxu0
          %v3252 = vpop.f32.mrb[0].mxu0
          %3253 = vdwg.mxu0
          %3254 = vst [vmem:[#allocation16] sm:$0xff] %v3249
        $region108: #{tpu_custom_call.1} parent=63 // pred_fallthru
          _
        // Predicated region
        $region109: #{tpu_custom_call.1} parent=63 // pred_check
          %p3255 = pneg %p295
        $region110: #{tpu_custom_call.1} parent=63 // pred_check_branch
          %3257 = sbr.rel (%p3255) target = $region112
        $region111: #{tpu_custom_call.1} parent=63 // pred_region
          %s3259 = ssub.s32 128, 128
          %3260 = vsyncadd [#allocation6], %s3259
          %s3262 = sshll.u32 [#allocation16], 4
          %s3263 = int_to_ptr.vmem [resolvable:$true] %s3262
          %3265 = dma.vmem_to_hbm [thread:$0]  %s3263, 128, %s11, [#allocation6]
        $region112: #{tpu_custom_call.1} parent=63 // pred_fallthru
          _
        // Predicated region
        $region113: #{tpu_custom_call.1} parent=63 // pred_check
          %p3266 = pneg %p295
        $region114: #{tpu_custom_call.1} parent=63 // pred_check_branch
          %3268 = sbr.rel (%p3266) target = $region116
        $region115: #{tpu_custom_call.1} parent=63 // pred_region
          %3269 = dma.done [#allocation6], 128
        $region116: #{tpu_custom_call.1} parent=63 // pred_fallthru
          _
      $region64: #{tpu_custom_call.1} parent=5 // pred_fallthru
        _
      %p3270 = scmp.le.s32.totalorder 2, %s24
      // Predicated region
      $region117: #{tpu_custom_call.1} parent=5 // pred_check
        %p3271 = pneg %p3270
      $region118: #{tpu_custom_call.1} parent=5 // pred_check_branch
        %3273 = sbr.rel (%p3271) target = $region120
      $region119: #{tpu_custom_call.1} parent=5 // pred_region
        %s3274 = ssub.s32 %s24, 2
      $region120: #{tpu_custom_call.1} parent=5 // pred_fallthru
        _
    $region6: #{tpu_custom_call.1} parent=1 // loop_footer
      %s28 = sadd.s32 1, %s24
    $region7: #{tpu_custom_call.1} parent=1 // loop_footer_branch
      %23 = sbr.rel target = $region3
    $region8: #{tpu_custom_call.1} parent=1 // loop_exit
      _
    %3275 = vsyncpa [#allocation5], 1
    %s3276 = scalar_lea.sflag [#allocation5], 1
    %3277 = vsyncpa %s3276, 1
    %3278 = vsyncpa [#allocation8], 1
    %3279 = vsyncpa [#allocation11], 1
    %3280 = vsyncpa [#allocation14], 1
    %3281 = vsyncpa [#allocation6], 1
    %s3282 = scalar_lea.sflag [#allocation6], 1
    %3283 = vsyncpa %s3282, 1

</llo_original>
